<compile_context>
chip_gen: v7x
topology: tpu7x:2x2x1
jax: 0.10.0
libtpu: 0.0.40
codegen_flags: <defaults>
</compile_context>

<pallas_src>
import numpy as np
import jax
import jax.numpy as jnp
from jax.experimental import pallas as pl
from jax.experimental.pallas import tpu as pltpu

C_LIGHT = 299792458.0


def _round_up(x, m):
    return ((x + m - 1) // m) * m


# ----------------------------------------------------------------------------
# Deterministic parameter initialization (shapes follow the module __init__)
# ----------------------------------------------------------------------------
def dispersion_kernel_np(dz, dtaps, Fs, Fi, Fc, D):
    """Time-domain dispersion FIR kernel (complex64, length dtaps)."""
    lam = C_LIGHT / Fc
    D_si = D * 1e-6                                    # ps/(nm*km) -> s/m^2
    beta2 = -D_si * lam ** 2 / (2.0 * np.pi * C_LIGHT)
    omega = 2.0 * np.pi * (Fi - Fc) + 2.0 * np.pi * np.fft.fftfreq(dtaps, d=1.0 / Fs)
    Hf = np.exp(-1j * 0.5 * beta2 * omega ** 2 * dz)
    h = np.fft.fftshift(np.fft.ifft(Hf))
    return h.astype(np.complex64)


def init_fdbp_params(Nmodes, step, dtaps, ntaps, d_share=True, n_share=True,
                     L=2000000.0, gamma=0.0016567, D=16.5, Fs=160e9,
                     Fc=C_LIGHT / 1.55e-6, Fi=C_LIGHT / 1.55e-6):
    dz = L / step
    n_d = 1 if d_share else step
    n_n = 1 if n_share else step
    dk = dispersion_kernel_np(-dz, dtaps, Fs, Fi, Fc, D)             # [dtaps]
    dkr = np.tile(dk.real[None, :], (n_d, 1)).astype(np.float32)     # [n_d, dtaps]
    dki = np.tile(dk.imag[None, :], (n_d, 1)).astype(np.float32)     # [n_d, dtaps]
    # Deterministic nonlinear-filter init (boxcar averaging window).
    nk = np.full((n_n, Nmodes, ntaps), 1.0 / ntaps, np.float32)      # [n_n, M, ntaps]
    return dict(dkr=jnp.asarray(dkr), dki=jnp.asarray(dki), nk=jnp.asarray(nk),
                step=step, dz=dz, gamma=gamma, Nmodes=Nmodes,
                d_share=d_share, n_share=n_share, dtaps=dtaps, ntaps=ntaps)


# ----------------------------------------------------------------------------
# Pallas kernel: ALL DBP steps fused, one (row-block, time-tile) per grid point
# ----------------------------------------------------------------------------
def make_fdbp_kernel(*, M, RB, G, T_IN, T_OUT, steps, dtaps, ntaps,
                     d_share, n_share):
    off = (ntaps - 1) // 2

    def shl(x, k):
        # x shifted "left" by k along the lane/time axis: out[:, j] = x[:, j+k]
        # for j < T_IN - k (wrapped tail is never used - it lies in the halo).
        if k == 0:
            return x
        return pltpu.roll(x, shift=T_IN - k, axis=1)

    def kernel(dkr_ref, dki_ref, scale_ref, nk_ref, xr_hbm, xi_hbm,
               yr_ref, yi_ref, xr_buf, xi_buf, sem):
        r = pl.program_id(0)                        # row-block index
        t = pl.program_id(1)                        # time-tile index
        col0 = pl.multiple_of(t * T_OUT, 128)

        # -- manual DMA of the overlapping input window: output tile + halo ---
        cp_r = pltpu.make_async_copy(
            xr_hbm.at[r, :, pl.ds(col0, T_IN)], xr_buf, sem.at[0])
        cp_i = pltpu.make_async_copy(
            xi_hbm.at[r, :, pl.ds(col0, T_IN)], xi_buf, sem.at[1])
        cp_r.start()
        cp_i.start()
        cp_r.wait()
        cp_i.wait()

        scale = scale_ref[...]                      # [RB, 1] gamma*dz*P per row
        xr = xr_buf[...]                            # [RB, T_IN]
        xi = xi_buf[...]

        for i in range(steps):                      # all DBP steps fused
            di = 0 if d_share else i
            ni = 0 if n_share else i

            # ---- dispersion: complex 'valid' FIR, roll-and-accumulate -------
            hr0 = dkr_ref[di, 0]
            hi0 = dki_ref[di, 0]
            ur = xr * hr0 - xi * hi0
            ui = xr * hi0 + xi * hr0
            for k in range(1, dtaps):
                hr = dkr_ref[di, k]
                hi = dki_ref[di, k]
                sr = shl(xr, k)
                si = shl(xi, k)
                ur = ur + sr * hr - si * hi
                ui = ui + sr * hi + si * hr

            # ---- nonlinear: SPM + XPM power, per-row FIR, phase rotation ----
            pw = ur * ur + ui * ui                  # |u|^2
            if M == 1:
                pw_sum = pw + pw
            else:
                # swap polarization rows (mode-major layout inside the block)
                pw_sum = pw + pltpu.roll(pw, shift=G, axis=0)

            acc = nk_ref[ni * ntaps + 0] * pw_sum   # [RB,1] column broadcast
            for k in range(1, ntaps):
                acc = acc + nk_ref[ni * ntaps + k] * shl(pw_sum, k)
            phi = acc * scale
            c = jnp.cos(phi)
            s = jnp.sin(phi)
            cr = shl(ur, off)
            ci = shl(ui, off)
            xr = cr * c - ci * s
            xi = cr * s + ci * c

        # valid prefix length = T_IN - steps*(dtaps-1+ntaps-1) >= T_OUT
        yr_ref[...] = xr[:, :T_OUT]
        yi_ref[...] = xi[:, :T_OUT]

    return kernel


# ----------------------------------------------------------------------------
# Forward pass: packing / tiling glue in plain JAX, hot path in the kernel
# ----------------------------------------------------------------------------
def fdbp_forward(params, x, task_info, *, rows_per_block=8, max_time_tile=2048):
    """x: [B, L, Nmodes] complex64; task_info: [B, 4] = [P(dBm), Fi, Fs, Nch]."""
    B, L, M = x.shape
    assert M == params["Nmodes"]
    steps, dtaps, ntaps = params["step"], params["dtaps"], params["ntaps"]
    C = steps * (dtaps - 1 + ntaps - 1)
    assert L > C, "signal shorter than total filter overlap"
    L_out = L - C

    RB = rows_per_block
    assert RB % 8 == 0 and RB % M == 0, "rows_per_block must be mult. of 8 and M"
    assert max_time_tile % 128 == 0 and max_time_tile >= 128
    G = RB // M                                   # batches per row block
    num_groups = -(-B // G)
    Bp = num_groups * G                           # padded batch
    R = num_groups * RB                           # total packed rows

    # ---- time tiling: lane-dense 128-multiple output tiles + 128-padded halo
    T_OUT = min(max_time_tile, _round_up(L_out, 128))
    num_tiles = -(-L_out // T_OUT)
    H = _round_up(C, 128)
    T_IN = T_OUT + H
    Lpad = num_tiles * T_OUT + H                  # padded input time length
    T_pad_out = num_tiles * T_OUT

    # ---- per-row scalars (launch power * gamma * dz) and nonlinear taps -----
    P = (10.0 ** (task_info[:, 0] / 10.0 - 3.0) / M).astype(jnp.float32)
    gamma_dz = float(params["gamma"] * params["dz"])
    P_pad = jnp.zeros((Bp,), jnp.float32).at[:B].set(P) * gamma_dz
    scale_rows = jnp.broadcast_to(
        P_pad.reshape(num_groups, 1, G), (num_groups, M, G)).reshape(R, 1)

    nk = params["nk"]                             # [n_n, M, ntaps]
    n_n = nk.shape[0]
    nk_rows = jnp.broadcast_to(
        nk[:, None, :, None, :], (n_n, num_groups, M, G, ntaps)
    ).reshape(n_n, R, ntaps)
    nk_rows = jnp.transpose(nk_rows, (0, 2, 1)).reshape(n_n * ntaps, R, 1)

    # ---- pack the signal into [num_groups, RB, Lpad] real/imag planes -------
    # row order inside a block: (mode, batch-in-group)  -> XPM roll = sublane roll
    xt = jnp.transpose(x, (0, 2, 1))              # [B, M, L] complex
    pad = ((0, Bp - B), (0, 0), (0, Lpad - L))
    xr = jnp.pad(jnp.real(xt).astype(jnp.float32), pad)
    xi = jnp.pad(jnp.imag(xt).astype(jnp.float32), pad)
    xr = xr.reshape(num_groups, G, M, Lpad).transpose(0, 2, 1, 3)
    xi = xi.reshape(num_groups, G, M, Lpad).transpose(0, 2, 1, 3)
    xr = xr.reshape(num_groups, RB, Lpad)
    xi = xi.reshape(num_groups, RB, Lpad)

    kernel = make_fdbp_kernel(M=M, RB=RB, G=G, T_IN=T_IN, T_OUT=T_OUT,
                              steps=steps, dtaps=dtaps, ntaps=ntaps,
                              d_share=params["d_share"],
                              n_share=params["n_share"])

    smem = pl.BlockSpec(memory_space=pltpu.MemorySpace.SMEM)
    anyspec = pl.BlockSpec(memory_space=pl.ANY)

    yr, yi = pl.pallas_call(
        kernel,
        out_shape=(jax.ShapeDtypeStruct((R, T_pad_out), jnp.float32),
                   jax.ShapeDtypeStruct((R, T_pad_out), jnp.float32)),
        grid_spec=pltpu.PrefetchScalarGridSpec(
            num_scalar_prefetch=0,
            grid=(num_groups, num_tiles),
            in_specs=[
                smem,                                                  # dkr
                smem,                                                  # dki
                pl.BlockSpec((RB, 1), lambda r, t: (r, 0)),            # scale
                pl.BlockSpec((n_n * ntaps, RB, 1),
                             lambda r, t: (0, r, 0)),                  # nk cols
                anyspec,                                               # xr (HBM)
                anyspec,                                               # xi (HBM)
            ],
            out_specs=(pl.BlockSpec((RB, T_OUT), lambda r, t: (r, t)),
                       pl.BlockSpec((RB, T_OUT), lambda r, t: (r, t))),
            scratch_shapes=[pltpu.VMEM((RB, T_IN), jnp.float32),
                            pltpu.VMEM((RB, T_IN), jnp.float32),
                            pltpu.SemaphoreType.DMA((2,))]),
        compiler_params=pltpu.CompilerParams(
            dimension_semantics=("parallel", "parallel")),
    )(params["dkr"], params["dki"], scale_rows, nk_rows, xr, xi)

    # ---- unpack [R, T_pad_out] planes back to [B, L_out, M] complex64 -------
    def unpack(p):
        p = p.reshape(num_groups, M, G, T_pad_out).transpose(0, 2, 1, 3)
        p = p.reshape(Bp, M, T_pad_out)[:B, :, :L_out]
        return jnp.transpose(p, (0, 2, 1))

    return (unpack(yr) + 1j * unpack(yi)).astype(jnp.complex64)


# ----------------------------------------------------------------------------
# Pure-numpy reference (same math, used only for the self-check)
# ----------------------------------------------------------------------------
def fdbp_reference(params, x, task_info):
    x = np.asarray(x).astype(np.complex64)                 # [B, L, M]
    ti = np.asarray(task_info)
    B, L, M = x.shape
    P = 10.0 ** (ti[:, 0] / 10.0 - 3.0) / M
    dk = np.asarray(params["dkr"]).astype(np.float32) + 1j * np.asarray(params["dki"]).astype(np.float32)
    nk = np.asarray(params["nk"])
    dtaps, ntaps = params["dtaps"], params["ntaps"]
    gdz = params["gamma"] * params["dz"]
    off = (ntaps - 1) // 2
    for i in range(params["step"]):
        h = dk[0 if params["d_share"] else i]
        K = nk[0 if params["n_share"] else i]
        Ld = x.shape[1] - dtaps + 1
        u = np.zeros((B, Ld, M), np.complex64)
        for k in range(dtaps):
            u = u + x[:, k:k + Ld, :] * h[k]
        pw = np.abs(u) ** 2
        pw = pw + np.roll(pw, 1, axis=-1)
        Ln = Ld - ntaps + 1
        phi = np.zeros((B, Ln, M), np.float32)
        for k in range(ntaps):
            phi = phi + pw[:, k:k + Ln, :] * K[:, k][None, None, :]
        phi = phi * (gdz * P)[:, None, None]
        x = (u[:, off:off + Ln, :] * np.exp(1j * phi)).astype(np.complex64)
    return x


if __name__ == "__main__":
    key = jax.random.PRNGKey(0)

    # ---- test 1: dual-pol, shared filters; default tile AND forced 3 tiles --
    B, Lseq, Nmodes = 2, 300, 2
    step, dtaps, ntaps = 2, 9, 5
    k1, k2, k3 = jax.random.split(key, 3)
    x = (jax.random.normal(k1, (B, Lseq, Nmodes), jnp.float32)
         + 1j * jax.random.normal(k2, (B, Lseq, Nmodes), jnp.float32)
         ).astype(jnp.complex64)
    task_info = jnp.stack(
        [jnp.array([2.0, -1.0], jnp.float32),
         jnp.full((B,), C_LIGHT / 1.55e-6, jnp.float32),
         jnp.full((B,), 160e9, jnp.float32),
         jnp.full((B,), 1.0, jnp.float32)], axis=1)          # [B, 4]
    params = init_fdbp_params(Nmodes, step, dtaps, ntaps)

    C = step * (dtaps - 1 + ntaps - 1)
    y_ref = fdbp_reference(params, np.asarray(x), np.asarray(task_info))

    y1 = jax.block_until_ready(fdbp_forward(params, x, task_info))       # 1 time tile
    y2 = jax.block_until_ready(fdbp_forward(params, x, task_info,
                                            max_time_tile=128))          # 3 time tiles
    assert y1.shape == (B, Lseq - C, Nmodes), y1.shape
    assert y1.dtype == jnp.complex64
    np.testing.assert_allclose(np.asarray(y1), y_ref, rtol=2e-3, atol=2e-3)
    np.testing.assert_allclose(np.asarray(y2), y_ref, rtol=2e-3, atol=2e-3)

    # ---- test 2: single-pol, per-step (unshared) filters, tiled time axis ---
    B2, L2, M2 = 3, 200, 1
    step2, dtaps2, ntaps2 = 2, 7, 3
    k4, k5 = jax.random.split(k3, 2)
    x2 = (jax.random.normal(k4, (B2, L2, M2), jnp.float32)
          + 1j * jax.random.normal(k5, (B2, L2, M2), jnp.float32)
          ).astype(jnp.complex64)
    ti2 = jnp.stack(
        [jnp.array([1.0, 0.0, 3.0], jnp.float32),
         jnp.full((B2,), C_LIGHT / 1.55e-6, jnp.float32),
         jnp.full((B2,), 160e9, jnp.float32),
         jnp.full((B2,), 1.0, jnp.float32)], axis=1)
    params2 = init_fdbp_params(M2, step2, dtaps2, ntaps2,
                               d_share=False, n_share=False)
    # make per-step filters actually different so index selection is exercised
    stp = jnp.arange(step2, dtype=jnp.float32)
    params2["dkr"] = params2["dkr"] * (1.0 + 0.10 * stp[:, None])
    params2["dki"] = params2["dki"] * (1.0 - 0.05 * stp[:, None])
    params2["nk"] = params2["nk"] * (1.0 + 0.20 * stp[:, None, None])

    C2 = step2 * (dtaps2 - 1 + ntaps2 - 1)
    y2_ref = fdbp_reference(params2, np.asarray(x2), np.asarray(ti2))
    y3 = jax.block_until_ready(fdbp_forward(params2, x2, ti2, max_time_tile=128))
    assert y3.shape == (B2, L2 - C2, M2), y3.shape
    assert y3.dtype == jnp.complex64
    np.testing.assert_allclose(np.asarray(y3), y2_ref, rtol=2e-3, atol=2e-3)

    print("KERNEL_OK")
</pallas_src>

<mosaic_0001>
module attributes {stable_mosaic.version = 11 : i64} {
  func.func @kernel(%arg0: i32, %arg1: i32, %arg2: memref<1x9xf32, #tpu.memory_space<smem>>, %arg3: memref<1x9xf32, #tpu.memory_space<smem>>, %arg4: memref<8x1xf32, #tpu.memory_space<vmem>>, %arg5: memref<5x8x1xf32, #tpu.memory_space<vmem>>, %arg6: memref<1x8x512xf32, #tpu.memory_space<any>>, %arg7: memref<1x8x512xf32, #tpu.memory_space<any>>, %arg8: memref<8x384xf32, #tpu.memory_space<vmem>>, %arg9: memref<8x384xf32, #tpu.memory_space<vmem>>, %arg10: memref<8x512xf32, #tpu.memory_space<vmem>>, %arg11: memref<8x512xf32, #tpu.memory_space<vmem>>, %arg12: memref<2x!tpu.dma_semaphore, #tpu.memory_space<semaphore_mem>>) attributes {dimension_semantics = [#tpu.dimension_semantics<parallel>, #tpu.dimension_semantics<parallel>], iteration_bounds = array<i64: 1, 1>, scalar_prefetch = 0 : i64, scratch_operands = 3 : i64, tpu.core_type = #tpu.core_type<tc>, window_params = [{transform_indices = @transform_0, window_bounds = array<i64: 1, 9>}, {transform_indices = @transform_1, window_bounds = array<i64: 1, 9>}, {transform_indices = @transform_2, window_bounds = array<i64: 8, 1>}, {transform_indices = @transform_3, window_bounds = array<i64: 5, 8, 1>}, {}, {}, {transform_indices = @transform_6, window_bounds = array<i64: 8, 384>}, {transform_indices = @transform_7, window_bounds = array<i64: 8, 384>}]} {
    %c384_i32 = arith.constant 384 : i32
    %0 = arith.muli %arg1, %c384_i32 : i32
    %1 = tpu.assume_multiple %0, 128 : i32
    %c0_i32 = arith.constant 0 : i32
    %c0_i32_0 = arith.constant 0 : i32
    %2 = tpu.memref_slice %arg6[%arg0, %c0_i32_0, %1] : memref<1x8x512xf32, #tpu.memory_space<any>> -> memref<1x8x512xf32, #tpu.memory_space<any>>
    %3 = tpu.memref_squeeze %2 : memref<1x8x512xf32, #tpu.memory_space<any>> -> memref<8x512xf32, #tpu.memory_space<any>>
    %4 = tpu.memref_slice %arg12[%c0_i32] : memref<2x!tpu.dma_semaphore, #tpu.memory_space<semaphore_mem>> -> memref<1x!tpu.dma_semaphore, #tpu.memory_space<semaphore_mem>>
    %5 = tpu.memref_squeeze %4 : memref<1x!tpu.dma_semaphore, #tpu.memory_space<semaphore_mem>> -> memref<!tpu.dma_semaphore, #tpu.memory_space<semaphore_mem>>
    tpu.enqueue_dma source(%3 : memref<8x512xf32, #tpu.memory_space<any>>) target(%arg10 : memref<8x512xf32, #tpu.memory_space<vmem>>) target_semaphore(%5 : memref<!tpu.dma_semaphore, #tpu.memory_space<semaphore_mem>>)
    %c1_i32 = arith.constant 1 : i32
    %c0_i32_1 = arith.constant 0 : i32
    %6 = tpu.memref_slice %arg7[%arg0, %c0_i32_1, %1] : memref<1x8x512xf32, #tpu.memory_space<any>> -> memref<1x8x512xf32, #tpu.memory_space<any>>
    %7 = tpu.memref_squeeze %6 : memref<1x8x512xf32, #tpu.memory_space<any>> -> memref<8x512xf32, #tpu.memory_space<any>>
    %8 = tpu.memref_slice %arg12[%c1_i32] : memref<2x!tpu.dma_semaphore, #tpu.memory_space<semaphore_mem>> -> memref<1x!tpu.dma_semaphore, #tpu.memory_space<semaphore_mem>>
    %9 = tpu.memref_squeeze %8 : memref<1x!tpu.dma_semaphore, #tpu.memory_space<semaphore_mem>> -> memref<!tpu.dma_semaphore, #tpu.memory_space<semaphore_mem>>
    tpu.enqueue_dma source(%7 : memref<8x512xf32, #tpu.memory_space<any>>) target(%arg11 : memref<8x512xf32, #tpu.memory_space<vmem>>) target_semaphore(%9 : memref<!tpu.dma_semaphore, #tpu.memory_space<semaphore_mem>>)
    %c0_i32_2 = arith.constant 0 : i32
    %c0_i32_3 = arith.constant 0 : i32
    %10 = tpu.memref_slice %arg6[%arg0, %c0_i32_3, %1] : memref<1x8x512xf32, #tpu.memory_space<any>> -> memref<1x8x512xf32, #tpu.memory_space<any>>
    %11 = tpu.memref_squeeze %10 : memref<1x8x512xf32, #tpu.memory_space<any>> -> memref<8x512xf32, #tpu.memory_space<any>>
    %12 = tpu.memref_slice %arg12[%c0_i32_2] : memref<2x!tpu.dma_semaphore, #tpu.memory_space<semaphore_mem>> -> memref<1x!tpu.dma_semaphore, #tpu.memory_space<semaphore_mem>>
    %13 = tpu.memref_squeeze %12 : memref<1x!tpu.dma_semaphore, #tpu.memory_space<semaphore_mem>> -> memref<!tpu.dma_semaphore, #tpu.memory_space<semaphore_mem>>
    tpu.wait_dma2 semaphore(%13 : memref<!tpu.dma_semaphore, #tpu.memory_space<semaphore_mem>>) src(%11 : memref<8x512xf32, #tpu.memory_space<any>>) dst(%arg10 : memref<8x512xf32, #tpu.memory_space<vmem>>)
    %c1_i32_4 = arith.constant 1 : i32
    %c0_i32_5 = arith.constant 0 : i32
    %14 = tpu.memref_slice %arg7[%arg0, %c0_i32_5, %1] : memref<1x8x512xf32, #tpu.memory_space<any>> -> memref<1x8x512xf32, #tpu.memory_space<any>>
    %15 = tpu.memref_squeeze %14 : memref<1x8x512xf32, #tpu.memory_space<any>> -> memref<8x512xf32, #tpu.memory_space<any>>
    %16 = tpu.memref_slice %arg12[%c1_i32_4] : memref<2x!tpu.dma_semaphore, #tpu.memory_space<semaphore_mem>> -> memref<1x!tpu.dma_semaphore, #tpu.memory_space<semaphore_mem>>
    %17 = tpu.memref_squeeze %16 : memref<1x!tpu.dma_semaphore, #tpu.memory_space<semaphore_mem>> -> memref<!tpu.dma_semaphore, #tpu.memory_space<semaphore_mem>>
    tpu.wait_dma2 semaphore(%17 : memref<!tpu.dma_semaphore, #tpu.memory_space<semaphore_mem>>) src(%15 : memref<8x512xf32, #tpu.memory_space<any>>) dst(%arg11 : memref<8x512xf32, #tpu.memory_space<vmem>>)
    %c0 = arith.constant 0 : index
    %c0_6 = arith.constant 0 : index
    %18 = vector.load %arg4[%c0, %c0_6] : memref<8x1xf32, #tpu.memory_space<vmem>>, vector<8x1xf32>
    %c0_7 = arith.constant 0 : index
    %c0_8 = arith.constant 0 : index
    %19 = vector.load %arg10[%c0_7, %c0_8] : memref<8x512xf32, #tpu.memory_space<vmem>>, vector<8x512xf32>
    %c0_9 = arith.constant 0 : index
    %c0_10 = arith.constant 0 : index
    %20 = vector.load %arg11[%c0_9, %c0_10] : memref<8x512xf32, #tpu.memory_space<vmem>>, vector<8x512xf32>
    %c0_11 = arith.constant 0 : index
    %c0_12 = arith.constant 0 : index
    %21 = memref.load %arg2[%c0_11, %c0_12] : memref<1x9xf32, #tpu.memory_space<smem>>
    %c0_13 = arith.constant 0 : index
    %c0_14 = arith.constant 0 : index
    %22 = memref.load %arg3[%c0_13, %c0_14] : memref<1x9xf32, #tpu.memory_space<smem>>
    %23 = vector.broadcast %21 : f32 to vector<8x512xf32>
    %24 = arith.mulf %19, %23 : vector<8x512xf32>
    %25 = vector.broadcast %22 : f32 to vector<8x512xf32>
    %26 = arith.mulf %20, %25 : vector<8x512xf32>
    %27 = arith.subf %24, %26 : vector<8x512xf32>
    %28 = vector.broadcast %22 : f32 to vector<8x512xf32>
    %29 = arith.mulf %19, %28 : vector<8x512xf32>
    %30 = vector.broadcast %21 : f32 to vector<8x512xf32>
    %31 = arith.mulf %20, %30 : vector<8x512xf32>
    %32 = arith.addf %29, %31 : vector<8x512xf32>
    %c0_15 = arith.constant 0 : index
    %c1 = arith.constant 1 : index
    %33 = memref.load %arg2[%c0_15, %c1] : memref<1x9xf32, #tpu.memory_space<smem>>
    %c0_16 = arith.constant 0 : index
    %c1_17 = arith.constant 1 : index
    %34 = memref.load %arg3[%c0_16, %c1_17] : memref<1x9xf32, #tpu.memory_space<smem>>
    %c511_i32 = arith.constant 511 : i32
    %35 = tpu.dynamic_rotate %19 by %c511_i32 dim 1 : vector<8x512xf32>, i32 -> vector<8x512xf32>
    %c511_i32_18 = arith.constant 511 : i32
    %36 = tpu.dynamic_rotate %20 by %c511_i32_18 dim 1 : vector<8x512xf32>, i32 -> vector<8x512xf32>
    %37 = vector.broadcast %33 : f32 to vector<8x512xf32>
    %38 = arith.mulf %35, %37 : vector<8x512xf32>
    %39 = arith.addf %27, %38 : vector<8x512xf32>
    %40 = vector.broadcast %34 : f32 to vector<8x512xf32>
    %41 = arith.mulf %36, %40 : vector<8x512xf32>
    %42 = arith.subf %39, %41 : vector<8x512xf32>
    %43 = vector.broadcast %34 : f32 to vector<8x512xf32>
    %44 = arith.mulf %35, %43 : vector<8x512xf32>
    %45 = arith.addf %32, %44 : vector<8x512xf32>
    %46 = vector.broadcast %33 : f32 to vector<8x512xf32>
    %47 = arith.mulf %36, %46 : vector<8x512xf32>
    %48 = arith.addf %45, %47 : vector<8x512xf32>
    %c0_19 = arith.constant 0 : index
    %c2 = arith.constant 2 : index
    %49 = memref.load %arg2[%c0_19, %c2] : memref<1x9xf32, #tpu.memory_space<smem>>
    %c0_20 = arith.constant 0 : index
    %c2_21 = arith.constant 2 : index
    %50 = memref.load %arg3[%c0_20, %c2_21] : memref<1x9xf32, #tpu.memory_space<smem>>
    %c510_i32 = arith.constant 510 : i32
    %51 = tpu.dynamic_rotate %19 by %c510_i32 dim 1 : vector<8x512xf32>, i32 -> vector<8x512xf32>
    %c510_i32_22 = arith.constant 510 : i32
    %52 = tpu.dynamic_rotate %20 by %c510_i32_22 dim 1 : vector<8x512xf32>, i32 -> vector<8x512xf32>
    %53 = vector.broadcast %49 : f32 to vector<8x512xf32>
    %54 = arith.mulf %51, %53 : vector<8x512xf32>
    %55 = arith.addf %42, %54 : vector<8x512xf32>
    %56 = vector.broadcast %50 : f32 to vector<8x512xf32>
    %57 = arith.mulf %52, %56 : vector<8x512xf32>
    %58 = arith.subf %55, %57 : vector<8x512xf32>
    %59 = vector.broadcast %50 : f32 to vector<8x512xf32>
    %60 = arith.mulf %51, %59 : vector<8x512xf32>
    %61 = arith.addf %48, %60 : vector<8x512xf32>
    %62 = vector.broadcast %49 : f32 to vector<8x512xf32>
    %63 = arith.mulf %52, %62 : vector<8x512xf32>
    %64 = arith.addf %61, %63 : vector<8x512xf32>
    %c0_23 = arith.constant 0 : index
    %c3 = arith.constant 3 : index
    %65 = memref.load %arg2[%c0_23, %c3] : memref<1x9xf32, #tpu.memory_space<smem>>
    %c0_24 = arith.constant 0 : index
    %c3_25 = arith.constant 3 : index
    %66 = memref.load %arg3[%c0_24, %c3_25] : memref<1x9xf32, #tpu.memory_space<smem>>
    %c509_i32 = arith.constant 509 : i32
    %67 = tpu.dynamic_rotate %19 by %c509_i32 dim 1 : vector<8x512xf32>, i32 -> vector<8x512xf32>
    %c509_i32_26 = arith.constant 509 : i32
    %68 = tpu.dynamic_rotate %20 by %c509_i32_26 dim 1 : vector<8x512xf32>, i32 -> vector<8x512xf32>
    %69 = vector.broadcast %65 : f32 to vector<8x512xf32>
    %70 = arith.mulf %67, %69 : vector<8x512xf32>
    %71 = arith.addf %58, %70 : vector<8x512xf32>
    %72 = vector.broadcast %66 : f32 to vector<8x512xf32>
    %73 = arith.mulf %68, %72 : vector<8x512xf32>
    %74 = arith.subf %71, %73 : vector<8x512xf32>
    %75 = vector.broadcast %66 : f32 to vector<8x512xf32>
    %76 = arith.mulf %67, %75 : vector<8x512xf32>
    %77 = arith.addf %64, %76 : vector<8x512xf32>
    %78 = vector.broadcast %65 : f32 to vector<8x512xf32>
    %79 = arith.mulf %68, %78 : vector<8x512xf32>
    %80 = arith.addf %77, %79 : vector<8x512xf32>
    %c0_27 = arith.constant 0 : index
    %c4 = arith.constant 4 : index
    %81 = memref.load %arg2[%c0_27, %c4] : memref<1x9xf32, #tpu.memory_space<smem>>
    %c0_28 = arith.constant 0 : index
    %c4_29 = arith.constant 4 : index
    %82 = memref.load %arg3[%c0_28, %c4_29] : memref<1x9xf32, #tpu.memory_space<smem>>
    %c508_i32 = arith.constant 508 : i32
    %83 = tpu.dynamic_rotate %19 by %c508_i32 dim 1 : vector<8x512xf32>, i32 -> vector<8x512xf32>
    %c508_i32_30 = arith.constant 508 : i32
    %84 = tpu.dynamic_rotate %20 by %c508_i32_30 dim 1 : vector<8x512xf32>, i32 -> vector<8x512xf32>
    %85 = vector.broadcast %81 : f32 to vector<8x512xf32>
    %86 = arith.mulf %83, %85 : vector<8x512xf32>
    %87 = arith.addf %74, %86 : vector<8x512xf32>
    %88 = vector.broadcast %82 : f32 to vector<8x512xf32>
    %89 = arith.mulf %84, %88 : vector<8x512xf32>
    %90 = arith.subf %87, %89 : vector<8x512xf32>
    %91 = vector.broadcast %82 : f32 to vector<8x512xf32>
    %92 = arith.mulf %83, %91 : vector<8x512xf32>
    %93 = arith.addf %80, %92 : vector<8x512xf32>
    %94 = vector.broadcast %81 : f32 to vector<8x512xf32>
    %95 = arith.mulf %84, %94 : vector<8x512xf32>
    %96 = arith.addf %93, %95 : vector<8x512xf32>
    %c0_31 = arith.constant 0 : index
    %c5 = arith.constant 5 : index
    %97 = memref.load %arg2[%c0_31, %c5] : memref<1x9xf32, #tpu.memory_space<smem>>
    %c0_32 = arith.constant 0 : index
    %c5_33 = arith.constant 5 : index
    %98 = memref.load %arg3[%c0_32, %c5_33] : memref<1x9xf32, #tpu.memory_space<smem>>
    %c507_i32 = arith.constant 507 : i32
    %99 = tpu.dynamic_rotate %19 by %c507_i32 dim 1 : vector<8x512xf32>, i32 -> vector<8x512xf32>
    %c507_i32_34 = arith.constant 507 : i32
    %100 = tpu.dynamic_rotate %20 by %c507_i32_34 dim 1 : vector<8x512xf32>, i32 -> vector<8x512xf32>
    %101 = vector.broadcast %97 : f32 to vector<8x512xf32>
    %102 = arith.mulf %99, %101 : vector<8x512xf32>
    %103 = arith.addf %90, %102 : vector<8x512xf32>
    %104 = vector.broadcast %98 : f32 to vector<8x512xf32>
    %105 = arith.mulf %100, %104 : vector<8x512xf32>
    %106 = arith.subf %103, %105 : vector<8x512xf32>
    %107 = vector.broadcast %98 : f32 to vector<8x512xf32>
    %108 = arith.mulf %99, %107 : vector<8x512xf32>
    %109 = arith.addf %96, %108 : vector<8x512xf32>
    %110 = vector.broadcast %97 : f32 to vector<8x512xf32>
    %111 = arith.mulf %100, %110 : vector<8x512xf32>
    %112 = arith.addf %109, %111 : vector<8x512xf32>
    %c0_35 = arith.constant 0 : index
    %c6 = arith.constant 6 : index
    %113 = memref.load %arg2[%c0_35, %c6] : memref<1x9xf32, #tpu.memory_space<smem>>
    %c0_36 = arith.constant 0 : index
    %c6_37 = arith.constant 6 : index
    %114 = memref.load %arg3[%c0_36, %c6_37] : memref<1x9xf32, #tpu.memory_space<smem>>
    %c506_i32 = arith.constant 506 : i32
    %115 = tpu.dynamic_rotate %19 by %c506_i32 dim 1 : vector<8x512xf32>, i32 -> vector<8x512xf32>
    %c506_i32_38 = arith.constant 506 : i32
    %116 = tpu.dynamic_rotate %20 by %c506_i32_38 dim 1 : vector<8x512xf32>, i32 -> vector<8x512xf32>
    %117 = vector.broadcast %113 : f32 to vector<8x512xf32>
    %118 = arith.mulf %115, %117 : vector<8x512xf32>
    %119 = arith.addf %106, %118 : vector<8x512xf32>
    %120 = vector.broadcast %114 : f32 to vector<8x512xf32>
    %121 = arith.mulf %116, %120 : vector<8x512xf32>
    %122 = arith.subf %119, %121 : vector<8x512xf32>
    %123 = vector.broadcast %114 : f32 to vector<8x512xf32>
    %124 = arith.mulf %115, %123 : vector<8x512xf32>
    %125 = arith.addf %112, %124 : vector<8x512xf32>
    %126 = vector.broadcast %113 : f32 to vector<8x512xf32>
    %127 = arith.mulf %116, %126 : vector<8x512xf32>
    %128 = arith.addf %125, %127 : vector<8x512xf32>
    %c0_39 = arith.constant 0 : index
    %c7 = arith.constant 7 : index
    %129 = memref.load %arg2[%c0_39, %c7] : memref<1x9xf32, #tpu.memory_space<smem>>
    %c0_40 = arith.constant 0 : index
    %c7_41 = arith.constant 7 : index
    %130 = memref.load %arg3[%c0_40, %c7_41] : memref<1x9xf32, #tpu.memory_space<smem>>
    %c505_i32 = arith.constant 505 : i32
    %131 = tpu.dynamic_rotate %19 by %c505_i32 dim 1 : vector<8x512xf32>, i32 -> vector<8x512xf32>
    %c505_i32_42 = arith.constant 505 : i32
    %132 = tpu.dynamic_rotate %20 by %c505_i32_42 dim 1 : vector<8x512xf32>, i32 -> vector<8x512xf32>
    %133 = vector.broadcast %129 : f32 to vector<8x512xf32>
    %134 = arith.mulf %131, %133 : vector<8x512xf32>
    %135 = arith.addf %122, %134 : vector<8x512xf32>
    %136 = vector.broadcast %130 : f32 to vector<8x512xf32>
    %137 = arith.mulf %132, %136 : vector<8x512xf32>
    %138 = arith.subf %135, %137 : vector<8x512xf32>
    %139 = vector.broadcast %130 : f32 to vector<8x512xf32>
    %140 = arith.mulf %131, %139 : vector<8x512xf32>
    %141 = arith.addf %128, %140 : vector<8x512xf32>
    %142 = vector.broadcast %129 : f32 to vector<8x512xf32>
    %143 = arith.mulf %132, %142 : vector<8x512xf32>
    %144 = arith.addf %141, %143 : vector<8x512xf32>
    %c0_43 = arith.constant 0 : index
    %c8 = arith.constant 8 : index
    %145 = memref.load %arg2[%c0_43, %c8] : memref<1x9xf32, #tpu.memory_space<smem>>
    %c0_44 = arith.constant 0 : index
    %c8_45 = arith.constant 8 : index
    %146 = memref.load %arg3[%c0_44, %c8_45] : memref<1x9xf32, #tpu.memory_space<smem>>
    %c504_i32 = arith.constant 504 : i32
    %147 = tpu.dynamic_rotate %19 by %c504_i32 dim 1 : vector<8x512xf32>, i32 -> vector<8x512xf32>
    %c504_i32_46 = arith.constant 504 : i32
    %148 = tpu.dynamic_rotate %20 by %c504_i32_46 dim 1 : vector<8x512xf32>, i32 -> vector<8x512xf32>
    %149 = vector.broadcast %145 : f32 to vector<8x512xf32>
    %150 = arith.mulf %147, %149 : vector<8x512xf32>
    %151 = arith.addf %138, %150 : vector<8x512xf32>
    %152 = vector.broadcast %146 : f32 to vector<8x512xf32>
    %153 = arith.mulf %148, %152 : vector<8x512xf32>
    %154 = arith.subf %151, %153 : vector<8x512xf32>
    %155 = vector.broadcast %146 : f32 to vector<8x512xf32>
    %156 = arith.mulf %147, %155 : vector<8x512xf32>
    %157 = arith.addf %144, %156 : vector<8x512xf32>
    %158 = vector.broadcast %145 : f32 to vector<8x512xf32>
    %159 = arith.mulf %148, %158 : vector<8x512xf32>
    %160 = arith.addf %157, %159 : vector<8x512xf32>
    %161 = arith.mulf %154, %154 : vector<8x512xf32>
    %162 = arith.mulf %160, %160 : vector<8x512xf32>
    %163 = arith.addf %161, %162 : vector<8x512xf32>
    %c4_i32 = arith.constant 4 : i32
    %164 = tpu.dynamic_rotate %163 by %c4_i32 dim 0 : vector<8x512xf32>, i32 -> vector<8x512xf32>
    %165 = arith.addf %163, %164 : vector<8x512xf32>
    %c0_47 = arith.constant 0 : index
    %c0_48 = arith.constant 0 : index
    %c0_49 = arith.constant 0 : index
    %166 = vector.load %arg5[%c0_47, %c0_48, %c0_49] : memref<5x8x1xf32, #tpu.memory_space<vmem>>, vector<1x8x1xf32>
    %167 = vector.shape_cast %166 : vector<1x8x1xf32> to vector<8x1xf32>
    %168 = vector.broadcast %167 : vector<8x1xf32> to vector<8x512xf32>
    %169 = arith.mulf %168, %165 : vector<8x512xf32>
    %c1_50 = arith.constant 1 : index
    %c0_51 = arith.constant 0 : index
    %c0_52 = arith.constant 0 : index
    %170 = vector.load %arg5[%c1_50, %c0_51, %c0_52] : memref<5x8x1xf32, #tpu.memory_space<vmem>>, vector<1x8x1xf32>
    %171 = vector.shape_cast %170 : vector<1x8x1xf32> to vector<8x1xf32>
    %c511_i32_53 = arith.constant 511 : i32
    %172 = tpu.dynamic_rotate %165 by %c511_i32_53 dim 1 : vector<8x512xf32>, i32 -> vector<8x512xf32>
    %173 = vector.broadcast %171 : vector<8x1xf32> to vector<8x512xf32>
    %174 = arith.mulf %173, %172 : vector<8x512xf32>
    %175 = arith.addf %169, %174 : vector<8x512xf32>
    %c2_54 = arith.constant 2 : index
    %c0_55 = arith.constant 0 : index
    %c0_56 = arith.constant 0 : index
    %176 = vector.load %arg5[%c2_54, %c0_55, %c0_56] : memref<5x8x1xf32, #tpu.memory_space<vmem>>, vector<1x8x1xf32>
    %177 = vector.shape_cast %176 : vector<1x8x1xf32> to vector<8x1xf32>
    %c510_i32_57 = arith.constant 510 : i32
    %178 = tpu.dynamic_rotate %165 by %c510_i32_57 dim 1 : vector<8x512xf32>, i32 -> vector<8x512xf32>
    %179 = vector.broadcast %177 : vector<8x1xf32> to vector<8x512xf32>
    %180 = arith.mulf %179, %178 : vector<8x512xf32>
    %181 = arith.addf %175, %180 : vector<8x512xf32>
    %c3_58 = arith.constant 3 : index
    %c0_59 = arith.constant 0 : index
    %c0_60 = arith.constant 0 : index
    %182 = vector.load %arg5[%c3_58, %c0_59, %c0_60] : memref<5x8x1xf32, #tpu.memory_space<vmem>>, vector<1x8x1xf32>
    %183 = vector.shape_cast %182 : vector<1x8x1xf32> to vector<8x1xf32>
    %c509_i32_61 = arith.constant 509 : i32
    %184 = tpu.dynamic_rotate %165 by %c509_i32_61 dim 1 : vector<8x512xf32>, i32 -> vector<8x512xf32>
    %185 = vector.broadcast %183 : vector<8x1xf32> to vector<8x512xf32>
    %186 = arith.mulf %185, %184 : vector<8x512xf32>
    %187 = arith.addf %181, %186 : vector<8x512xf32>
    %c4_62 = arith.constant 4 : index
    %c0_63 = arith.constant 0 : index
    %c0_64 = arith.constant 0 : index
    %188 = vector.load %arg5[%c4_62, %c0_63, %c0_64] : memref<5x8x1xf32, #tpu.memory_space<vmem>>, vector<1x8x1xf32>
    %189 = vector.shape_cast %188 : vector<1x8x1xf32> to vector<8x1xf32>
    %c508_i32_65 = arith.constant 508 : i32
    %190 = tpu.dynamic_rotate %165 by %c508_i32_65 dim 1 : vector<8x512xf32>, i32 -> vector<8x512xf32>
    %191 = vector.broadcast %189 : vector<8x1xf32> to vector<8x512xf32>
    %192 = arith.mulf %191, %190 : vector<8x512xf32>
    %193 = arith.addf %187, %192 : vector<8x512xf32>
    %194 = vector.broadcast %18 : vector<8x1xf32> to vector<8x512xf32>
    %195 = arith.mulf %193, %194 : vector<8x512xf32>
    %196 = math.cos %195 : vector<8x512xf32>
    %197 = math.sin %195 : vector<8x512xf32>
    %c510_i32_66 = arith.constant 510 : i32
    %198 = tpu.dynamic_rotate %154 by %c510_i32_66 dim 1 : vector<8x512xf32>, i32 -> vector<8x512xf32>
    %c510_i32_67 = arith.constant 510 : i32
    %199 = tpu.dynamic_rotate %160 by %c510_i32_67 dim 1 : vector<8x512xf32>, i32 -> vector<8x512xf32>
    %200 = arith.mulf %198, %196 : vector<8x512xf32>
    %201 = arith.mulf %199, %197 : vector<8x512xf32>
    %202 = arith.subf %200, %201 : vector<8x512xf32>
    %203 = arith.mulf %198, %197 : vector<8x512xf32>
    %204 = arith.mulf %199, %196 : vector<8x512xf32>
    %205 = arith.addf %203, %204 : vector<8x512xf32>
    %c0_68 = arith.constant 0 : index
    %c0_69 = arith.constant 0 : index
    %206 = memref.load %arg2[%c0_68, %c0_69] : memref<1x9xf32, #tpu.memory_space<smem>>
    %c0_70 = arith.constant 0 : index
    %c0_71 = arith.constant 0 : index
    %207 = memref.load %arg3[%c0_70, %c0_71] : memref<1x9xf32, #tpu.memory_space<smem>>
    %208 = vector.broadcast %206 : f32 to vector<8x512xf32>
    %209 = arith.mulf %202, %208 : vector<8x512xf32>
    %210 = vector.broadcast %207 : f32 to vector<8x512xf32>
    %211 = arith.mulf %205, %210 : vector<8x512xf32>
    %212 = arith.subf %209, %211 : vector<8x512xf32>
    %213 = vector.broadcast %207 : f32 to vector<8x512xf32>
    %214 = arith.mulf %202, %213 : vector<8x512xf32>
    %215 = vector.broadcast %206 : f32 to vector<8x512xf32>
    %216 = arith.mulf %205, %215 : vector<8x512xf32>
    %217 = arith.addf %214, %216 : vector<8x512xf32>
    %c0_72 = arith.constant 0 : index
    %c1_73 = arith.constant 1 : index
    %218 = memref.load %arg2[%c0_72, %c1_73] : memref<1x9xf32, #tpu.memory_space<smem>>
    %c0_74 = arith.constant 0 : index
    %c1_75 = arith.constant 1 : index
    %219 = memref.load %arg3[%c0_74, %c1_75] : memref<1x9xf32, #tpu.memory_space<smem>>
    %c511_i32_76 = arith.constant 511 : i32
    %220 = tpu.dynamic_rotate %202 by %c511_i32_76 dim 1 : vector<8x512xf32>, i32 -> vector<8x512xf32>
    %c511_i32_77 = arith.constant 511 : i32
    %221 = tpu.dynamic_rotate %205 by %c511_i32_77 dim 1 : vector<8x512xf32>, i32 -> vector<8x512xf32>
    %222 = vector.broadcast %218 : f32 to vector<8x512xf32>
    %223 = arith.mulf %220, %222 : vector<8x512xf32>
    %224 = arith.addf %212, %223 : vector<8x512xf32>
    %225 = vector.broadcast %219 : f32 to vector<8x512xf32>
    %226 = arith.mulf %221, %225 : vector<8x512xf32>
    %227 = arith.subf %224, %226 : vector<8x512xf32>
    %228 = vector.broadcast %219 : f32 to vector<8x512xf32>
    %229 = arith.mulf %220, %228 : vector<8x512xf32>
    %230 = arith.addf %217, %229 : vector<8x512xf32>
    %231 = vector.broadcast %218 : f32 to vector<8x512xf32>
    %232 = arith.mulf %221, %231 : vector<8x512xf32>
    %233 = arith.addf %230, %232 : vector<8x512xf32>
    %c0_78 = arith.constant 0 : index
    %c2_79 = arith.constant 2 : index
    %234 = memref.load %arg2[%c0_78, %c2_79] : memref<1x9xf32, #tpu.memory_space<smem>>
    %c0_80 = arith.constant 0 : index
    %c2_81 = arith.constant 2 : index
    %235 = memref.load %arg3[%c0_80, %c2_81] : memref<1x9xf32, #tpu.memory_space<smem>>
    %c510_i32_82 = arith.constant 510 : i32
    %236 = tpu.dynamic_rotate %202 by %c510_i32_82 dim 1 : vector<8x512xf32>, i32 -> vector<8x512xf32>
    %c510_i32_83 = arith.constant 510 : i32
    %237 = tpu.dynamic_rotate %205 by %c510_i32_83 dim 1 : vector<8x512xf32>, i32 -> vector<8x512xf32>
    %238 = vector.broadcast %234 : f32 to vector<8x512xf32>
    %239 = arith.mulf %236, %238 : vector<8x512xf32>
    %240 = arith.addf %227, %239 : vector<8x512xf32>
    %241 = vector.broadcast %235 : f32 to vector<8x512xf32>
    %242 = arith.mulf %237, %241 : vector<8x512xf32>
    %243 = arith.subf %240, %242 : vector<8x512xf32>
    %244 = vector.broadcast %235 : f32 to vector<8x512xf32>
    %245 = arith.mulf %236, %244 : vector<8x512xf32>
    %246 = arith.addf %233, %245 : vector<8x512xf32>
    %247 = vector.broadcast %234 : f32 to vector<8x512xf32>
    %248 = arith.mulf %237, %247 : vector<8x512xf32>
    %249 = arith.addf %246, %248 : vector<8x512xf32>
    %c0_84 = arith.constant 0 : index
    %c3_85 = arith.constant 3 : index
    %250 = memref.load %arg2[%c0_84, %c3_85] : memref<1x9xf32, #tpu.memory_space<smem>>
    %c0_86 = arith.constant 0 : index
    %c3_87 = arith.constant 3 : index
    %251 = memref.load %arg3[%c0_86, %c3_87] : memref<1x9xf32, #tpu.memory_space<smem>>
    %c509_i32_88 = arith.constant 509 : i32
    %252 = tpu.dynamic_rotate %202 by %c509_i32_88 dim 1 : vector<8x512xf32>, i32 -> vector<8x512xf32>
    %c509_i32_89 = arith.constant 509 : i32
    %253 = tpu.dynamic_rotate %205 by %c509_i32_89 dim 1 : vector<8x512xf32>, i32 -> vector<8x512xf32>
    %254 = vector.broadcast %250 : f32 to vector<8x512xf32>
    %255 = arith.mulf %252, %254 : vector<8x512xf32>
    %256 = arith.addf %243, %255 : vector<8x512xf32>
    %257 = vector.broadcast %251 : f32 to vector<8x512xf32>
    %258 = arith.mulf %253, %257 : vector<8x512xf32>
    %259 = arith.subf %256, %258 : vector<8x512xf32>
    %260 = vector.broadcast %251 : f32 to vector<8x512xf32>
    %261 = arith.mulf %252, %260 : vector<8x512xf32>
    %262 = arith.addf %249, %261 : vector<8x512xf32>
    %263 = vector.broadcast %250 : f32 to vector<8x512xf32>
    %264 = arith.mulf %253, %263 : vector<8x512xf32>
    %265 = arith.addf %262, %264 : vector<8x512xf32>
    %c0_90 = arith.constant 0 : index
    %c4_91 = arith.constant 4 : index
    %266 = memref.load %arg2[%c0_90, %c4_91] : memref<1x9xf32, #tpu.memory_space<smem>>
    %c0_92 = arith.constant 0 : index
    %c4_93 = arith.constant 4 : index
    %267 = memref.load %arg3[%c0_92, %c4_93] : memref<1x9xf32, #tpu.memory_space<smem>>
    %c508_i32_94 = arith.constant 508 : i32
    %268 = tpu.dynamic_rotate %202 by %c508_i32_94 dim 1 : vector<8x512xf32>, i32 -> vector<8x512xf32>
    %c508_i32_95 = arith.constant 508 : i32
    %269 = tpu.dynamic_rotate %205 by %c508_i32_95 dim 1 : vector<8x512xf32>, i32 -> vector<8x512xf32>
    %270 = vector.broadcast %266 : f32 to vector<8x512xf32>
    %271 = arith.mulf %268, %270 : vector<8x512xf32>
    %272 = arith.addf %259, %271 : vector<8x512xf32>
    %273 = vector.broadcast %267 : f32 to vector<8x512xf32>
    %274 = arith.mulf %269, %273 : vector<8x512xf32>
    %275 = arith.subf %272, %274 : vector<8x512xf32>
    %276 = vector.broadcast %267 : f32 to vector<8x512xf32>
    %277 = arith.mulf %268, %276 : vector<8x512xf32>
    %278 = arith.addf %265, %277 : vector<8x512xf32>
    %279 = vector.broadcast %266 : f32 to vector<8x512xf32>
    %280 = arith.mulf %269, %279 : vector<8x512xf32>
    %281 = arith.addf %278, %280 : vector<8x512xf32>
    %c0_96 = arith.constant 0 : index
    %c5_97 = arith.constant 5 : index
    %282 = memref.load %arg2[%c0_96, %c5_97] : memref<1x9xf32, #tpu.memory_space<smem>>
    %c0_98 = arith.constant 0 : index
    %c5_99 = arith.constant 5 : index
    %283 = memref.load %arg3[%c0_98, %c5_99] : memref<1x9xf32, #tpu.memory_space<smem>>
    %c507_i32_100 = arith.constant 507 : i32
    %284 = tpu.dynamic_rotate %202 by %c507_i32_100 dim 1 : vector<8x512xf32>, i32 -> vector<8x512xf32>
    %c507_i32_101 = arith.constant 507 : i32
    %285 = tpu.dynamic_rotate %205 by %c507_i32_101 dim 1 : vector<8x512xf32>, i32 -> vector<8x512xf32>
    %286 = vector.broadcast %282 : f32 to vector<8x512xf32>
    %287 = arith.mulf %284, %286 : vector<8x512xf32>
    %288 = arith.addf %275, %287 : vector<8x512xf32>
    %289 = vector.broadcast %283 : f32 to vector<8x512xf32>
    %290 = arith.mulf %285, %289 : vector<8x512xf32>
    %291 = arith.subf %288, %290 : vector<8x512xf32>
    %292 = vector.broadcast %283 : f32 to vector<8x512xf32>
    %293 = arith.mulf %284, %292 : vector<8x512xf32>
    %294 = arith.addf %281, %293 : vector<8x512xf32>
    %295 = vector.broadcast %282 : f32 to vector<8x512xf32>
    %296 = arith.mulf %285, %295 : vector<8x512xf32>
    %297 = arith.addf %294, %296 : vector<8x512xf32>
    %c0_102 = arith.constant 0 : index
    %c6_103 = arith.constant 6 : index
    %298 = memref.load %arg2[%c0_102, %c6_103] : memref<1x9xf32, #tpu.memory_space<smem>>
    %c0_104 = arith.constant 0 : index
    %c6_105 = arith.constant 6 : index
    %299 = memref.load %arg3[%c0_104, %c6_105] : memref<1x9xf32, #tpu.memory_space<smem>>
    %c506_i32_106 = arith.constant 506 : i32
    %300 = tpu.dynamic_rotate %202 by %c506_i32_106 dim 1 : vector<8x512xf32>, i32 -> vector<8x512xf32>
    %c506_i32_107 = arith.constant 506 : i32
    %301 = tpu.dynamic_rotate %205 by %c506_i32_107 dim 1 : vector<8x512xf32>, i32 -> vector<8x512xf32>
    %302 = vector.broadcast %298 : f32 to vector<8x512xf32>
    %303 = arith.mulf %300, %302 : vector<8x512xf32>
    %304 = arith.addf %291, %303 : vector<8x512xf32>
    %305 = vector.broadcast %299 : f32 to vector<8x512xf32>
    %306 = arith.mulf %301, %305 : vector<8x512xf32>
    %307 = arith.subf %304, %306 : vector<8x512xf32>
    %308 = vector.broadcast %299 : f32 to vector<8x512xf32>
    %309 = arith.mulf %300, %308 : vector<8x512xf32>
    %310 = arith.addf %297, %309 : vector<8x512xf32>
    %311 = vector.broadcast %298 : f32 to vector<8x512xf32>
    %312 = arith.mulf %301, %311 : vector<8x512xf32>
    %313 = arith.addf %310, %312 : vector<8x512xf32>
    %c0_108 = arith.constant 0 : index
    %c7_109 = arith.constant 7 : index
    %314 = memref.load %arg2[%c0_108, %c7_109] : memref<1x9xf32, #tpu.memory_space<smem>>
    %c0_110 = arith.constant 0 : index
    %c7_111 = arith.constant 7 : index
    %315 = memref.load %arg3[%c0_110, %c7_111] : memref<1x9xf32, #tpu.memory_space<smem>>
    %c505_i32_112 = arith.constant 505 : i32
    %316 = tpu.dynamic_rotate %202 by %c505_i32_112 dim 1 : vector<8x512xf32>, i32 -> vector<8x512xf32>
    %c505_i32_113 = arith.constant 505 : i32
    %317 = tpu.dynamic_rotate %205 by %c505_i32_113 dim 1 : vector<8x512xf32>, i32 -> vector<8x512xf32>
    %318 = vector.broadcast %314 : f32 to vector<8x512xf32>
    %319 = arith.mulf %316, %318 : vector<8x512xf32>
    %320 = arith.addf %307, %319 : vector<8x512xf32>
    %321 = vector.broadcast %315 : f32 to vector<8x512xf32>
    %322 = arith.mulf %317, %321 : vector<8x512xf32>
    %323 = arith.subf %320, %322 : vector<8x512xf32>
    %324 = vector.broadcast %315 : f32 to vector<8x512xf32>
    %325 = arith.mulf %316, %324 : vector<8x512xf32>
    %326 = arith.addf %313, %325 : vector<8x512xf32>
    %327 = vector.broadcast %314 : f32 to vector<8x512xf32>
    %328 = arith.mulf %317, %327 : vector<8x512xf32>
    %329 = arith.addf %326, %328 : vector<8x512xf32>
    %c0_114 = arith.constant 0 : index
    %c8_115 = arith.constant 8 : index
    %330 = memref.load %arg2[%c0_114, %c8_115] : memref<1x9xf32, #tpu.memory_space<smem>>
    %c0_116 = arith.constant 0 : index
    %c8_117 = arith.constant 8 : index
    %331 = memref.load %arg3[%c0_116, %c8_117] : memref<1x9xf32, #tpu.memory_space<smem>>
    %c504_i32_118 = arith.constant 504 : i32
    %332 = tpu.dynamic_rotate %202 by %c504_i32_118 dim 1 : vector<8x512xf32>, i32 -> vector<8x512xf32>
    %c504_i32_119 = arith.constant 504 : i32
    %333 = tpu.dynamic_rotate %205 by %c504_i32_119 dim 1 : vector<8x512xf32>, i32 -> vector<8x512xf32>
    %334 = vector.broadcast %330 : f32 to vector<8x512xf32>
    %335 = arith.mulf %332, %334 : vector<8x512xf32>
    %336 = arith.addf %323, %335 : vector<8x512xf32>
    %337 = vector.broadcast %331 : f32 to vector<8x512xf32>
    %338 = arith.mulf %333, %337 : vector<8x512xf32>
    %339 = arith.subf %336, %338 : vector<8x512xf32>
    %340 = vector.broadcast %331 : f32 to vector<8x512xf32>
    %341 = arith.mulf %332, %340 : vector<8x512xf32>
    %342 = arith.addf %329, %341 : vector<8x512xf32>
    %343 = vector.broadcast %330 : f32 to vector<8x512xf32>
    %344 = arith.mulf %333, %343 : vector<8x512xf32>
    %345 = arith.addf %342, %344 : vector<8x512xf32>
    %346 = arith.mulf %339, %339 : vector<8x512xf32>
    %347 = arith.mulf %345, %345 : vector<8x512xf32>
    %348 = arith.addf %346, %347 : vector<8x512xf32>
    %c4_i32_120 = arith.constant 4 : i32
    %349 = tpu.dynamic_rotate %348 by %c4_i32_120 dim 0 : vector<8x512xf32>, i32 -> vector<8x512xf32>
    %350 = arith.addf %348, %349 : vector<8x512xf32>
    %c0_121 = arith.constant 0 : index
    %c0_122 = arith.constant 0 : index
    %c0_123 = arith.constant 0 : index
    %351 = vector.load %arg5[%c0_121, %c0_122, %c0_123] : memref<5x8x1xf32, #tpu.memory_space<vmem>>, vector<1x8x1xf32>
    %352 = vector.shape_cast %351 : vector<1x8x1xf32> to vector<8x1xf32>
    %353 = vector.broadcast %352 : vector<8x1xf32> to vector<8x512xf32>
    %354 = arith.mulf %353, %350 : vector<8x512xf32>
    %c1_124 = arith.constant 1 : index
    %c0_125 = arith.constant 0 : index
    %c0_126 = arith.constant 0 : index
    %355 = vector.load %arg5[%c1_124, %c0_125, %c0_126] : memref<5x8x1xf32, #tpu.memory_space<vmem>>, vector<1x8x1xf32>
    %356 = vector.shape_cast %355 : vector<1x8x1xf32> to vector<8x1xf32>
    %c511_i32_127 = arith.constant 511 : i32
    %357 = tpu.dynamic_rotate %350 by %c511_i32_127 dim 1 : vector<8x512xf32>, i32 -> vector<8x512xf32>
    %358 = vector.broadcast %356 : vector<8x1xf32> to vector<8x512xf32>
    %359 = arith.mulf %358, %357 : vector<8x512xf32>
    %360 = arith.addf %354, %359 : vector<8x512xf32>
    %c2_128 = arith.constant 2 : index
    %c0_129 = arith.constant 0 : index
    %c0_130 = arith.constant 0 : index
    %361 = vector.load %arg5[%c2_128, %c0_129, %c0_130] : memref<5x8x1xf32, #tpu.memory_space<vmem>>, vector<1x8x1xf32>
    %362 = vector.shape_cast %361 : vector<1x8x1xf32> to vector<8x1xf32>
    %c510_i32_131 = arith.constant 510 : i32
    %363 = tpu.dynamic_rotate %350 by %c510_i32_131 dim 1 : vector<8x512xf32>, i32 -> vector<8x512xf32>
    %364 = vector.broadcast %362 : vector<8x1xf32> to vector<8x512xf32>
    %365 = arith.mulf %364, %363 : vector<8x512xf32>
    %366 = arith.addf %360, %365 : vector<8x512xf32>
    %c3_132 = arith.constant 3 : index
    %c0_133 = arith.constant 0 : index
    %c0_134 = arith.constant 0 : index
    %367 = vector.load %arg5[%c3_132, %c0_133, %c0_134] : memref<5x8x1xf32, #tpu.memory_space<vmem>>, vector<1x8x1xf32>
    %368 = vector.shape_cast %367 : vector<1x8x1xf32> to vector<8x1xf32>
    %c509_i32_135 = arith.constant 509 : i32
    %369 = tpu.dynamic_rotate %350 by %c509_i32_135 dim 1 : vector<8x512xf32>, i32 -> vector<8x512xf32>
    %370 = vector.broadcast %368 : vector<8x1xf32> to vector<8x512xf32>
    %371 = arith.mulf %370, %369 : vector<8x512xf32>
    %372 = arith.addf %366, %371 : vector<8x512xf32>
    %c4_136 = arith.constant 4 : index
    %c0_137 = arith.constant 0 : index
    %c0_138 = arith.constant 0 : index
    %373 = vector.load %arg5[%c4_136, %c0_137, %c0_138] : memref<5x8x1xf32, #tpu.memory_space<vmem>>, vector<1x8x1xf32>
    %374 = vector.shape_cast %373 : vector<1x8x1xf32> to vector<8x1xf32>
    %c508_i32_139 = arith.constant 508 : i32
    %375 = tpu.dynamic_rotate %350 by %c508_i32_139 dim 1 : vector<8x512xf32>, i32 -> vector<8x512xf32>
    %376 = vector.broadcast %374 : vector<8x1xf32> to vector<8x512xf32>
    %377 = arith.mulf %376, %375 : vector<8x512xf32>
    %378 = arith.addf %372, %377 : vector<8x512xf32>
    %379 = vector.broadcast %18 : vector<8x1xf32> to vector<8x512xf32>
    %380 = arith.mulf %378, %379 : vector<8x512xf32>
    %381 = math.cos %380 : vector<8x512xf32>
    %382 = math.sin %380 : vector<8x512xf32>
    %c510_i32_140 = arith.constant 510 : i32
    %383 = tpu.dynamic_rotate %339 by %c510_i32_140 dim 1 : vector<8x512xf32>, i32 -> vector<8x512xf32>
    %c510_i32_141 = arith.constant 510 : i32
    %384 = tpu.dynamic_rotate %345 by %c510_i32_141 dim 1 : vector<8x512xf32>, i32 -> vector<8x512xf32>
    %385 = arith.mulf %383, %381 : vector<8x512xf32>
    %386 = arith.mulf %384, %382 : vector<8x512xf32>
    %387 = arith.subf %385, %386 : vector<8x512xf32>
    %388 = arith.mulf %383, %382 : vector<8x512xf32>
    %389 = arith.mulf %384, %381 : vector<8x512xf32>
    %390 = arith.addf %388, %389 : vector<8x512xf32>
    %391 = vector.extract_strided_slice %387 {offsets = [0, 0], sizes = [8, 384], strides = [1, 1]} : vector<8x512xf32> to vector<8x384xf32>
    %c0_142 = arith.constant 0 : index
    %c0_143 = arith.constant 0 : index
    %392 = vector.load %arg8[%c0_142, %c0_143] : memref<8x384xf32, #tpu.memory_space<vmem>>, vector<8x384xf32>
    tpu.vector_store %arg8[%c0_142, %c0_143], %391 {strides = array<i32>} : memref<8x384xf32, #tpu.memory_space<vmem>>, vector<8x384xf32>,
    %393 = vector.extract_strided_slice %390 {offsets = [0, 0], sizes = [8, 384], strides = [1, 1]} : vector<8x512xf32> to vector<8x384xf32>
    %c0_144 = arith.constant 0 : index
    %c0_145 = arith.constant 0 : index
    %394 = vector.load %arg9[%c0_144, %c0_145] : memref<8x384xf32, #tpu.memory_space<vmem>>, vector<8x384xf32>
    tpu.vector_store %arg9[%c0_144, %c0_145], %393 {strides = array<i32>} : memref<8x384xf32, #tpu.memory_space<vmem>>, vector<8x384xf32>,
    return
  }
  func.func @transform_0(%arg0: i32, %arg1: i32) -> (i32, i32) {
    %c0_i32 = arith.constant 0 : i32
    %c0_i32_0 = arith.constant 0 : i32
    %c0_i32_1 = arith.constant 0 : i32
    return %c0_i32, %c0_i32_0 : i32, i32
  }
  func.func @transform_1(%arg0: i32, %arg1: i32) -> (i32, i32) {
    %c0_i32 = arith.constant 0 : i32
    %c0_i32_0 = arith.constant 0 : i32
    %c0_i32_1 = arith.constant 0 : i32
    return %c0_i32, %c0_i32_0 : i32, i32
  }
  func.func @transform_2(%arg0: i32, %arg1: i32) -> (i32, i32) {
    %c0_i32 = arith.constant 0 : i32
    %c0_i32_0 = arith.constant 0 : i32
    return %arg0, %c0_i32 : i32, i32
  }
  func.func @transform_3(%arg0: i32, %arg1: i32) -> (i32, i32, i32) {
    %c0_i32 = arith.constant 0 : i32
    %c0_i32_0 = arith.constant 0 : i32
    %c0_i32_1 = arith.constant 0 : i32
    return %c0_i32, %arg0, %c0_i32_0 : i32, i32, i32
  }
  func.func @transform_6(%arg0: i32, %arg1: i32) -> (i32, i32) {
    %c0_i32 = arith.constant 0 : i32
    return %arg0, %arg1 : i32, i32
  }
  func.func @transform_7(%arg0: i32, %arg1: i32) -> (i32, i32) {
    %c0_i32 = arith.constant 0 : i32
    return %arg0, %arg1 : i32, i32
  }
}

</mosaic_0001>

<llo_original>
// kernel: tpu_custom_call.1
$region0: #{tpu_custom_call.1}
  #allocation0 [shape = 'u32[]', space=smem, size = 0x4, offset = 0x4, fixed_abs, tag = 'smem constant byte address 0x4 - core index']
  #allocation1 [shape = 'u32[144,128]{1,0:T(1,128)}', space=vmem, size = 0x12000, scoped, tag = 'internal scratch']
  #allocation2 [shape = 'f32[8,512]{1,0:T(8,128)}', space=vmem, size = 0x4000, scoped, tag = 'scratch operand']
  #allocation3 [shape = 'f32[8,512]{1,0:T(8,128)}', space=vmem, size = 0x4000, scoped, tag = 'scratch operand']
  #allocation4 [shape = 's32[2]{0}', space=sflag, size = 0x8, scoped, tag = 'scratch operand']
  #allocation13 [shape = 's32[]', space=sflag, size = 0x4, offset = 0, fixed_abs, tag = 'sflag constant byte address 0x0 - dummy sync flag']
  #allocation14 [shape = 's32[]', space=sflag, size = 0x4, offset = 0, fixed_abs, tag = 'sflag constant byte address 0x0 - dummy sync flag']
  %s0 = inlined_call_operand.vmem [shape: f32[1,9], index: 0, kind: input, shape index: {}]
  %s1 = inlined_call_operand.hbm [shape: f32[1,9], index: 1, kind: input, shape index: {}]
  %s2 = inlined_call_operand.vmem [shape: f32[8,1], index: 2, kind: input, shape index: {}]
  %s3 = inlined_call_operand.vmem [shape: f32[5,8,1], index: 3, kind: input, shape index: {}]
  %s4 = inlined_call_operand.vmem [shape: f32[1,8,512], index: 4, kind: input, shape index: {}]
  %s5 = inlined_call_operand.vmem [shape: f32[1,8,512], index: 5, kind: input, shape index: {}]
  %s6 = inlined_call_operand.hbm [shape: f32[8,384], index: 6, kind: output, shape index: {0}]
  %s7 = inlined_call_operand.hbm [shape: f32[8,384], index: 7, kind: output, shape index: {1}]
  %8 = xla_tuple %s6, %s7
  %s9 = sld [smem:[#allocation0]]
  $region110: #{tpu_custom_call.1} parent=0
    _
  %s11 = ssub.s32 1, %s9
  %s12 = scalar_select 0, %s11, %s9
  $region1: #{tpu_custom_call.1} parent=0
    #allocation5 [shape = 'u8[512]{0}', space=smem, size = 0x200, scoped, tag = 'input window, operand 0, single buffered']
    #allocation6 [shape = 's32[1]{0}', space=sflag, size = 0x4, scoped, tag = 'scoped memory for tpu_custom_call.1']
    #allocation7 [shape = 's32[1]{0}', space=sflag, size = 0x4, scoped, tag = 'scoped memory for tpu_custom_call.1']
    #allocation8 [shape = 's32[1]{0}', space=sflag, size = 0x4, scoped, tag = 'scoped memory for tpu_custom_call.1']
    #allocation9 [shape = 'u8[512]{0}', space=smem, size = 0x200, scoped, tag = 'input window, operand 1, single buffered']
    #allocation10 [shape = 'u8[12288]{0}', space=vmem, size = 0x3000, scoped, tag = 'output window, operand 0, single buffered']
    #allocation11 [shape = 'u8[12288]{0}', space=vmem, size = 0x3000, scoped, tag = 'output window, operand 1, single buffered']
    #allocation12 [shape = 's32[1]{0}', space=sflag, size = 0x4, scoped, tag = 'scoped memory for tpu_custom_call.1']
    %13 = vsyncpa [#allocation8], 0
    %14 = vsyncpa [#allocation7], 0
    %15 = vsyncpa [#allocation6], 0
    %16 = vsyncpa [#allocation12], 0
    // Predicated region
    $region2: #{tpu_custom_call.1} parent=1 // pred_check
      _
    $region3: #{tpu_custom_call.1} parent=1 // pred_check_branch
      %18 = sbr.rel (0) target = $region5
    $region4: #{tpu_custom_call.1} parent=1 // pred_region
      %s20 = ssub.s32 16, 16
      %21 = vsyncadd [#allocation8], %s20
      %s23 = sshll.u32 %s0, 4
      %s24 = int_to_ptr.vmem [resolvable:$true] %s23
      %26 = dma.vmem_to_smem %s24, 16, [#allocation5], [#allocation8]
    $region5: #{tpu_custom_call.1} parent=1 // pred_fallthru
      _
    // Predicated region
    $region6: #{tpu_custom_call.1} parent=1 // pred_check
      _
    $region7: #{tpu_custom_call.1} parent=1 // pred_check_branch
      %28 = sbr.rel (0) target = $region9
    $region8: #{tpu_custom_call.1} parent=1 // pred_region
      %s30 = ssub.s32 16, 16
      %31 = vsyncadd [#allocation7], %s30
      %34 = dma.hbm_to_smem %s1, 16, [#allocation9], [#allocation7]
    $region9: #{tpu_custom_call.1} parent=1 // pred_fallthru
      _
    // Predicated region
    $region10: #{tpu_custom_call.1} parent=1 // pred_check
      _
    $region11: #{tpu_custom_call.1} parent=1 // pred_check_branch
      %36 = sbr.rel (0) target = $region13
    $region12: #{tpu_custom_call.1} parent=1 // pred_region
      _
    $region13: #{tpu_custom_call.1} parent=1 // pred_fallthru
      _
    // Predicated region
    $region14: #{tpu_custom_call.1} parent=1 // pred_check
      _
    $region15: #{tpu_custom_call.1} parent=1 // pred_check_branch
      %38 = sbr.rel (0) target = $region17
    $region16: #{tpu_custom_call.1} parent=1 // pred_region
      _
    $region17: #{tpu_custom_call.1} parent=1 // pred_fallthru
      _
    // Predicated region
    $region18: #{tpu_custom_call.1} parent=1 // pred_check
      _
    $region19: #{tpu_custom_call.1} parent=1 // pred_check_branch
      %40 = sbr.rel (0) target = $region21
    $region20: #{tpu_custom_call.1} parent=1 // pred_region
      %41 = dma.done [#allocation8], 16
    $region21: #{tpu_custom_call.1} parent=1 // pred_fallthru
      _
    // Predicated region
    $region22: #{tpu_custom_call.1} parent=1 // pred_check
      _
    $region23: #{tpu_custom_call.1} parent=1 // pred_check_branch
      %43 = sbr.rel (0) target = $region25
    $region24: #{tpu_custom_call.1} parent=1 // pred_region
      %44 = dma.done [#allocation7], 16
    $region25: #{tpu_custom_call.1} parent=1 // pred_fallthru
      _
    %45 = sfence
    %s46 = smul.u32 0, 384
    %s47 = sshra.s32 %s46, 7
    %s48 = sand.u32 %s46, 127
    %s49 = smul.u32 0, 4
    %s50 = sadd.s32 %s47, %s49
    %s51 = smul.addr %s50, 8
    %s52 = scalar_lea.vmem %s4, %s51
    %p54 = scmp.lt.u32.totalorder 32, 8
    %p55 = pneg %p54
    // Predicated region
    $region26: #{tpu_custom_call.1} parent=1 // pred_check
      _
    $region27: #{tpu_custom_call.1} parent=1 // pred_check_branch
      %57 = sbr.rel (%p54) target = $region29
    $region28: #{tpu_custom_call.1} parent=1 // pred_region
      %s72 = sand.u32 32, 7
      %p73 = scmp.eq.s32.totalorder %s72, 0
      // Predicated region
      $region41: #{tpu_custom_call.1} parent=28 // pred_check
        %p74 = pneg %p73
      $region42: #{tpu_custom_call.1} parent=28 // pred_check_branch
        %76 = sbr.rel (%p74) target = $region44
      $region43: #{tpu_custom_call.1} parent=28 // pred_region
        loop: start=0, step=1, limit=1
        $region45: #{tpu_custom_call.1} parent=43 // loop_pre_header
          _
        $region46: #{tpu_custom_call.1} parent=43 // loop_header
          %s78 = sphi 0, %s82
          %p79 = scmp.ge.s32.totalorder %s78, 1
          %s83 = sphi %s52, %s52
          %s84 = sphi [#allocation2], [#allocation2]
        $region47: #{tpu_custom_call.1} parent=43 // loop_header_branch
          %81 = sbr.rel (%p79) target = $region51
        $region48: #{tpu_custom_call.1} parent=43 // loop_body
          %v85 = vld [vmem:[%s83] sm:$0xff]
          %86 = vst [vmem:[%s84] sm:$0xff] %v85
          %v87 = vld [vmem:[%s83 + $0x8] sm:$0xff]
          %88 = vst [vmem:[%s84 + $0x8] sm:$0xff] %v87
          %v89 = vld [vmem:[%s83 + $0x10] sm:$0xff]
          %90 = vst [vmem:[%s84 + $0x10] sm:$0xff] %v89
          %v91 = vld [vmem:[%s83 + $0x18] sm:$0xff]
          %92 = vst [vmem:[%s84 + $0x18] sm:$0xff] %v91
        $region49: #{tpu_custom_call.1} parent=43 // loop_footer
          %s82 = sadd.s32 1, %s78
        $region50: #{tpu_custom_call.1} parent=43 // loop_footer_branch
          %77 = sbr.rel target = $region46
        $region51: #{tpu_custom_call.1} parent=43 // loop_exit
          _
      $region44: #{tpu_custom_call.1} parent=28 // pred_fallthru
        _
      %p93 = pneg %p73
      // Predicated region
      $region52: #{tpu_custom_call.1} parent=28 // pred_check
        _
      $region53: #{tpu_custom_call.1} parent=28 // pred_check_branch
        %95 = sbr.rel (%p73) target = $region55
      $region54: #{tpu_custom_call.1} parent=28 // pred_region
        %s96 = sand.u32 32, 7
      $region55: #{tpu_custom_call.1} parent=28 // pred_fallthru
        _
    $region29: #{tpu_custom_call.1} parent=1 // pred_fallthru
      _
    // Predicated region
    $region30: #{tpu_custom_call.1} parent=1 // pred_check
      %p58 = pneg %p54
    $region31: #{tpu_custom_call.1} parent=1 // pred_check_branch
      %60 = sbr.rel (%p58) target = $region33
    $region32: #{tpu_custom_call.1} parent=1 // pred_region
      %s61 = sshllo.u32 0, 32
      loop: start=0, step=1, limit=1
      $region34: #{tpu_custom_call.1} parent=32 // loop_pre_header
        _
      $region35: #{tpu_custom_call.1} parent=32 // loop_header
        %s63 = sphi 0, %s67
        %p64 = scmp.ge.s32.totalorder %s63, 1
        %s68 = sphi %s52, %s52
        %s69 = sphi [#allocation2], [#allocation2]
      $region36: #{tpu_custom_call.1} parent=32 // loop_header_branch
        %66 = sbr.rel (%p64) target = $region40
      $region37: #{tpu_custom_call.1} parent=32 // loop_body
        %v70 = vld [vmem:[%s68] sm:%s61]
        %71 = vst [vmem:[%s69] sm:%s61] %v70
      $region38: #{tpu_custom_call.1} parent=32 // loop_footer
        %s67 = sadd.s32 1, %s63
      $region39: #{tpu_custom_call.1} parent=32 // loop_footer_branch
        %62 = sbr.rel target = $region35
      $region40: #{tpu_custom_call.1} parent=32 // loop_exit
        _
    $region33: #{tpu_custom_call.1} parent=1 // pred_fallthru
      _
    // Predicated region
    $region56: #{tpu_custom_call.1} parent=1 // pred_check
      _
    $region57: #{tpu_custom_call.1} parent=1 // pred_check_branch
      %99 = sbr.rel (0) target = $region59
    $region58: #{tpu_custom_call.1} parent=1 // pred_region
      %100 = vsyncadd [#allocation4], 512
    $region59: #{tpu_custom_call.1} parent=1 // pred_fallthru
      _
    %s101 = smul.addr %s50, 8
    %s102 = scalar_lea.vmem %s5, %s101
    %s103 = scalar_lea.sflag [#allocation4], 1
    %p105 = scmp.lt.u32.totalorder 32, 8
    %p106 = pneg %p105
    // Predicated region
    $region60: #{tpu_custom_call.1} parent=1 // pred_check
      _
    $region61: #{tpu_custom_call.1} parent=1 // pred_check_branch
      %108 = sbr.rel (%p105) target = $region63
    $region62: #{tpu_custom_call.1} parent=1 // pred_region
      %s123 = sand.u32 32, 7
      %p124 = scmp.eq.s32.totalorder %s123, 0
      // Predicated region
      $region75: #{tpu_custom_call.1} parent=62 // pred_check
        %p125 = pneg %p124
      $region76: #{tpu_custom_call.1} parent=62 // pred_check_branch
        %127 = sbr.rel (%p125) target = $region78
      $region77: #{tpu_custom_call.1} parent=62 // pred_region
        loop: start=0, step=1, limit=1
        $region79: #{tpu_custom_call.1} parent=77 // loop_pre_header
          _
        $region80: #{tpu_custom_call.1} parent=77 // loop_header
          %s129 = sphi 0, %s133
          %p130 = scmp.ge.s32.totalorder %s129, 1
          %s134 = sphi %s102, %s102
          %s135 = sphi [#allocation3], [#allocation3]
        $region81: #{tpu_custom_call.1} parent=77 // loop_header_branch
          %132 = sbr.rel (%p130) target = $region85
        $region82: #{tpu_custom_call.1} parent=77 // loop_body
          %v136 = vld [vmem:[%s134] sm:$0xff]
          %137 = vst [vmem:[%s135] sm:$0xff] %v136
          %v138 = vld [vmem:[%s134 + $0x8] sm:$0xff]
          %139 = vst [vmem:[%s135 + $0x8] sm:$0xff] %v138
          %v140 = vld [vmem:[%s134 + $0x10] sm:$0xff]
          %141 = vst [vmem:[%s135 + $0x10] sm:$0xff] %v140
          %v142 = vld [vmem:[%s134 + $0x18] sm:$0xff]
          %143 = vst [vmem:[%s135 + $0x18] sm:$0xff] %v142
        $region83: #{tpu_custom_call.1} parent=77 // loop_footer
          %s133 = sadd.s32 1, %s129
        $region84: #{tpu_custom_call.1} parent=77 // loop_footer_branch
          %128 = sbr.rel target = $region80
        $region85: #{tpu_custom_call.1} parent=77 // loop_exit
          _
      $region78: #{tpu_custom_call.1} parent=62 // pred_fallthru
        _
      %p144 = pneg %p124
      // Predicated region
      $region86: #{tpu_custom_call.1} parent=62 // pred_check
        _
      $region87: #{tpu_custom_call.1} parent=62 // pred_check_branch
        %146 = sbr.rel (%p124) target = $region89
      $region88: #{tpu_custom_call.1} parent=62 // pred_region
        %s147 = sand.u32 32, 7
      $region89: #{tpu_custom_call.1} parent=62 // pred_fallthru
        _
    $region63: #{tpu_custom_call.1} parent=1 // pred_fallthru
      _
    // Predicated region
    $region64: #{tpu_custom_call.1} parent=1 // pred_check
      %p109 = pneg %p105
    $region65: #{tpu_custom_call.1} parent=1 // pred_check_branch
      %111 = sbr.rel (%p109) target = $region67
    $region66: #{tpu_custom_call.1} parent=1 // pred_region
      %s112 = sshllo.u32 0, 32
      loop: start=0, step=1, limit=1
      $region68: #{tpu_custom_call.1} parent=66 // loop_pre_header
        _
      $region69: #{tpu_custom_call.1} parent=66 // loop_header
        %s114 = sphi 0, %s118
        %p115 = scmp.ge.s32.totalorder %s114, 1
        %s119 = sphi %s102, %s102
        %s120 = sphi [#allocation3], [#allocation3]
      $region70: #{tpu_custom_call.1} parent=66 // loop_header_branch
        %117 = sbr.rel (%p115) target = $region74
      $region71: #{tpu_custom_call.1} parent=66 // loop_body
        %v121 = vld [vmem:[%s119] sm:%s112]
        %122 = vst [vmem:[%s120] sm:%s112] %v121
      $region72: #{tpu_custom_call.1} parent=66 // loop_footer
        %s118 = sadd.s32 1, %s114
      $region73: #{tpu_custom_call.1} parent=66 // loop_footer_branch
        %113 = sbr.rel target = $region69
      $region74: #{tpu_custom_call.1} parent=66 // loop_exit
        _
    $region67: #{tpu_custom_call.1} parent=1 // pred_fallthru
      _
    // Predicated region
    $region90: #{tpu_custom_call.1} parent=1 // pred_check
      _
    $region91: #{tpu_custom_call.1} parent=1 // pred_check_branch
      %150 = sbr.rel (0) target = $region93
    $region92: #{tpu_custom_call.1} parent=1 // pred_region
      %151 = vsyncadd %s103, 512
    $region93: #{tpu_custom_call.1} parent=1 // pred_fallthru
      _
    %s152 = smul.u32 8, 1
    %s153 = smul.u32 %s152, 4
    %s154 = sshll.u32 %s153, 4
    %155 = dma.done [#allocation4], %s154
    %s156 = sshll.u32 %s153, 4
    %157 = dma.done %s103, %s156
    %v158 = vld [vmem:[%s2] sm:$0xff]
    %v159 = vld [vmem:[#allocation2] sm:$0xff]
    %v160 = vld [vmem:[#allocation2 + $0x8] sm:$0xff]
    %v161 = vld [vmem:[#allocation2 + $0x10] sm:$0xff]
    %v162 = vld [vmem:[#allocation2 + $0x18] sm:$0xff]
    %v163 = vld [vmem:[#allocation3] sm:$0xff]
    %v164 = vld [vmem:[#allocation3 + $0x8] sm:$0xff]
    %v165 = vld [vmem:[#allocation3 + $0x10] sm:$0xff]
    %v166 = vld [vmem:[#allocation3 + $0x18] sm:$0xff]
    %s167 = sld [smem:[#allocation5]]
    %s168 = sld [smem:[#allocation9]]
    %v169 = vstv %s167
    %v170 = vmul.f32 %v159, %v169
    %v171 = vmul.f32 %v160, %v169
    %v172 = vmul.f32 %v161, %v169
    %v173 = vmul.f32 %v162, %v169
    %v174 = vstv %s168
    %v175 = vmul.f32 %v163, %v174
    %v176 = vmul.f32 %v164, %v174
    %v177 = vmul.f32 %v165, %v174
    %v178 = vmul.f32 %v166, %v174
    %v179 = vsub.f32 %v170, %v175
    %v180 = vsub.f32 %v171, %v176
    %v181 = vsub.f32 %v172, %v177
    %v182 = vsub.f32 %v173, %v178
    %v183 = vmul.f32 %v159, %v174
    %v184 = vmul.f32 %v160, %v174
    %v185 = vmul.f32 %v161, %v174
    %v186 = vmul.f32 %v162, %v174
    %v187 = vmul.f32 %v163, %v169
    %v188 = vmul.f32 %v164, %v169
    %v189 = vmul.f32 %v165, %v169
    %v190 = vmul.f32 %v166, %v169
    %v191 = vadd.f32 %v183, %v187
    %v192 = vadd.f32 %v184, %v188
    %v193 = vadd.f32 %v185, %v189
    %v194 = vadd.f32 %v186, %v190
    %s195 = sld [smem:[#allocation5 + $0x1]]
    %s196 = sld [smem:[#allocation9 + $0x1]]
    %197 = vrot.lane.b32.xlu0 %v159, 127
    %v198 = vpop.permute.xlu0 %197
    %199 = vrot.lane.b32.xlu0 %v160, 127
    %v200 = vpop.permute.xlu0 %199
    %201 = vrot.lane.b32.xlu0 %v161, 127
    %v202 = vpop.permute.xlu0 %201
    %203 = vrot.lane.b32.xlu0 %v162, 127
    %v204 = vpop.permute.xlu0 %203
    %v205 = vlaneseq
    %v206 = vand.u32 %v205, 127
    %vm207 = vcmp.lt.s32.totalorder %v206, 127
    %v208 = vsel %vm207, %v202, %v204
    %v209 = vsel %vm207, %v200, %v202
    %v210 = vsel %vm207, %v198, %v200
    %v211 = vsel %vm207, %v204, %v198
    %212 = vrot.lane.b32.xlu0 %v163, 127
    %v213 = vpop.permute.xlu0 %212
    %214 = vrot.lane.b32.xlu0 %v164, 127
    %v215 = vpop.permute.xlu0 %214
    %216 = vrot.lane.b32.xlu0 %v165, 127
    %v217 = vpop.permute.xlu0 %216
    %218 = vrot.lane.b32.xlu0 %v166, 127
    %v219 = vpop.permute.xlu0 %218
    %v220 = vsel %vm207, %v217, %v219
    %v221 = vsel %vm207, %v215, %v217
    %v222 = vsel %vm207, %v213, %v215
    %v223 = vsel %vm207, %v219, %v213
    %v224 = vstv %s195
    %v225 = vmul.f32 %v210, %v224
    %v226 = vmul.f32 %v209, %v224
    %v227 = vmul.f32 %v208, %v224
    %v228 = vmul.f32 %v211, %v224
    %v229 = vadd.f32 %v179, %v225
    %v230 = vadd.f32 %v180, %v226
    %v231 = vadd.f32 %v181, %v227
    %v232 = vadd.f32 %v182, %v228
    %v233 = vstv %s196
    %v234 = vmul.f32 %v222, %v233
    %v235 = vmul.f32 %v221, %v233
    %v236 = vmul.f32 %v220, %v233
    %v237 = vmul.f32 %v223, %v233
    %v238 = vsub.f32 %v229, %v234
    %v239 = vsub.f32 %v230, %v235
    %v240 = vsub.f32 %v231, %v236
    %v241 = vsub.f32 %v232, %v237
    %v242 = vmul.f32 %v210, %v233
    %v243 = vmul.f32 %v209, %v233
    %v244 = vmul.f32 %v208, %v233
    %v245 = vmul.f32 %v211, %v233
    %v246 = vadd.f32 %v191, %v242
    %v247 = vadd.f32 %v192, %v243
    %v248 = vadd.f32 %v193, %v244
    %v249 = vadd.f32 %v194, %v245
    %v250 = vmul.f32 %v222, %v224
    %v251 = vmul.f32 %v221, %v224
    %v252 = vmul.f32 %v220, %v224
    %v253 = vmul.f32 %v223, %v224
    %v254 = vadd.f32 %v246, %v250
    %v255 = vadd.f32 %v247, %v251
    %v256 = vadd.f32 %v248, %v252
    %v257 = vadd.f32 %v249, %v253
    %s258 = sld [smem:[#allocation5 + $0x2]]
    %s259 = sld [smem:[#allocation9 + $0x2]]
    %260 = vrot.lane.b32.xlu0 %v159, 126
    %v261 = vpop.permute.xlu0 %260
    %262 = vrot.lane.b32.xlu0 %v160, 126
    %v263 = vpop.permute.xlu0 %262
    %264 = vrot.lane.b32.xlu0 %v161, 126
    %v265 = vpop.permute.xlu0 %264
    %266 = vrot.lane.b32.xlu0 %v162, 126
    %v267 = vpop.permute.xlu0 %266
    %vm268 = vcmp.lt.s32.totalorder %v206, 126
    %v269 = vsel %vm268, %v265, %v267
    %v270 = vsel %vm268, %v263, %v265
    %v271 = vsel %vm268, %v261, %v263
    %v272 = vsel %vm268, %v267, %v261
    %273 = vrot.lane.b32.xlu0 %v163, 126
    %v274 = vpop.permute.xlu0 %273
    %275 = vrot.lane.b32.xlu0 %v164, 126
    %v276 = vpop.permute.xlu0 %275
    %277 = vrot.lane.b32.xlu0 %v165, 126
    %v278 = vpop.permute.xlu0 %277
    %279 = vrot.lane.b32.xlu0 %v166, 126
    %v280 = vpop.permute.xlu0 %279
    %v281 = vsel %vm268, %v278, %v280
    %v282 = vsel %vm268, %v276, %v278
    %v283 = vsel %vm268, %v274, %v276
    %v284 = vsel %vm268, %v280, %v274
    %v285 = vstv %s258
    %v286 = vmul.f32 %v271, %v285
    %v287 = vmul.f32 %v270, %v285
    %v288 = vmul.f32 %v269, %v285
    %v289 = vmul.f32 %v272, %v285
    %v290 = vadd.f32 %v238, %v286
    %v291 = vadd.f32 %v239, %v287
    %v292 = vadd.f32 %v240, %v288
    %v293 = vadd.f32 %v241, %v289
    %v294 = vstv %s259
    %v295 = vmul.f32 %v283, %v294
    %v296 = vmul.f32 %v282, %v294
    %v297 = vmul.f32 %v281, %v294
    %v298 = vmul.f32 %v284, %v294
    %v299 = vsub.f32 %v290, %v295
    %v300 = vsub.f32 %v291, %v296
    %v301 = vsub.f32 %v292, %v297
    %v302 = vsub.f32 %v293, %v298
    %v303 = vmul.f32 %v271, %v294
    %v304 = vmul.f32 %v270, %v294
    %v305 = vmul.f32 %v269, %v294
    %v306 = vmul.f32 %v272, %v294
    %v307 = vadd.f32 %v254, %v303
    %v308 = vadd.f32 %v255, %v304
    %v309 = vadd.f32 %v256, %v305
    %v310 = vadd.f32 %v257, %v306
    %v311 = vmul.f32 %v283, %v285
    %v312 = vmul.f32 %v282, %v285
    %v313 = vmul.f32 %v281, %v285
    %v314 = vmul.f32 %v284, %v285
    %v315 = vadd.f32 %v307, %v311
    %v316 = vadd.f32 %v308, %v312
    %v317 = vadd.f32 %v309, %v313
    %v318 = vadd.f32 %v310, %v314
    %s319 = sld [smem:[#allocation5 + $0x3]]
    %s320 = sld [smem:[#allocation9 + $0x3]]
    %321 = vrot.lane.b32.xlu0 %v159, 125
    %v322 = vpop.permute.xlu0 %321
    %323 = vrot.lane.b32.xlu0 %v160, 125
    %v324 = vpop.permute.xlu0 %323
    %325 = vrot.lane.b32.xlu0 %v161, 125
    %v326 = vpop.permute.xlu0 %325
    %327 = vrot.lane.b32.xlu0 %v162, 125
    %v328 = vpop.permute.xlu0 %327
    %vm329 = vcmp.lt.s32.totalorder %v206, 125
    %v330 = vsel %vm329, %v326, %v328
    %v331 = vsel %vm329, %v324, %v326
    %v332 = vsel %vm329, %v322, %v324
    %v333 = vsel %vm329, %v328, %v322
    %334 = vrot.lane.b32.xlu0 %v163, 125
    %v335 = vpop.permute.xlu0 %334
    %336 = vrot.lane.b32.xlu0 %v164, 125
    %v337 = vpop.permute.xlu0 %336
    %338 = vrot.lane.b32.xlu0 %v165, 125
    %v339 = vpop.permute.xlu0 %338
    %340 = vrot.lane.b32.xlu0 %v166, 125
    %v341 = vpop.permute.xlu0 %340
    %v342 = vsel %vm329, %v339, %v341
    %v343 = vsel %vm329, %v337, %v339
    %v344 = vsel %vm329, %v335, %v337
    %v345 = vsel %vm329, %v341, %v335
    %v346 = vstv %s319
    %v347 = vmul.f32 %v332, %v346
    %v348 = vmul.f32 %v331, %v346
    %v349 = vmul.f32 %v330, %v346
    %v350 = vmul.f32 %v333, %v346
    %v351 = vadd.f32 %v299, %v347
    %v352 = vadd.f32 %v300, %v348
    %v353 = vadd.f32 %v301, %v349
    %v354 = vadd.f32 %v302, %v350
    %v355 = vstv %s320
    %v356 = vmul.f32 %v344, %v355
    %v357 = vmul.f32 %v343, %v355
    %v358 = vmul.f32 %v342, %v355
    %v359 = vmul.f32 %v345, %v355
    %v360 = vsub.f32 %v351, %v356
    %v361 = vsub.f32 %v352, %v357
    %v362 = vsub.f32 %v353, %v358
    %v363 = vsub.f32 %v354, %v359
    %v364 = vmul.f32 %v332, %v355
    %v365 = vmul.f32 %v331, %v355
    %v366 = vmul.f32 %v330, %v355
    %v367 = vmul.f32 %v333, %v355
    %v368 = vadd.f32 %v315, %v364
    %v369 = vadd.f32 %v316, %v365
    %v370 = vadd.f32 %v317, %v366
    %v371 = vadd.f32 %v318, %v367
    %v372 = vmul.f32 %v344, %v346
    %v373 = vmul.f32 %v343, %v346
    %v374 = vmul.f32 %v342, %v346
    %v375 = vmul.f32 %v345, %v346
    %v376 = vadd.f32 %v368, %v372
    %v377 = vadd.f32 %v369, %v373
    %v378 = vadd.f32 %v370, %v374
    %v379 = vadd.f32 %v371, %v375
    %s380 = sld [smem:[#allocation5 + $0x4]]
    %s381 = sld [smem:[#allocation9 + $0x4]]
    %382 = vrot.lane.b32.xlu0 %v159, 124
    %v383 = vpop.permute.xlu0 %382
    %384 = vrot.lane.b32.xlu0 %v160, 124
    %v385 = vpop.permute.xlu0 %384
    %386 = vrot.lane.b32.xlu0 %v161, 124
    %v387 = vpop.permute.xlu0 %386
    %388 = vrot.lane.b32.xlu0 %v162, 124
    %v389 = vpop.permute.xlu0 %388
    %vm390 = vcmp.lt.s32.totalorder %v206, 124
    %v391 = vsel %vm390, %v387, %v389
    %v392 = vsel %vm390, %v385, %v387
    %v393 = vsel %vm390, %v383, %v385
    %v394 = vsel %vm390, %v389, %v383
    %395 = vrot.lane.b32.xlu0 %v163, 124
    %v396 = vpop.permute.xlu0 %395
    %397 = vrot.lane.b32.xlu0 %v164, 124
    %v398 = vpop.permute.xlu0 %397
    %399 = vrot.lane.b32.xlu0 %v165, 124
    %v400 = vpop.permute.xlu0 %399
    %401 = vrot.lane.b32.xlu0 %v166, 124
    %v402 = vpop.permute.xlu0 %401
    %v403 = vsel %vm390, %v400, %v402
    %v404 = vsel %vm390, %v398, %v400
    %v405 = vsel %vm390, %v396, %v398
    %v406 = vsel %vm390, %v402, %v396
    %v407 = vstv %s380
    %v408 = vmul.f32 %v393, %v407
    %v409 = vmul.f32 %v392, %v407
    %v410 = vmul.f32 %v391, %v407
    %v411 = vmul.f32 %v394, %v407
    %v412 = vadd.f32 %v360, %v408
    %v413 = vadd.f32 %v361, %v409
    %v414 = vadd.f32 %v362, %v410
    %v415 = vadd.f32 %v363, %v411
    %v416 = vstv %s381
    %v417 = vmul.f32 %v405, %v416
    %v418 = vmul.f32 %v404, %v416
    %v419 = vmul.f32 %v403, %v416
    %v420 = vmul.f32 %v406, %v416
    %v421 = vsub.f32 %v412, %v417
    %v422 = vsub.f32 %v413, %v418
    %v423 = vsub.f32 %v414, %v419
    %v424 = vsub.f32 %v415, %v420
    %v425 = vmul.f32 %v393, %v416
    %v426 = vmul.f32 %v392, %v416
    %v427 = vmul.f32 %v391, %v416
    %v428 = vmul.f32 %v394, %v416
    %v429 = vadd.f32 %v376, %v425
    %v430 = vadd.f32 %v377, %v426
    %v431 = vadd.f32 %v378, %v427
    %v432 = vadd.f32 %v379, %v428
    %v433 = vmul.f32 %v405, %v407
    %v434 = vmul.f32 %v404, %v407
    %v435 = vmul.f32 %v403, %v407
    %v436 = vmul.f32 %v406, %v407
    %v437 = vadd.f32 %v429, %v433
    %v438 = vadd.f32 %v430, %v434
    %v439 = vadd.f32 %v431, %v435
    %v440 = vadd.f32 %v432, %v436
    %s441 = sld [smem:[#allocation5 + $0x5]]
    %s442 = sld [smem:[#allocation9 + $0x5]]
    %443 = vrot.lane.b32.xlu0 %v159, 123
    %v444 = vpop.permute.xlu0 %443
    %445 = vrot.lane.b32.xlu0 %v160, 123
    %v446 = vpop.permute.xlu0 %445
    %447 = vrot.lane.b32.xlu0 %v161, 123
    %v448 = vpop.permute.xlu0 %447
    %449 = vrot.lane.b32.xlu0 %v162, 123
    %v450 = vpop.permute.xlu0 %449
    %vm451 = vcmp.lt.s32.totalorder %v206, 123
    %v452 = vsel %vm451, %v448, %v450
    %v453 = vsel %vm451, %v446, %v448
    %v454 = vsel %vm451, %v444, %v446
    %v455 = vsel %vm451, %v450, %v444
    %456 = vrot.lane.b32.xlu0 %v163, 123
    %v457 = vpop.permute.xlu0 %456
    %458 = vrot.lane.b32.xlu0 %v164, 123
    %v459 = vpop.permute.xlu0 %458
    %460 = vrot.lane.b32.xlu0 %v165, 123
    %v461 = vpop.permute.xlu0 %460
    %462 = vrot.lane.b32.xlu0 %v166, 123
    %v463 = vpop.permute.xlu0 %462
    %v464 = vsel %vm451, %v461, %v463
    %v465 = vsel %vm451, %v459, %v461
    %v466 = vsel %vm451, %v457, %v459
    %v467 = vsel %vm451, %v463, %v457
    %v468 = vstv %s441
    %v469 = vmul.f32 %v454, %v468
    %v470 = vmul.f32 %v453, %v468
    %v471 = vmul.f32 %v452, %v468
    %v472 = vmul.f32 %v455, %v468
    %v473 = vadd.f32 %v421, %v469
    %v474 = vadd.f32 %v422, %v470
    %v475 = vadd.f32 %v423, %v471
    %v476 = vadd.f32 %v424, %v472
    %v477 = vstv %s442
    %v478 = vmul.f32 %v466, %v477
    %v479 = vmul.f32 %v465, %v477
    %v480 = vmul.f32 %v464, %v477
    %v481 = vmul.f32 %v467, %v477
    %v482 = vsub.f32 %v473, %v478
    %v483 = vsub.f32 %v474, %v479
    %v484 = vsub.f32 %v475, %v480
    %v485 = vsub.f32 %v476, %v481
    %v486 = vmul.f32 %v454, %v477
    %v487 = vmul.f32 %v453, %v477
    %v488 = vmul.f32 %v452, %v477
    %v489 = vmul.f32 %v455, %v477
    %v490 = vadd.f32 %v437, %v486
    %v491 = vadd.f32 %v438, %v487
    %v492 = vadd.f32 %v439, %v488
    %v493 = vadd.f32 %v440, %v489
    %v494 = vmul.f32 %v466, %v468
    %v495 = vmul.f32 %v465, %v468
    %v496 = vmul.f32 %v464, %v468
    %v497 = vmul.f32 %v467, %v468
    %v498 = vadd.f32 %v490, %v494
    %v499 = vadd.f32 %v491, %v495
    %v500 = vadd.f32 %v492, %v496
    %v501 = vadd.f32 %v493, %v497
    %s502 = sld [smem:[#allocation5 + $0x6]]
    %s503 = sld [smem:[#allocation9 + $0x6]]
    %504 = vrot.lane.b32.xlu0 %v159, 122
    %v505 = vpop.permute.xlu0 %504
    %506 = vrot.lane.b32.xlu0 %v160, 122
    %v507 = vpop.permute.xlu0 %506
    %508 = vrot.lane.b32.xlu0 %v161, 122
    %v509 = vpop.permute.xlu0 %508
    %510 = vrot.lane.b32.xlu0 %v162, 122
    %v511 = vpop.permute.xlu0 %510
    %vm512 = vcmp.lt.s32.totalorder %v206, 122
    %v513 = vsel %vm512, %v509, %v511
    %v514 = vsel %vm512, %v507, %v509
    %v515 = vsel %vm512, %v505, %v507
    %v516 = vsel %vm512, %v511, %v505
    %517 = vrot.lane.b32.xlu0 %v163, 122
    %v518 = vpop.permute.xlu0 %517
    %519 = vrot.lane.b32.xlu0 %v164, 122
    %v520 = vpop.permute.xlu0 %519
    %521 = vrot.lane.b32.xlu0 %v165, 122
    %v522 = vpop.permute.xlu0 %521
    %523 = vrot.lane.b32.xlu0 %v166, 122
    %v524 = vpop.permute.xlu0 %523
    %v525 = vsel %vm512, %v522, %v524
    %v526 = vsel %vm512, %v520, %v522
    %v527 = vsel %vm512, %v518, %v520
    %v528 = vsel %vm512, %v524, %v518
    %v529 = vstv %s502
    %v530 = vmul.f32 %v515, %v529
    %v531 = vmul.f32 %v514, %v529
    %v532 = vmul.f32 %v513, %v529
    %v533 = vmul.f32 %v516, %v529
    %v534 = vadd.f32 %v482, %v530
    %v535 = vadd.f32 %v483, %v531
    %v536 = vadd.f32 %v484, %v532
    %v537 = vadd.f32 %v485, %v533
    %v538 = vstv %s503
    %v539 = vmul.f32 %v527, %v538
    %v540 = vmul.f32 %v526, %v538
    %v541 = vmul.f32 %v525, %v538
    %v542 = vmul.f32 %v528, %v538
    %v543 = vsub.f32 %v534, %v539
    %v544 = vsub.f32 %v535, %v540
    %v545 = vsub.f32 %v536, %v541
    %v546 = vsub.f32 %v537, %v542
    %v547 = vmul.f32 %v515, %v538
    %v548 = vmul.f32 %v514, %v538
    %v549 = vmul.f32 %v513, %v538
    %v550 = vmul.f32 %v516, %v538
    %v551 = vadd.f32 %v498, %v547
    %v552 = vadd.f32 %v499, %v548
    %v553 = vadd.f32 %v500, %v549
    %v554 = vadd.f32 %v501, %v550
    %v555 = vmul.f32 %v527, %v529
    %v556 = vmul.f32 %v526, %v529
    %v557 = vmul.f32 %v525, %v529
    %v558 = vmul.f32 %v528, %v529
    %v559 = vadd.f32 %v551, %v555
    %v560 = vadd.f32 %v552, %v556
    %v561 = vadd.f32 %v553, %v557
    %v562 = vadd.f32 %v554, %v558
    %s563 = sld [smem:[#allocation5 + $0x7]]
    %s564 = sld [smem:[#allocation9 + $0x7]]
    %565 = vrot.lane.b32.xlu0 %v159, 121
    %v566 = vpop.permute.xlu0 %565
    %567 = vrot.lane.b32.xlu0 %v160, 121
    %v568 = vpop.permute.xlu0 %567
    %569 = vrot.lane.b32.xlu0 %v161, 121
    %v570 = vpop.permute.xlu0 %569
    %571 = vrot.lane.b32.xlu0 %v162, 121
    %v572 = vpop.permute.xlu0 %571
    %vm573 = vcmp.lt.s32.totalorder %v206, 121
    %v574 = vsel %vm573, %v570, %v572
    %v575 = vsel %vm573, %v568, %v570
    %v576 = vsel %vm573, %v566, %v568
    %v577 = vsel %vm573, %v572, %v566
    %578 = vrot.lane.b32.xlu0 %v163, 121
    %v579 = vpop.permute.xlu0 %578
    %580 = vrot.lane.b32.xlu0 %v164, 121
    %v581 = vpop.permute.xlu0 %580
    %582 = vrot.lane.b32.xlu0 %v165, 121
    %v583 = vpop.permute.xlu0 %582
    %584 = vrot.lane.b32.xlu0 %v166, 121
    %v585 = vpop.permute.xlu0 %584
    %v586 = vsel %vm573, %v583, %v585
    %v587 = vsel %vm573, %v581, %v583
    %v588 = vsel %vm573, %v579, %v581
    %v589 = vsel %vm573, %v585, %v579
    %v590 = vstv %s563
    %v591 = vmul.f32 %v576, %v590
    %v592 = vmul.f32 %v575, %v590
    %v593 = vmul.f32 %v574, %v590
    %v594 = vmul.f32 %v577, %v590
    %v595 = vadd.f32 %v543, %v591
    %v596 = vadd.f32 %v544, %v592
    %v597 = vadd.f32 %v545, %v593
    %v598 = vadd.f32 %v546, %v594
    %v599 = vstv %s564
    %v600 = vmul.f32 %v588, %v599
    %v601 = vmul.f32 %v587, %v599
    %v602 = vmul.f32 %v586, %v599
    %v603 = vmul.f32 %v589, %v599
    %v604 = vsub.f32 %v595, %v600
    %v605 = vsub.f32 %v596, %v601
    %v606 = vsub.f32 %v597, %v602
    %v607 = vsub.f32 %v598, %v603
    %v608 = vmul.f32 %v576, %v599
    %v609 = vmul.f32 %v575, %v599
    %v610 = vmul.f32 %v574, %v599
    %v611 = vmul.f32 %v577, %v599
    %v612 = vadd.f32 %v559, %v608
    %v613 = vadd.f32 %v560, %v609
    %v614 = vadd.f32 %v561, %v610
    %v615 = vadd.f32 %v562, %v611
    %v616 = vmul.f32 %v588, %v590
    %v617 = vmul.f32 %v587, %v590
    %v618 = vmul.f32 %v586, %v590
    %v619 = vmul.f32 %v589, %v590
    %v620 = vadd.f32 %v612, %v616
    %v621 = vadd.f32 %v613, %v617
    %v622 = vadd.f32 %v614, %v618
    %v623 = vadd.f32 %v615, %v619
    %s624 = sld [smem:[#allocation5 + $0x8]]
    %s625 = sld [smem:[#allocation9 + $0x8]]
    %626 = vrot.lane.b32.xlu0 %v159, 120
    %v627 = vpop.permute.xlu0 %626
    %628 = vrot.lane.b32.xlu0 %v160, 120
    %v629 = vpop.permute.xlu0 %628
    %630 = vrot.lane.b32.xlu0 %v161, 120
    %v631 = vpop.permute.xlu0 %630
    %632 = vrot.lane.b32.xlu0 %v162, 120
    %v633 = vpop.permute.xlu0 %632
    %vm634 = vcmp.lt.s32.totalorder %v206, 120
    %v635 = vsel %vm634, %v631, %v633
    %v636 = vsel %vm634, %v629, %v631
    %v637 = vsel %vm634, %v627, %v629
    %v638 = vsel %vm634, %v633, %v627
    %639 = vrot.lane.b32.xlu0 %v163, 120
    %v640 = vpop.permute.xlu0 %639
    %641 = vrot.lane.b32.xlu0 %v164, 120
    %v642 = vpop.permute.xlu0 %641
    %643 = vrot.lane.b32.xlu0 %v165, 120
    %v644 = vpop.permute.xlu0 %643
    %645 = vrot.lane.b32.xlu0 %v166, 120
    %v646 = vpop.permute.xlu0 %645
    %v647 = vsel %vm634, %v644, %v646
    %v648 = vsel %vm634, %v642, %v644
    %v649 = vsel %vm634, %v640, %v642
    %v650 = vsel %vm634, %v646, %v640
    %v651 = vstv %s624
    %v652 = vmul.f32 %v637, %v651
    %v653 = vmul.f32 %v636, %v651
    %v654 = vmul.f32 %v635, %v651
    %v655 = vmul.f32 %v638, %v651
    %v656 = vadd.f32 %v604, %v652
    %v657 = vadd.f32 %v605, %v653
    %v658 = vadd.f32 %v606, %v654
    %v659 = vadd.f32 %v607, %v655
    %v660 = vstv %s625
    %v661 = vmul.f32 %v649, %v660
    %v662 = vmul.f32 %v648, %v660
    %v663 = vmul.f32 %v647, %v660
    %v664 = vmul.f32 %v650, %v660
    %v665 = vsub.f32 %v656, %v661
    %v666 = vsub.f32 %v657, %v662
    %v667 = vsub.f32 %v658, %v663
    %v668 = vsub.f32 %v659, %v664
    %v669 = vmul.f32 %v637, %v660
    %v670 = vmul.f32 %v636, %v660
    %v671 = vmul.f32 %v635, %v660
    %v672 = vmul.f32 %v638, %v660
    %v673 = vadd.f32 %v620, %v669
    %v674 = vadd.f32 %v621, %v670
    %v675 = vadd.f32 %v622, %v671
    %v676 = vadd.f32 %v623, %v672
    %v677 = vmul.f32 %v649, %v651
    %v678 = vmul.f32 %v648, %v651
    %v679 = vmul.f32 %v647, %v651
    %v680 = vmul.f32 %v650, %v651
    %v681 = vadd.f32 %v673, %v677
    %v682 = vadd.f32 %v674, %v678
    %v683 = vadd.f32 %v675, %v679
    %v684 = vadd.f32 %v676, %v680
    %v685 = vmul.f32 %v665, %v665
    %v686 = vmul.f32 %v666, %v666
    %v687 = vmul.f32 %v667, %v667
    %v688 = vmul.f32 %v668, %v668
    %v689 = vmul.f32 %v681, %v681
    %v690 = vmul.f32 %v682, %v682
    %v691 = vmul.f32 %v683, %v683
    %v692 = vmul.f32 %v684, %v684
    %v693 = vadd.f32 %v685, %v689
    %v694 = vadd.f32 %v686, %v690
    %v695 = vadd.f32 %v687, %v691
    %v696 = vadd.f32 %v688, %v692
    %v697 = vrot.slane %v693, 4
    %v698 = vrot.slane %v694, 4
    %v699 = vrot.slane %v695, 4
    %v700 = vrot.slane %v696, 4
    %v701 = vadd.f32 %v693, %v697
    %v702 = vadd.f32 %v694, %v698
    %v703 = vadd.f32 %v695, %v699
    %v704 = vadd.f32 %v696, %v700
    %v705 = vld [vmem:[%s3] sm:$0xff]
    %707 = vset.pattern.permute.xlu0 0
    %708 = vperm.xlu0 %707, %v705
    %v709 = vpop.permute.xlu0 %708
    %v711 = vmul.f32 %v709, %v701
    %v712 = vmul.f32 %v709, %v702
    %v713 = vmul.f32 %v709, %v703
    %v714 = vmul.f32 %v709, %v704
    %s715 = scalar_lea.vmem %s3, 8
    %v716 = vld [vmem:[%s715] sm:$0xff]
    %717 = vrot.lane.b32.xlu0 %v701, 127
    %v718 = vpop.permute.xlu0 %717
    %719 = vrot.lane.b32.xlu0 %v702, 127
    %v720 = vpop.permute.xlu0 %719
    %721 = vrot.lane.b32.xlu0 %v703, 127
    %v722 = vpop.permute.xlu0 %721
    %723 = vrot.lane.b32.xlu0 %v704, 127
    %v724 = vpop.permute.xlu0 %723
    %v725 = vsel %vm207, %v722, %v724
    %v726 = vsel %vm207, %v720, %v722
    %v727 = vsel %vm207, %v718, %v720
    %v728 = vsel %vm207, %v724, %v718
    %730 = vset.pattern.permute.xlu0 0
    %731 = vperm.xlu0 %730, %v716
    %v732 = vpop.permute.xlu0 %731
    %v734 = vmul.f32 %v732, %v727
    %v735 = vmul.f32 %v732, %v726
    %v736 = vmul.f32 %v732, %v725
    %v737 = vmul.f32 %v732, %v728
    %v738 = vadd.f32 %v711, %v734
    %v739 = vadd.f32 %v712, %v735
    %v740 = vadd.f32 %v713, %v736
    %v741 = vadd.f32 %v714, %v737
    %s742 = scalar_lea.vmem %s3, 16
    %v743 = vld [vmem:[%s742] sm:$0xff]
    %744 = vrot.lane.b32.xlu0 %v701, 126
    %v745 = vpop.permute.xlu0 %744
    %746 = vrot.lane.b32.xlu0 %v702, 126
    %v747 = vpop.permute.xlu0 %746
    %748 = vrot.lane.b32.xlu0 %v703, 126
    %v749 = vpop.permute.xlu0 %748
    %750 = vrot.lane.b32.xlu0 %v704, 126
    %v751 = vpop.permute.xlu0 %750
    %v752 = vsel %vm268, %v749, %v751
    %v753 = vsel %vm268, %v747, %v749
    %v754 = vsel %vm268, %v745, %v747
    %v755 = vsel %vm268, %v751, %v745
    %757 = vset.pattern.permute.xlu0 0
    %758 = vperm.xlu0 %757, %v743
    %v759 = vpop.permute.xlu0 %758
    %v761 = vmul.f32 %v759, %v754
    %v762 = vmul.f32 %v759, %v753
    %v763 = vmul.f32 %v759, %v752
    %v764 = vmul.f32 %v759, %v755
    %v765 = vadd.f32 %v738, %v761
    %v766 = vadd.f32 %v739, %v762
    %v767 = vadd.f32 %v740, %v763
    %v768 = vadd.f32 %v741, %v764
    %s769 = scalar_lea.vmem %s3, 24
    %v770 = vld [vmem:[%s769] sm:$0xff]
    %771 = vrot.lane.b32.xlu0 %v701, 125
    %v772 = vpop.permute.xlu0 %771
    %773 = vrot.lane.b32.xlu0 %v702, 125
    %v774 = vpop.permute.xlu0 %773
    %775 = vrot.lane.b32.xlu0 %v703, 125
    %v776 = vpop.permute.xlu0 %775
    %777 = vrot.lane.b32.xlu0 %v704, 125
    %v778 = vpop.permute.xlu0 %777
    %v779 = vsel %vm329, %v776, %v778
    %v780 = vsel %vm329, %v774, %v776
    %v781 = vsel %vm329, %v772, %v774
    %v782 = vsel %vm329, %v778, %v772
    %784 = vset.pattern.permute.xlu0 0
    %785 = vperm.xlu0 %784, %v770
    %v786 = vpop.permute.xlu0 %785
    %v788 = vmul.f32 %v786, %v781
    %v789 = vmul.f32 %v786, %v780
    %v790 = vmul.f32 %v786, %v779
    %v791 = vmul.f32 %v786, %v782
    %v792 = vadd.f32 %v765, %v788
    %v793 = vadd.f32 %v766, %v789
    %v794 = vadd.f32 %v767, %v790
    %v795 = vadd.f32 %v768, %v791
    %s796 = scalar_lea.vmem %s3, 32
    %v797 = vld [vmem:[%s796] sm:$0xff]
    %798 = vrot.lane.b32.xlu0 %v701, 124
    %v799 = vpop.permute.xlu0 %798
    %800 = vrot.lane.b32.xlu0 %v702, 124
    %v801 = vpop.permute.xlu0 %800
    %802 = vrot.lane.b32.xlu0 %v703, 124
    %v803 = vpop.permute.xlu0 %802
    %804 = vrot.lane.b32.xlu0 %v704, 124
    %v805 = vpop.permute.xlu0 %804
    %v806 = vsel %vm390, %v803, %v805
    %v807 = vsel %vm390, %v801, %v803
    %v808 = vsel %vm390, %v799, %v801
    %v809 = vsel %vm390, %v805, %v799
    %811 = vset.pattern.permute.xlu0 0
    %812 = vperm.xlu0 %811, %v797
    %v813 = vpop.permute.xlu0 %812
    %v815 = vmul.f32 %v813, %v808
    %v816 = vmul.f32 %v813, %v807
    %v817 = vmul.f32 %v813, %v806
    %v818 = vmul.f32 %v813, %v809
    %v819 = vadd.f32 %v792, %v815
    %v820 = vadd.f32 %v793, %v816
    %v821 = vadd.f32 %v794, %v817
    %v822 = vadd.f32 %v795, %v818
    %824 = vset.pattern.permute.xlu0 0
    %825 = vperm.xlu0 %824, %v158
    %v826 = vpop.permute.xlu0 %825
    %v828 = vmul.f32 %v819, %v826
    %v829 = vmul.f32 %v820, %v826
    %v830 = vmul.f32 %v821, %v826
    %v831 = vmul.f32 %v822, %v826
    %v832 = vand.u32 2147483647, %v828
    %vm833 = vcmp.le.f32.partialorder %v832, 0.7853982
    %vm834 = vcmp.lt.s32.totalorder %v828, 0
    %v835 = vand.u32 %v828, 2139095040
    %v836 = vshrl.u32 %v835, 23
    %v837 = vsub.s32 %v836, 127
    %v838 = vand.u32 2147483647, %v828
    %v839 = vand.u32 %v838, 8388607
    %v840 = vor.u32 %v839, 8388608
    %v841 = vsub.s32 0, %v840
    %v842 = vadd.s32 %v837, 1
    %vm843 = vcmp.gt.s32.totalorder %v842, 0
    %v844 = vsel %vm843, %v842, 0
    %v845 = vshrl.u32 %v844, 5
    %v846 = vand.u32 %v844, 31
    %v847 = vsub.s32 32, %v846
    %v848 = vshrl.u32 683565275, %v847
    %v849 = vshll.u32 683565275, %v846
    %v850 = vshrl.u32 2475754826, %v847
    %v851 = vor.u32 %v849, %v850
    %v852 = vshll.u32 2475754826, %v846
    %v853 = vshrl.u32 2131351028, %v847
    %v854 = vor.u32 %v852, %v853
    %v855 = vshll.u32 2131351028, %v846
    %v856 = vshrl.u32 2102212464, %v847
    %v857 = vor.u32 %v855, %v856
    %v858 = vshll.u32 2102212464, %v846
    %v859 = vshrl.u32 920167782, %v847
    %v860 = vor.u32 %v858, %v859
    %v861 = vshll.u32 920167782, %v846
    %v862 = vshrl.u32 1326507024, %v847
    %v863 = vor.u32 %v861, %v862
    %vm864 = vcmp.lt.s32.totalorder %v845, 1
    %vm865 = vcmp.lt.s32.totalorder %v845, 2
    %vm866 = vcmp.lt.s32.totalorder %v845, 3
    %vm867 = vcmp.lt.s32.totalorder %v845, 4
    %v868 = vsel %vm864, %v848, %v851
    %v869 = vsel %vm867, %v857, 2102212464
    %v870 = vsel %vm866, %v854, %v869
    %v871 = vsel %vm865, %v868, %v870
    %v872 = vsel %vm864, %v851, %v854
    %v873 = vsel %vm867, %v860, 920167782
    %v874 = vsel %vm866, %v857, %v873
    %v875 = vsel %vm865, %v872, %v874
    %v876 = vsel %vm864, %v854, %v857
    %v877 = vsel %vm867, %v863, 1326507024
    %v878 = vsel %vm866, %v860, %v877
    %v879 = vsel %vm865, %v876, %v878
    %v880 = vshll.u32 %v840, 8
    %v881 = vmul.u32.u64.compose %v880, %v879
    %v882 = vextract.low.u32 %v881
    %v883 = vextract.high.u32 %v881
    %v884 = vmul.u32.u64.compose %v880, %v875
    %v885 = vextract.low.u32 %v884
    %v886 = vextract.high.u32 %v884
    %v887 = vmul.u32 %v880, %v871
    %v888 = vadd.s32 %v883, %v885
    %vm889 = vc.u32 %v883, %v885
    %v890 = vadd.s32 %v886, 1
    %v891 = vsel %vm889, %v890, %v886
    %v892 = vadd.s32 %v887, %v891
    %v893 = vadd.s32 %v892, 536870912
    %v894 = vshrl.u32 %v893, 30
    %v895 = vshll.u32 %v894, 30
    %v896 = vsub.s32 %v892, %v895
    %vm897 = vcmp.lt.s32.totalorder %v896, 0
    %v898 = vsub.s32 0, %v896
    %v899 = vsel %vm897, %v898, %v896
    %v900 = vclz %v899
    %v901 = vsub.s32 %v900, 2
    %vm902 = vcmp.gt.s32.totalorder 0, %v901
    %v903 = vsel %vm902, 0, %v901
    %v904 = vsub.s32 32, %v903
    %v905 = vshll.u32 %v896, %v903
    %v906 = vshrl.u32 %v888, %v904
    %v907 = vor.u32 %v905, %v906
    %v908 = vsub.s32 4294967266, %v903
    %v909 = vadd.s32 %v908, 127
    %v910 = vshll.u32 %v909, 23
    %v911 = vor.u32 4788187, %v910
    %v912 = vand.u32 2147483647, %v911
    %v914 = vcvt.s32.f32 %v907
    %v915 = vmul.f32 %v914, %v912
    %v916 = vxor.u32 %v915, 2147483648
    %v917 = vsel %vm834, %v916, %v915
    %v918 = vsub.s32 4, %v894
    %v919 = vsel %vm834, %v918, %v894
    %v920 = vsel %vm833, %v828, %v917
    %v921 = vsel %vm833, 0, %v919
    %v922 = vcosq.f32.pop %v920
    %v923 = vsinq.f32.pop %v920
    %vm924 = vweird.f32 %v828
    %v925 = vand.u32 %v921, 3
    %vm926 = vcmp.lt.s32.totalorder %v925, 2
    %vm927 = vcmp.eq.s32.totalorder %v925, 0
    %v928 = vxor.u32 %v923, 2147483648
    %v929 = vsel %vm927, %v922, %v928
    %vm930 = vcmp.eq.s32.totalorder %v925, 2
    %v931 = vxor.u32 %v922, 2147483648
    %v932 = vsel %vm930, %v931, %v923
    %v933 = vsel %vm926, %v929, %v932
    %v934 = vsel %vm924, nan, %v933
    %v935 = vand.u32 2147483647, %v829
    %vm936 = vcmp.le.f32.partialorder %v935, 0.7853982
    %vm937 = vcmp.lt.s32.totalorder %v829, 0
    %v938 = vand.u32 %v829, 2139095040
    %v939 = vshrl.u32 %v938, 23
    %v940 = vsub.s32 %v939, 127
    %v941 = vand.u32 2147483647, %v829
    %v942 = vand.u32 %v941, 8388607
    %v943 = vor.u32 %v942, 8388608
    %v944 = vsub.s32 0, %v943
    %v945 = vadd.s32 %v940, 1
    %vm946 = vcmp.gt.s32.totalorder %v945, 0
    %v947 = vsel %vm946, %v945, 0
    %v948 = vshrl.u32 %v947, 5
    %v949 = vand.u32 %v947, 31
    %v950 = vsub.s32 32, %v949
    %v951 = vshrl.u32 683565275, %v950
    %v952 = vshll.u32 683565275, %v949
    %v953 = vshrl.u32 2475754826, %v950
    %v954 = vor.u32 %v952, %v953
    %v955 = vshll.u32 2475754826, %v949
    %v956 = vshrl.u32 2131351028, %v950
    %v957 = vor.u32 %v955, %v956
    %v958 = vshll.u32 2131351028, %v949
    %v959 = vshrl.u32 2102212464, %v950
    %v960 = vor.u32 %v958, %v959
    %v961 = vshll.u32 2102212464, %v949
    %v962 = vshrl.u32 920167782, %v950
    %v963 = vor.u32 %v961, %v962
    %v964 = vshll.u32 920167782, %v949
    %v965 = vshrl.u32 1326507024, %v950
    %v966 = vor.u32 %v964, %v965
    %vm967 = vcmp.lt.s32.totalorder %v948, 1
    %vm968 = vcmp.lt.s32.totalorder %v948, 2
    %vm969 = vcmp.lt.s32.totalorder %v948, 3
    %vm970 = vcmp.lt.s32.totalorder %v948, 4
    %v971 = vsel %vm967, %v951, %v954
    %v972 = vsel %vm970, %v960, 2102212464
    %v973 = vsel %vm969, %v957, %v972
    %v974 = vsel %vm968, %v971, %v973
    %v975 = vsel %vm967, %v954, %v957
    %v976 = vsel %vm970, %v963, 920167782
    %v977 = vsel %vm969, %v960, %v976
    %v978 = vsel %vm968, %v975, %v977
    %v979 = vsel %vm967, %v957, %v960
    %v980 = vsel %vm970, %v966, 1326507024
    %v981 = vsel %vm969, %v963, %v980
    %v982 = vsel %vm968, %v979, %v981
    %v983 = vshll.u32 %v943, 8
    %v984 = vmul.u32.u64.compose %v983, %v982
    %v985 = vextract.low.u32 %v984
    %v986 = vextract.high.u32 %v984
    %v987 = vmul.u32.u64.compose %v983, %v978
    %v988 = vextract.low.u32 %v987
    %v989 = vextract.high.u32 %v987
    %v990 = vmul.u32 %v983, %v974
    %v991 = vadd.s32 %v986, %v988
    %vm992 = vc.u32 %v986, %v988
    %v993 = vadd.s32 %v989, 1
    %v994 = vsel %vm992, %v993, %v989
    %v995 = vadd.s32 %v990, %v994
    %v996 = vadd.s32 %v995, 536870912
    %v997 = vshrl.u32 %v996, 30
    %v998 = vshll.u32 %v997, 30
    %v999 = vsub.s32 %v995, %v998
    %vm1000 = vcmp.lt.s32.totalorder %v999, 0
    %v1001 = vsub.s32 0, %v999
    %v1002 = vsel %vm1000, %v1001, %v999
    %v1003 = vclz %v1002
    %v1004 = vsub.s32 %v1003, 2
    %vm1005 = vcmp.gt.s32.totalorder 0, %v1004
    %v1006 = vsel %vm1005, 0, %v1004
    %v1007 = vsub.s32 32, %v1006
    %v1008 = vshll.u32 %v999, %v1006
    %v1009 = vshrl.u32 %v991, %v1007
    %v1010 = vor.u32 %v1008, %v1009
    %v1011 = vsub.s32 4294967266, %v1006
    %v1012 = vadd.s32 %v1011, 127
    %v1013 = vshll.u32 %v1012, 23
    %v1014 = vor.u32 4788187, %v1013
    %v1015 = vand.u32 2147483647, %v1014
    %v1017 = vcvt.s32.f32 %v1010
    %v1018 = vmul.f32 %v1017, %v1015
    %v1019 = vxor.u32 %v1018, 2147483648
    %v1020 = vsel %vm937, %v1019, %v1018
    %v1021 = vsub.s32 4, %v997
    %v1022 = vsel %vm937, %v1021, %v997
    %v1023 = vsel %vm936, %v829, %v1020
    %v1024 = vsel %vm936, 0, %v1022
    %v1025 = vcosq.f32.pop %v1023
    %v1026 = vsinq.f32.pop %v1023
    %vm1027 = vweird.f32 %v829
    %v1028 = vand.u32 %v1024, 3
    %vm1029 = vcmp.lt.s32.totalorder %v1028, 2
    %vm1030 = vcmp.eq.s32.totalorder %v1028, 0
    %v1031 = vxor.u32 %v1026, 2147483648
    %v1032 = vsel %vm1030, %v1025, %v1031
    %vm1033 = vcmp.eq.s32.totalorder %v1028, 2
    %v1034 = vxor.u32 %v1025, 2147483648
    %v1035 = vsel %vm1033, %v1034, %v1026
    %v1036 = vsel %vm1029, %v1032, %v1035
    %v1037 = vsel %vm1027, nan, %v1036
    %v1038 = vand.u32 2147483647, %v830
    %vm1039 = vcmp.le.f32.partialorder %v1038, 0.7853982
    %vm1040 = vcmp.lt.s32.totalorder %v830, 0
    %v1041 = vand.u32 %v830, 2139095040
    %v1042 = vshrl.u32 %v1041, 23
    %v1043 = vsub.s32 %v1042, 127
    %v1044 = vand.u32 2147483647, %v830
    %v1045 = vand.u32 %v1044, 8388607
    %v1046 = vor.u32 %v1045, 8388608
    %v1047 = vsub.s32 0, %v1046
    %v1048 = vadd.s32 %v1043, 1
    %vm1049 = vcmp.gt.s32.totalorder %v1048, 0
    %v1050 = vsel %vm1049, %v1048, 0
    %v1051 = vshrl.u32 %v1050, 5
    %v1052 = vand.u32 %v1050, 31
    %v1053 = vsub.s32 32, %v1052
    %v1054 = vshrl.u32 683565275, %v1053
    %v1055 = vshll.u32 683565275, %v1052
    %v1056 = vshrl.u32 2475754826, %v1053
    %v1057 = vor.u32 %v1055, %v1056
    %v1058 = vshll.u32 2475754826, %v1052
    %v1059 = vshrl.u32 2131351028, %v1053
    %v1060 = vor.u32 %v1058, %v1059
    %v1061 = vshll.u32 2131351028, %v1052
    %v1062 = vshrl.u32 2102212464, %v1053
    %v1063 = vor.u32 %v1061, %v1062
    %v1064 = vshll.u32 2102212464, %v1052
    %v1065 = vshrl.u32 920167782, %v1053
    %v1066 = vor.u32 %v1064, %v1065
    %v1067 = vshll.u32 920167782, %v1052
    %v1068 = vshrl.u32 1326507024, %v1053
    %v1069 = vor.u32 %v1067, %v1068
    %vm1070 = vcmp.lt.s32.totalorder %v1051, 1
    %vm1071 = vcmp.lt.s32.totalorder %v1051, 2
    %vm1072 = vcmp.lt.s32.totalorder %v1051, 3
    %vm1073 = vcmp.lt.s32.totalorder %v1051, 4
    %v1074 = vsel %vm1070, %v1054, %v1057
    %v1075 = vsel %vm1073, %v1063, 2102212464
    %v1076 = vsel %vm1072, %v1060, %v1075
    %v1077 = vsel %vm1071, %v1074, %v1076
    %v1078 = vsel %vm1070, %v1057, %v1060
    %v1079 = vsel %vm1073, %v1066, 920167782
    %v1080 = vsel %vm1072, %v1063, %v1079
    %v1081 = vsel %vm1071, %v1078, %v1080
    %v1082 = vsel %vm1070, %v1060, %v1063
    %v1083 = vsel %vm1073, %v1069, 1326507024
    %v1084 = vsel %vm1072, %v1066, %v1083
    %v1085 = vsel %vm1071, %v1082, %v1084
    %v1086 = vshll.u32 %v1046, 8
    %v1087 = vmul.u32.u64.compose %v1086, %v1085
    %v1088 = vextract.low.u32 %v1087
    %v1089 = vextract.high.u32 %v1087
    %v1090 = vmul.u32.u64.compose %v1086, %v1081
    %v1091 = vextract.low.u32 %v1090
    %v1092 = vextract.high.u32 %v1090
    %v1093 = vmul.u32 %v1086, %v1077
    %v1094 = vadd.s32 %v1089, %v1091
    %vm1095 = vc.u32 %v1089, %v1091
    %v1096 = vadd.s32 %v1092, 1
    %v1097 = vsel %vm1095, %v1096, %v1092
    %v1098 = vadd.s32 %v1093, %v1097
    %v1099 = vadd.s32 %v1098, 536870912
    %v1100 = vshrl.u32 %v1099, 30
    %v1101 = vshll.u32 %v1100, 30
    %v1102 = vsub.s32 %v1098, %v1101
    %vm1103 = vcmp.lt.s32.totalorder %v1102, 0
    %v1104 = vsub.s32 0, %v1102
    %v1105 = vsel %vm1103, %v1104, %v1102
    %v1106 = vclz %v1105
    %v1107 = vsub.s32 %v1106, 2
    %vm1108 = vcmp.gt.s32.totalorder 0, %v1107
    %v1109 = vsel %vm1108, 0, %v1107
    %v1110 = vsub.s32 32, %v1109
    %v1111 = vshll.u32 %v1102, %v1109
    %v1112 = vshrl.u32 %v1094, %v1110
    %v1113 = vor.u32 %v1111, %v1112
    %v1114 = vsub.s32 4294967266, %v1109
    %v1115 = vadd.s32 %v1114, 127
    %v1116 = vshll.u32 %v1115, 23
    %v1117 = vor.u32 4788187, %v1116
    %v1118 = vand.u32 2147483647, %v1117
    %v1120 = vcvt.s32.f32 %v1113
    %v1121 = vmul.f32 %v1120, %v1118
    %v1122 = vxor.u32 %v1121, 2147483648
    %v1123 = vsel %vm1040, %v1122, %v1121
    %v1124 = vsub.s32 4, %v1100
    %v1125 = vsel %vm1040, %v1124, %v1100
    %v1126 = vsel %vm1039, %v830, %v1123
    %v1127 = vsel %vm1039, 0, %v1125
    %v1128 = vcosq.f32.pop %v1126
    %v1129 = vsinq.f32.pop %v1126
    %vm1130 = vweird.f32 %v830
    %v1131 = vand.u32 %v1127, 3
    %vm1132 = vcmp.lt.s32.totalorder %v1131, 2
    %vm1133 = vcmp.eq.s32.totalorder %v1131, 0
    %v1134 = vxor.u32 %v1129, 2147483648
    %v1135 = vsel %vm1133, %v1128, %v1134
    %vm1136 = vcmp.eq.s32.totalorder %v1131, 2
    %v1137 = vxor.u32 %v1128, 2147483648
    %v1138 = vsel %vm1136, %v1137, %v1129
    %v1139 = vsel %vm1132, %v1135, %v1138
    %v1140 = vsel %vm1130, nan, %v1139
    %v1141 = vand.u32 2147483647, %v831
    %vm1142 = vcmp.le.f32.partialorder %v1141, 0.7853982
    %vm1143 = vcmp.lt.s32.totalorder %v831, 0
    %v1144 = vand.u32 %v831, 2139095040
    %v1145 = vshrl.u32 %v1144, 23
    %v1146 = vsub.s32 %v1145, 127
    %v1147 = vand.u32 2147483647, %v831
    %v1148 = vand.u32 %v1147, 8388607
    %v1149 = vor.u32 %v1148, 8388608
    %v1150 = vsub.s32 0, %v1149
    %v1151 = vadd.s32 %v1146, 1
    %vm1152 = vcmp.gt.s32.totalorder %v1151, 0
    %v1153 = vsel %vm1152, %v1151, 0
    %v1154 = vshrl.u32 %v1153, 5
    %v1155 = vand.u32 %v1153, 31
    %v1156 = vsub.s32 32, %v1155
    %v1157 = vshrl.u32 683565275, %v1156
    %v1158 = vshll.u32 683565275, %v1155
    %v1159 = vshrl.u32 2475754826, %v1156
    %v1160 = vor.u32 %v1158, %v1159
    %v1161 = vshll.u32 2475754826, %v1155
    %v1162 = vshrl.u32 2131351028, %v1156
    %v1163 = vor.u32 %v1161, %v1162
    %v1164 = vshll.u32 2131351028, %v1155
    %v1165 = vshrl.u32 2102212464, %v1156
    %v1166 = vor.u32 %v1164, %v1165
    %v1167 = vshll.u32 2102212464, %v1155
    %v1168 = vshrl.u32 920167782, %v1156
    %v1169 = vor.u32 %v1167, %v1168
    %v1170 = vshll.u32 920167782, %v1155
    %v1171 = vshrl.u32 1326507024, %v1156
    %v1172 = vor.u32 %v1170, %v1171
    %vm1173 = vcmp.lt.s32.totalorder %v1154, 1
    %vm1174 = vcmp.lt.s32.totalorder %v1154, 2
    %vm1175 = vcmp.lt.s32.totalorder %v1154, 3
    %vm1176 = vcmp.lt.s32.totalorder %v1154, 4
    %v1177 = vsel %vm1173, %v1157, %v1160
    %v1178 = vsel %vm1176, %v1166, 2102212464
    %v1179 = vsel %vm1175, %v1163, %v1178
    %v1180 = vsel %vm1174, %v1177, %v1179
    %v1181 = vsel %vm1173, %v1160, %v1163
    %v1182 = vsel %vm1176, %v1169, 920167782
    %v1183 = vsel %vm1175, %v1166, %v1182
    %v1184 = vsel %vm1174, %v1181, %v1183
    %v1185 = vsel %vm1173, %v1163, %v1166
    %v1186 = vsel %vm1176, %v1172, 1326507024
    %v1187 = vsel %vm1175, %v1169, %v1186
    %v1188 = vsel %vm1174, %v1185, %v1187
    %v1189 = vshll.u32 %v1149, 8
    %v1190 = vmul.u32.u64.compose %v1189, %v1188
    %v1191 = vextract.low.u32 %v1190
    %v1192 = vextract.high.u32 %v1190
    %v1193 = vmul.u32.u64.compose %v1189, %v1184
    %v1194 = vextract.low.u32 %v1193
    %v1195 = vextract.high.u32 %v1193
    %v1196 = vmul.u32 %v1189, %v1180
    %v1197 = vadd.s32 %v1192, %v1194
    %vm1198 = vc.u32 %v1192, %v1194
    %v1199 = vadd.s32 %v1195, 1
    %v1200 = vsel %vm1198, %v1199, %v1195
    %v1201 = vadd.s32 %v1196, %v1200
    %v1202 = vadd.s32 %v1201, 536870912
    %v1203 = vshrl.u32 %v1202, 30
    %v1204 = vshll.u32 %v1203, 30
    %v1205 = vsub.s32 %v1201, %v1204
    %vm1206 = vcmp.lt.s32.totalorder %v1205, 0
    %v1207 = vsub.s32 0, %v1205
    %v1208 = vsel %vm1206, %v1207, %v1205
    %v1209 = vclz %v1208
    %v1210 = vsub.s32 %v1209, 2
    %vm1211 = vcmp.gt.s32.totalorder 0, %v1210
    %v1212 = vsel %vm1211, 0, %v1210
    %v1213 = vsub.s32 32, %v1212
    %v1214 = vshll.u32 %v1205, %v1212
    %v1215 = vshrl.u32 %v1197, %v1213
    %v1216 = vor.u32 %v1214, %v1215
    %v1217 = vsub.s32 4294967266, %v1212
    %v1218 = vadd.s32 %v1217, 127
    %v1219 = vshll.u32 %v1218, 23
    %v1220 = vor.u32 4788187, %v1219
    %v1221 = vand.u32 2147483647, %v1220
    %v1223 = vcvt.s32.f32 %v1216
    %v1224 = vmul.f32 %v1223, %v1221
    %v1225 = vxor.u32 %v1224, 2147483648
    %v1226 = vsel %vm1143, %v1225, %v1224
    %v1227 = vsub.s32 4, %v1203
    %v1228 = vsel %vm1143, %v1227, %v1203
    %v1229 = vsel %vm1142, %v831, %v1226
    %v1230 = vsel %vm1142, 0, %v1228
    %v1231 = vcosq.f32.pop %v1229
    %v1232 = vsinq.f32.pop %v1229
    %vm1233 = vweird.f32 %v831
    %v1234 = vand.u32 %v1230, 3
    %vm1235 = vcmp.lt.s32.totalorder %v1234, 2
    %vm1236 = vcmp.eq.s32.totalorder %v1234, 0
    %v1237 = vxor.u32 %v1232, 2147483648
    %v1238 = vsel %vm1236, %v1231, %v1237
    %vm1239 = vcmp.eq.s32.totalorder %v1234, 2
    %v1240 = vxor.u32 %v1231, 2147483648
    %v1241 = vsel %vm1239, %v1240, %v1232
    %v1242 = vsel %vm1235, %v1238, %v1241
    %v1243 = vsel %vm1233, nan, %v1242
    %v1244 = vand.u32 2147483647, %v828
    %vm1245 = vcmp.le.f32.partialorder %v1244, 0.7853982
    %vm1246 = vcmp.lt.s32.totalorder %v828, 0
    %v1247 = vand.u32 %v828, 2139095040
    %v1248 = vshrl.u32 %v1247, 23
    %v1249 = vsub.s32 %v1248, 127
    %v1250 = vand.u32 2147483647, %v828
    %v1251 = vand.u32 %v1250, 8388607
    %v1252 = vor.u32 %v1251, 8388608
    %v1253 = vsub.s32 0, %v1252
    %v1254 = vadd.s32 %v1249, 1
    %vm1255 = vcmp.gt.s32.totalorder %v1254, 0
    %v1256 = vsel %vm1255, %v1254, 0
    %v1257 = vshrl.u32 %v1256, 5
    %v1258 = vand.u32 %v1256, 31
    %v1259 = vsub.s32 32, %v1258
    %v1260 = vshrl.u32 683565275, %v1259
    %v1261 = vshll.u32 683565275, %v1258
    %v1262 = vshrl.u32 2475754826, %v1259
    %v1263 = vor.u32 %v1261, %v1262
    %v1264 = vshll.u32 2475754826, %v1258
    %v1265 = vshrl.u32 2131351028, %v1259
    %v1266 = vor.u32 %v1264, %v1265
    %v1267 = vshll.u32 2131351028, %v1258
    %v1268 = vshrl.u32 2102212464, %v1259
    %v1269 = vor.u32 %v1267, %v1268
    %v1270 = vshll.u32 2102212464, %v1258
    %v1271 = vshrl.u32 920167782, %v1259
    %v1272 = vor.u32 %v1270, %v1271
    %v1273 = vshll.u32 920167782, %v1258
    %v1274 = vshrl.u32 1326507024, %v1259
    %v1275 = vor.u32 %v1273, %v1274
    %vm1276 = vcmp.lt.s32.totalorder %v1257, 1
    %vm1277 = vcmp.lt.s32.totalorder %v1257, 2
    %vm1278 = vcmp.lt.s32.totalorder %v1257, 3
    %vm1279 = vcmp.lt.s32.totalorder %v1257, 4
    %v1280 = vsel %vm1276, %v1260, %v1263
    %v1281 = vsel %vm1279, %v1269, 2102212464
    %v1282 = vsel %vm1278, %v1266, %v1281
    %v1283 = vsel %vm1277, %v1280, %v1282
    %v1284 = vsel %vm1276, %v1263, %v1266
    %v1285 = vsel %vm1279, %v1272, 920167782
    %v1286 = vsel %vm1278, %v1269, %v1285
    %v1287 = vsel %vm1277, %v1284, %v1286
    %v1288 = vsel %vm1276, %v1266, %v1269
    %v1289 = vsel %vm1279, %v1275, 1326507024
    %v1290 = vsel %vm1278, %v1272, %v1289
    %v1291 = vsel %vm1277, %v1288, %v1290
    %v1292 = vshll.u32 %v1252, 8
    %v1293 = vmul.u32.u64.compose %v1292, %v1291
    %v1294 = vextract.low.u32 %v1293
    %v1295 = vextract.high.u32 %v1293
    %v1296 = vmul.u32.u64.compose %v1292, %v1287
    %v1297 = vextract.low.u32 %v1296
    %v1298 = vextract.high.u32 %v1296
    %v1299 = vmul.u32 %v1292, %v1283
    %v1300 = vadd.s32 %v1295, %v1297
    %vm1301 = vc.u32 %v1295, %v1297
    %v1302 = vadd.s32 %v1298, 1
    %v1303 = vsel %vm1301, %v1302, %v1298
    %v1304 = vadd.s32 %v1299, %v1303
    %v1305 = vadd.s32 %v1304, 536870912
    %v1306 = vshrl.u32 %v1305, 30
    %v1307 = vshll.u32 %v1306, 30
    %v1308 = vsub.s32 %v1304, %v1307
    %vm1309 = vcmp.lt.s32.totalorder %v1308, 0
    %v1310 = vsub.s32 0, %v1308
    %v1311 = vsel %vm1309, %v1310, %v1308
    %v1312 = vclz %v1311
    %v1313 = vsub.s32 %v1312, 2
    %vm1314 = vcmp.gt.s32.totalorder 0, %v1313
    %v1315 = vsel %vm1314, 0, %v1313
    %v1316 = vsub.s32 32, %v1315
    %v1317 = vshll.u32 %v1308, %v1315
    %v1318 = vshrl.u32 %v1300, %v1316
    %v1319 = vor.u32 %v1317, %v1318
    %v1320 = vsub.s32 4294967266, %v1315
    %v1321 = vadd.s32 %v1320, 127
    %v1322 = vshll.u32 %v1321, 23
    %v1323 = vor.u32 4788187, %v1322
    %v1324 = vand.u32 2147483647, %v1323
    %v1326 = vcvt.s32.f32 %v1319
    %v1327 = vmul.f32 %v1326, %v1324
    %v1328 = vxor.u32 %v1327, 2147483648
    %v1329 = vsel %vm1246, %v1328, %v1327
    %v1330 = vsub.s32 4, %v1306
    %v1331 = vsel %vm1246, %v1330, %v1306
    %v1332 = vsel %vm1245, %v828, %v1329
    %v1333 = vsel %vm1245, 0, %v1331
    %v1334 = vcosq.f32.pop %v1332
    %v1335 = vsinq.f32.pop %v1332
    %vm1336 = vweird.f32 %v828
    %v1337 = vadd.s32 %v1333, 3
    %v1338 = vand.u32 %v1337, 3
    %vm1339 = vcmp.lt.s32.totalorder %v1338, 2
    %vm1340 = vcmp.eq.s32.totalorder %v1338, 0
    %v1341 = vxor.u32 %v1335, 2147483648
    %v1342 = vsel %vm1340, %v1334, %v1341
    %vm1343 = vcmp.eq.s32.totalorder %v1338, 2
    %v1344 = vxor.u32 %v1334, 2147483648
    %v1345 = vsel %vm1343, %v1344, %v1335
    %v1346 = vsel %vm1339, %v1342, %v1345
    %v1347 = vsel %vm1336, nan, %v1346
    %v1348 = vand.u32 2147483647, %v829
    %vm1349 = vcmp.le.f32.partialorder %v1348, 0.7853982
    %vm1350 = vcmp.lt.s32.totalorder %v829, 0
    %v1351 = vand.u32 %v829, 2139095040
    %v1352 = vshrl.u32 %v1351, 23
    %v1353 = vsub.s32 %v1352, 127
    %v1354 = vand.u32 2147483647, %v829
    %v1355 = vand.u32 %v1354, 8388607
    %v1356 = vor.u32 %v1355, 8388608
    %v1357 = vsub.s32 0, %v1356
    %v1358 = vadd.s32 %v1353, 1
    %vm1359 = vcmp.gt.s32.totalorder %v1358, 0
    %v1360 = vsel %vm1359, %v1358, 0
    %v1361 = vshrl.u32 %v1360, 5
    %v1362 = vand.u32 %v1360, 31
    %v1363 = vsub.s32 32, %v1362
    %v1364 = vshrl.u32 683565275, %v1363
    %v1365 = vshll.u32 683565275, %v1362
    %v1366 = vshrl.u32 2475754826, %v1363
    %v1367 = vor.u32 %v1365, %v1366
    %v1368 = vshll.u32 2475754826, %v1362
    %v1369 = vshrl.u32 2131351028, %v1363
    %v1370 = vor.u32 %v1368, %v1369
    %v1371 = vshll.u32 2131351028, %v1362
    %v1372 = vshrl.u32 2102212464, %v1363
    %v1373 = vor.u32 %v1371, %v1372
    %v1374 = vshll.u32 2102212464, %v1362
    %v1375 = vshrl.u32 920167782, %v1363
    %v1376 = vor.u32 %v1374, %v1375
    %v1377 = vshll.u32 920167782, %v1362
    %v1378 = vshrl.u32 1326507024, %v1363
    %v1379 = vor.u32 %v1377, %v1378
    %vm1380 = vcmp.lt.s32.totalorder %v1361, 1
    %vm1381 = vcmp.lt.s32.totalorder %v1361, 2
    %vm1382 = vcmp.lt.s32.totalorder %v1361, 3
    %vm1383 = vcmp.lt.s32.totalorder %v1361, 4
    %v1384 = vsel %vm1380, %v1364, %v1367
    %v1385 = vsel %vm1383, %v1373, 2102212464
    %v1386 = vsel %vm1382, %v1370, %v1385
    %v1387 = vsel %vm1381, %v1384, %v1386
    %v1388 = vsel %vm1380, %v1367, %v1370
    %v1389 = vsel %vm1383, %v1376, 920167782
    %v1390 = vsel %vm1382, %v1373, %v1389
    %v1391 = vsel %vm1381, %v1388, %v1390
    %v1392 = vsel %vm1380, %v1370, %v1373
    %v1393 = vsel %vm1383, %v1379, 1326507024
    %v1394 = vsel %vm1382, %v1376, %v1393
    %v1395 = vsel %vm1381, %v1392, %v1394
    %v1396 = vshll.u32 %v1356, 8
    %v1397 = vmul.u32.u64.compose %v1396, %v1395
    %v1398 = vextract.low.u32 %v1397
    %v1399 = vextract.high.u32 %v1397
    %v1400 = vmul.u32.u64.compose %v1396, %v1391
    %v1401 = vextract.low.u32 %v1400
    %v1402 = vextract.high.u32 %v1400
    %v1403 = vmul.u32 %v1396, %v1387
    %v1404 = vadd.s32 %v1399, %v1401
    %vm1405 = vc.u32 %v1399, %v1401
    %v1406 = vadd.s32 %v1402, 1
    %v1407 = vsel %vm1405, %v1406, %v1402
    %v1408 = vadd.s32 %v1403, %v1407
    %v1409 = vadd.s32 %v1408, 536870912
    %v1410 = vshrl.u32 %v1409, 30
    %v1411 = vshll.u32 %v1410, 30
    %v1412 = vsub.s32 %v1408, %v1411
    %vm1413 = vcmp.lt.s32.totalorder %v1412, 0
    %v1414 = vsub.s32 0, %v1412
    %v1415 = vsel %vm1413, %v1414, %v1412
    %v1416 = vclz %v1415
    %v1417 = vsub.s32 %v1416, 2
    %vm1418 = vcmp.gt.s32.totalorder 0, %v1417
    %v1419 = vsel %vm1418, 0, %v1417
    %v1420 = vsub.s32 32, %v1419
    %v1421 = vshll.u32 %v1412, %v1419
    %v1422 = vshrl.u32 %v1404, %v1420
    %v1423 = vor.u32 %v1421, %v1422
    %v1424 = vsub.s32 4294967266, %v1419
    %v1425 = vadd.s32 %v1424, 127
    %v1426 = vshll.u32 %v1425, 23
    %v1427 = vor.u32 4788187, %v1426
    %v1428 = vand.u32 2147483647, %v1427
    %v1430 = vcvt.s32.f32 %v1423
    %v1431 = vmul.f32 %v1430, %v1428
    %v1432 = vxor.u32 %v1431, 2147483648
    %v1433 = vsel %vm1350, %v1432, %v1431
    %v1434 = vsub.s32 4, %v1410
    %v1435 = vsel %vm1350, %v1434, %v1410
    %v1436 = vsel %vm1349, %v829, %v1433
    %v1437 = vsel %vm1349, 0, %v1435
    %v1438 = vcosq.f32.pop %v1436
    %v1439 = vsinq.f32.pop %v1436
    %vm1440 = vweird.f32 %v829
    %v1441 = vadd.s32 %v1437, 3
    %v1442 = vand.u32 %v1441, 3
    %vm1443 = vcmp.lt.s32.totalorder %v1442, 2
    %vm1444 = vcmp.eq.s32.totalorder %v1442, 0
    %v1445 = vxor.u32 %v1439, 2147483648
    %v1446 = vsel %vm1444, %v1438, %v1445
    %vm1447 = vcmp.eq.s32.totalorder %v1442, 2
    %v1448 = vxor.u32 %v1438, 2147483648
    %v1449 = vsel %vm1447, %v1448, %v1439
    %v1450 = vsel %vm1443, %v1446, %v1449
    %v1451 = vsel %vm1440, nan, %v1450
    %v1452 = vand.u32 2147483647, %v830
    %vm1453 = vcmp.le.f32.partialorder %v1452, 0.7853982
    %vm1454 = vcmp.lt.s32.totalorder %v830, 0
    %v1455 = vand.u32 %v830, 2139095040
    %v1456 = vshrl.u32 %v1455, 23
    %v1457 = vsub.s32 %v1456, 127
    %v1458 = vand.u32 2147483647, %v830
    %v1459 = vand.u32 %v1458, 8388607
    %v1460 = vor.u32 %v1459, 8388608
    %v1461 = vsub.s32 0, %v1460
    %v1462 = vadd.s32 %v1457, 1
    %vm1463 = vcmp.gt.s32.totalorder %v1462, 0
    %v1464 = vsel %vm1463, %v1462, 0
    %v1465 = vshrl.u32 %v1464, 5
    %v1466 = vand.u32 %v1464, 31
    %v1467 = vsub.s32 32, %v1466
    %v1468 = vshrl.u32 683565275, %v1467
    %v1469 = vshll.u32 683565275, %v1466
    %v1470 = vshrl.u32 2475754826, %v1467
    %v1471 = vor.u32 %v1469, %v1470
    %v1472 = vshll.u32 2475754826, %v1466
    %v1473 = vshrl.u32 2131351028, %v1467
    %v1474 = vor.u32 %v1472, %v1473
    %v1475 = vshll.u32 2131351028, %v1466
    %v1476 = vshrl.u32 2102212464, %v1467
    %v1477 = vor.u32 %v1475, %v1476
    %v1478 = vshll.u32 2102212464, %v1466
    %v1479 = vshrl.u32 920167782, %v1467
    %v1480 = vor.u32 %v1478, %v1479
    %v1481 = vshll.u32 920167782, %v1466
    %v1482 = vshrl.u32 1326507024, %v1467
    %v1483 = vor.u32 %v1481, %v1482
    %vm1484 = vcmp.lt.s32.totalorder %v1465, 1
    %vm1485 = vcmp.lt.s32.totalorder %v1465, 2
    %vm1486 = vcmp.lt.s32.totalorder %v1465, 3
    %vm1487 = vcmp.lt.s32.totalorder %v1465, 4
    %v1488 = vsel %vm1484, %v1468, %v1471
    %v1489 = vsel %vm1487, %v1477, 2102212464
    %v1490 = vsel %vm1486, %v1474, %v1489
    %v1491 = vsel %vm1485, %v1488, %v1490
    %v1492 = vsel %vm1484, %v1471, %v1474
    %v1493 = vsel %vm1487, %v1480, 920167782
    %v1494 = vsel %vm1486, %v1477, %v1493
    %v1495 = vsel %vm1485, %v1492, %v1494
    %v1496 = vsel %vm1484, %v1474, %v1477
    %v1497 = vsel %vm1487, %v1483, 1326507024
    %v1498 = vsel %vm1486, %v1480, %v1497
    %v1499 = vsel %vm1485, %v1496, %v1498
    %v1500 = vshll.u32 %v1460, 8
    %v1501 = vmul.u32.u64.compose %v1500, %v1499
    %v1502 = vextract.low.u32 %v1501
    %v1503 = vextract.high.u32 %v1501
    %v1504 = vmul.u32.u64.compose %v1500, %v1495
    %v1505 = vextract.low.u32 %v1504
    %v1506 = vextract.high.u32 %v1504
    %v1507 = vmul.u32 %v1500, %v1491
    %v1508 = vadd.s32 %v1503, %v1505
    %vm1509 = vc.u32 %v1503, %v1505
    %v1510 = vadd.s32 %v1506, 1
    %v1511 = vsel %vm1509, %v1510, %v1506
    %v1512 = vadd.s32 %v1507, %v1511
    %v1513 = vadd.s32 %v1512, 536870912
    %v1514 = vshrl.u32 %v1513, 30
    %v1515 = vshll.u32 %v1514, 30
    %v1516 = vsub.s32 %v1512, %v1515
    %vm1517 = vcmp.lt.s32.totalorder %v1516, 0
    %v1518 = vsub.s32 0, %v1516
    %v1519 = vsel %vm1517, %v1518, %v1516
    %v1520 = vclz %v1519
    %v1521 = vsub.s32 %v1520, 2
    %vm1522 = vcmp.gt.s32.totalorder 0, %v1521
    %v1523 = vsel %vm1522, 0, %v1521
    %v1524 = vsub.s32 32, %v1523
    %v1525 = vshll.u32 %v1516, %v1523
    %v1526 = vshrl.u32 %v1508, %v1524
    %v1527 = vor.u32 %v1525, %v1526
    %v1528 = vsub.s32 4294967266, %v1523
    %v1529 = vadd.s32 %v1528, 127
    %v1530 = vshll.u32 %v1529, 23
    %v1531 = vor.u32 4788187, %v1530
    %v1532 = vand.u32 2147483647, %v1531
    %v1534 = vcvt.s32.f32 %v1527
    %v1535 = vmul.f32 %v1534, %v1532
    %v1536 = vxor.u32 %v1535, 2147483648
    %v1537 = vsel %vm1454, %v1536, %v1535
    %v1538 = vsub.s32 4, %v1514
    %v1539 = vsel %vm1454, %v1538, %v1514
    %v1540 = vsel %vm1453, %v830, %v1537
    %v1541 = vsel %vm1453, 0, %v1539
    %v1542 = vcosq.f32.pop %v1540
    %v1543 = vsinq.f32.pop %v1540
    %vm1544 = vweird.f32 %v830
    %v1545 = vadd.s32 %v1541, 3
    %v1546 = vand.u32 %v1545, 3
    %vm1547 = vcmp.lt.s32.totalorder %v1546, 2
    %vm1548 = vcmp.eq.s32.totalorder %v1546, 0
    %v1549 = vxor.u32 %v1543, 2147483648
    %v1550 = vsel %vm1548, %v1542, %v1549
    %vm1551 = vcmp.eq.s32.totalorder %v1546, 2
    %v1552 = vxor.u32 %v1542, 2147483648
    %v1553 = vsel %vm1551, %v1552, %v1543
    %v1554 = vsel %vm1547, %v1550, %v1553
    %v1555 = vsel %vm1544, nan, %v1554
    %v1556 = vand.u32 2147483647, %v831
    %vm1557 = vcmp.le.f32.partialorder %v1556, 0.7853982
    %vm1558 = vcmp.lt.s32.totalorder %v831, 0
    %v1559 = vand.u32 %v831, 2139095040
    %v1560 = vshrl.u32 %v1559, 23
    %v1561 = vsub.s32 %v1560, 127
    %v1562 = vand.u32 2147483647, %v831
    %v1563 = vand.u32 %v1562, 8388607
    %v1564 = vor.u32 %v1563, 8388608
    %v1565 = vsub.s32 0, %v1564
    %v1566 = vadd.s32 %v1561, 1
    %vm1567 = vcmp.gt.s32.totalorder %v1566, 0
    %v1568 = vsel %vm1567, %v1566, 0
    %v1569 = vshrl.u32 %v1568, 5
    %v1570 = vand.u32 %v1568, 31
    %v1571 = vsub.s32 32, %v1570
    %v1572 = vshrl.u32 683565275, %v1571
    %v1573 = vshll.u32 683565275, %v1570
    %v1574 = vshrl.u32 2475754826, %v1571
    %v1575 = vor.u32 %v1573, %v1574
    %v1576 = vshll.u32 2475754826, %v1570
    %v1577 = vshrl.u32 2131351028, %v1571
    %v1578 = vor.u32 %v1576, %v1577
    %v1579 = vshll.u32 2131351028, %v1570
    %v1580 = vshrl.u32 2102212464, %v1571
    %v1581 = vor.u32 %v1579, %v1580
    %v1582 = vshll.u32 2102212464, %v1570
    %v1583 = vshrl.u32 920167782, %v1571
    %v1584 = vor.u32 %v1582, %v1583
    %v1585 = vshll.u32 920167782, %v1570
    %v1586 = vshrl.u32 1326507024, %v1571
    %v1587 = vor.u32 %v1585, %v1586
    %vm1588 = vcmp.lt.s32.totalorder %v1569, 1
    %vm1589 = vcmp.lt.s32.totalorder %v1569, 2
    %vm1590 = vcmp.lt.s32.totalorder %v1569, 3
    %vm1591 = vcmp.lt.s32.totalorder %v1569, 4
    %v1592 = vsel %vm1588, %v1572, %v1575
    %v1593 = vsel %vm1591, %v1581, 2102212464
    %v1594 = vsel %vm1590, %v1578, %v1593
    %v1595 = vsel %vm1589, %v1592, %v1594
    %v1596 = vsel %vm1588, %v1575, %v1578
    %v1597 = vsel %vm1591, %v1584, 920167782
    %v1598 = vsel %vm1590, %v1581, %v1597
    %v1599 = vsel %vm1589, %v1596, %v1598
    %v1600 = vsel %vm1588, %v1578, %v1581
    %v1601 = vsel %vm1591, %v1587, 1326507024
    %v1602 = vsel %vm1590, %v1584, %v1601
    %v1603 = vsel %vm1589, %v1600, %v1602
    %v1604 = vshll.u32 %v1564, 8
    %v1605 = vmul.u32.u64.compose %v1604, %v1603
    %v1606 = vextract.low.u32 %v1605
    %v1607 = vextract.high.u32 %v1605
    %v1608 = vmul.u32.u64.compose %v1604, %v1599
    %v1609 = vextract.low.u32 %v1608
    %v1610 = vextract.high.u32 %v1608
    %v1611 = vmul.u32 %v1604, %v1595
    %v1612 = vadd.s32 %v1607, %v1609
    %vm1613 = vc.u32 %v1607, %v1609
    %v1614 = vadd.s32 %v1610, 1
    %v1615 = vsel %vm1613, %v1614, %v1610
    %v1616 = vadd.s32 %v1611, %v1615
    %v1617 = vadd.s32 %v1616, 536870912
    %v1618 = vshrl.u32 %v1617, 30
    %v1619 = vshll.u32 %v1618, 30
    %v1620 = vsub.s32 %v1616, %v1619
    %vm1621 = vcmp.lt.s32.totalorder %v1620, 0
    %v1622 = vsub.s32 0, %v1620
    %v1623 = vsel %vm1621, %v1622, %v1620
    %v1624 = vclz %v1623
    %v1625 = vsub.s32 %v1624, 2
    %vm1626 = vcmp.gt.s32.totalorder 0, %v1625
    %v1627 = vsel %vm1626, 0, %v1625
    %v1628 = vsub.s32 32, %v1627
    %v1629 = vshll.u32 %v1620, %v1627
    %v1630 = vshrl.u32 %v1612, %v1628
    %v1631 = vor.u32 %v1629, %v1630
    %v1632 = vsub.s32 4294967266, %v1627
    %v1633 = vadd.s32 %v1632, 127
    %v1634 = vshll.u32 %v1633, 23
    %v1635 = vor.u32 4788187, %v1634
    %v1636 = vand.u32 2147483647, %v1635
    %v1638 = vcvt.s32.f32 %v1631
    %v1639 = vmul.f32 %v1638, %v1636
    %v1640 = vxor.u32 %v1639, 2147483648
    %v1641 = vsel %vm1558, %v1640, %v1639
    %v1642 = vsub.s32 4, %v1618
    %v1643 = vsel %vm1558, %v1642, %v1618
    %v1644 = vsel %vm1557, %v831, %v1641
    %v1645 = vsel %vm1557, 0, %v1643
    %v1646 = vcosq.f32.pop %v1644
    %v1647 = vsinq.f32.pop %v1644
    %vm1648 = vweird.f32 %v831
    %v1649 = vadd.s32 %v1645, 3
    %v1650 = vand.u32 %v1649, 3
    %vm1651 = vcmp.lt.s32.totalorder %v1650, 2
    %vm1652 = vcmp.eq.s32.totalorder %v1650, 0
    %v1653 = vxor.u32 %v1647, 2147483648
    %v1654 = vsel %vm1652, %v1646, %v1653
    %vm1655 = vcmp.eq.s32.totalorder %v1650, 2
    %v1656 = vxor.u32 %v1646, 2147483648
    %v1657 = vsel %vm1655, %v1656, %v1647
    %v1658 = vsel %vm1651, %v1654, %v1657
    %v1659 = vsel %vm1648, nan, %v1658
    %1660 = vrot.lane.b32.xlu0 %v665, 126
    %v1661 = vpop.permute.xlu0 %1660
    %1662 = vrot.lane.b32.xlu0 %v666, 126
    %v1663 = vpop.permute.xlu0 %1662
    %1664 = vrot.lane.b32.xlu0 %v667, 126
    %v1665 = vpop.permute.xlu0 %1664
    %1666 = vrot.lane.b32.xlu0 %v668, 126
    %v1667 = vpop.permute.xlu0 %1666
    %v1668 = vsel %vm268, %v1665, %v1667
    %v1669 = vsel %vm268, %v1663, %v1665
    %v1670 = vsel %vm268, %v1661, %v1663
    %v1671 = vsel %vm268, %v1667, %v1661
    %1672 = vrot.lane.b32.xlu0 %v681, 126
    %v1673 = vpop.permute.xlu0 %1672
    %1674 = vrot.lane.b32.xlu0 %v682, 126
    %v1675 = vpop.permute.xlu0 %1674
    %1676 = vrot.lane.b32.xlu0 %v683, 126
    %v1677 = vpop.permute.xlu0 %1676
    %1678 = vrot.lane.b32.xlu0 %v684, 126
    %v1679 = vpop.permute.xlu0 %1678
    %v1680 = vsel %vm268, %v1677, %v1679
    %v1681 = vsel %vm268, %v1675, %v1677
    %v1682 = vsel %vm268, %v1673, %v1675
    %v1683 = vsel %vm268, %v1679, %v1673
    %v1684 = vmul.f32 %v1670, %v934
    %v1685 = vmul.f32 %v1669, %v1037
    %v1686 = vmul.f32 %v1668, %v1140
    %v1687 = vmul.f32 %v1671, %v1243
    %v1688 = vmul.f32 %v1682, %v1347
    %v1689 = vmul.f32 %v1681, %v1451
    %v1690 = vmul.f32 %v1680, %v1555
    %v1691 = vmul.f32 %v1683, %v1659
    %v1692 = vsub.f32 %v1684, %v1688
    %v1693 = vsub.f32 %v1685, %v1689
    %v1694 = vsub.f32 %v1686, %v1690
    %v1695 = vsub.f32 %v1687, %v1691
    %v1696 = vmul.f32 %v1670, %v1347
    %v1697 = vmul.f32 %v1669, %v1451
    %v1698 = vmul.f32 %v1668, %v1555
    %v1699 = vmul.f32 %v1671, %v1659
    %v1700 = vmul.f32 %v1682, %v934
    %v1701 = vmul.f32 %v1681, %v1037
    %v1702 = vmul.f32 %v1680, %v1140
    %v1703 = vmul.f32 %v1683, %v1243
    %v1704 = vadd.f32 %v1696, %v1700
    %v1705 = vadd.f32 %v1697, %v1701
    %v1706 = vadd.f32 %v1698, %v1702
    %v1707 = vadd.f32 %v1699, %v1703
    %v1708 = vmul.f32 %v1692, %v169
    %v1709 = vmul.f32 %v1693, %v169
    %v1710 = vmul.f32 %v1694, %v169
    %v1711 = vmul.f32 %v1695, %v169
    %v1712 = vmul.f32 %v1704, %v174
    %v1713 = vmul.f32 %v1705, %v174
    %v1714 = vmul.f32 %v1706, %v174
    %v1715 = vmul.f32 %v1707, %v174
    %v1716 = vsub.f32 %v1708, %v1712
    %v1717 = vsub.f32 %v1709, %v1713
    %v1718 = vsub.f32 %v1710, %v1714
    %v1719 = vsub.f32 %v1711, %v1715
    %v1720 = vmul.f32 %v1692, %v174
    %v1721 = vmul.f32 %v1693, %v174
    %v1722 = vmul.f32 %v1694, %v174
    %v1723 = vmul.f32 %v1695, %v174
    %v1724 = vmul.f32 %v1704, %v169
    %v1725 = vmul.f32 %v1705, %v169
    %v1726 = vmul.f32 %v1706, %v169
    %v1727 = vmul.f32 %v1707, %v169
    %v1728 = vadd.f32 %v1720, %v1724
    %v1729 = vadd.f32 %v1721, %v1725
    %v1730 = vadd.f32 %v1722, %v1726
    %v1731 = vadd.f32 %v1723, %v1727
    %1732 = vrot.lane.b32.xlu0 %v1692, 127
    %v1733 = vpop.permute.xlu0 %1732
    %1734 = vrot.lane.b32.xlu0 %v1693, 127
    %v1735 = vpop.permute.xlu0 %1734
    %1736 = vrot.lane.b32.xlu0 %v1694, 127
    %v1737 = vpop.permute.xlu0 %1736
    %1738 = vrot.lane.b32.xlu0 %v1695, 127
    %v1739 = vpop.permute.xlu0 %1738
    %v1740 = vsel %vm207, %v1737, %v1739
    %v1741 = vsel %vm207, %v1735, %v1737
    %v1742 = vsel %vm207, %v1733, %v1735
    %v1743 = vsel %vm207, %v1739, %v1733
    %1744 = vrot.lane.b32.xlu0 %v1704, 127
    %v1745 = vpop.permute.xlu0 %1744
    %1746 = vrot.lane.b32.xlu0 %v1705, 127
    %v1747 = vpop.permute.xlu0 %1746
    %1748 = vrot.lane.b32.xlu0 %v1706, 127
    %v1749 = vpop.permute.xlu0 %1748
    %1750 = vrot.lane.b32.xlu0 %v1707, 127
    %v1751 = vpop.permute.xlu0 %1750
    %v1752 = vsel %vm207, %v1749, %v1751
    %v1753 = vsel %vm207, %v1747, %v1749
    %v1754 = vsel %vm207, %v1745, %v1747
    %v1755 = vsel %vm207, %v1751, %v1745
    %v1756 = vmul.f32 %v1742, %v224
    %v1757 = vmul.f32 %v1741, %v224
    %v1758 = vmul.f32 %v1740, %v224
    %v1759 = vmul.f32 %v1743, %v224
    %v1760 = vadd.f32 %v1716, %v1756
    %v1761 = vadd.f32 %v1717, %v1757
    %v1762 = vadd.f32 %v1718, %v1758
    %v1763 = vadd.f32 %v1719, %v1759
    %v1764 = vmul.f32 %v1754, %v233
    %v1765 = vmul.f32 %v1753, %v233
    %v1766 = vmul.f32 %v1752, %v233
    %v1767 = vmul.f32 %v1755, %v233
    %v1768 = vsub.f32 %v1760, %v1764
    %v1769 = vsub.f32 %v1761, %v1765
    %v1770 = vsub.f32 %v1762, %v1766
    %v1771 = vsub.f32 %v1763, %v1767
    %v1772 = vmul.f32 %v1742, %v233
    %v1773 = vmul.f32 %v1741, %v233
    %v1774 = vmul.f32 %v1740, %v233
    %v1775 = vmul.f32 %v1743, %v233
    %v1776 = vadd.f32 %v1728, %v1772
    %v1777 = vadd.f32 %v1729, %v1773
    %v1778 = vadd.f32 %v1730, %v1774
    %v1779 = vadd.f32 %v1731, %v1775
    %v1780 = vmul.f32 %v1754, %v224
    %v1781 = vmul.f32 %v1753, %v224
    %v1782 = vmul.f32 %v1752, %v224
    %v1783 = vmul.f32 %v1755, %v224
    %v1784 = vadd.f32 %v1776, %v1780
    %v1785 = vadd.f32 %v1777, %v1781
    %v1786 = vadd.f32 %v1778, %v1782
    %v1787 = vadd.f32 %v1779, %v1783
    %1788 = vrot.lane.b32.xlu0 %v1692, 126
    %v1789 = vpop.permute.xlu0 %1788
    %1790 = vrot.lane.b32.xlu0 %v1693, 126
    %v1791 = vpop.permute.xlu0 %1790
    %1792 = vrot.lane.b32.xlu0 %v1694, 126
    %v1793 = vpop.permute.xlu0 %1792
    %1794 = vrot.lane.b32.xlu0 %v1695, 126
    %v1795 = vpop.permute.xlu0 %1794
    %v1796 = vsel %vm268, %v1793, %v1795
    %v1797 = vsel %vm268, %v1791, %v1793
    %v1798 = vsel %vm268, %v1789, %v1791
    %v1799 = vsel %vm268, %v1795, %v1789
    %1800 = vrot.lane.b32.xlu0 %v1704, 126
    %v1801 = vpop.permute.xlu0 %1800
    %1802 = vrot.lane.b32.xlu0 %v1705, 126
    %v1803 = vpop.permute.xlu0 %1802
    %1804 = vrot.lane.b32.xlu0 %v1706, 126
    %v1805 = vpop.permute.xlu0 %1804
    %1806 = vrot.lane.b32.xlu0 %v1707, 126
    %v1807 = vpop.permute.xlu0 %1806
    %v1808 = vsel %vm268, %v1805, %v1807
    %v1809 = vsel %vm268, %v1803, %v1805
    %v1810 = vsel %vm268, %v1801, %v1803
    %v1811 = vsel %vm268, %v1807, %v1801
    %v1812 = vmul.f32 %v1798, %v285
    %v1813 = vmul.f32 %v1797, %v285
    %v1814 = vmul.f32 %v1796, %v285
    %v1815 = vmul.f32 %v1799, %v285
    %v1816 = vadd.f32 %v1768, %v1812
    %v1817 = vadd.f32 %v1769, %v1813
    %v1818 = vadd.f32 %v1770, %v1814
    %v1819 = vadd.f32 %v1771, %v1815
    %v1820 = vmul.f32 %v1810, %v294
    %v1821 = vmul.f32 %v1809, %v294
    %v1822 = vmul.f32 %v1808, %v294
    %v1823 = vmul.f32 %v1811, %v294
    %v1824 = vsub.f32 %v1816, %v1820
    %v1825 = vsub.f32 %v1817, %v1821
    %v1826 = vsub.f32 %v1818, %v1822
    %v1827 = vsub.f32 %v1819, %v1823
    %v1828 = vmul.f32 %v1798, %v294
    %v1829 = vmul.f32 %v1797, %v294
    %v1830 = vmul.f32 %v1796, %v294
    %v1831 = vmul.f32 %v1799, %v294
    %v1832 = vadd.f32 %v1784, %v1828
    %v1833 = vadd.f32 %v1785, %v1829
    %v1834 = vadd.f32 %v1786, %v1830
    %v1835 = vadd.f32 %v1787, %v1831
    %v1836 = vmul.f32 %v1810, %v285
    %v1837 = vmul.f32 %v1809, %v285
    %v1838 = vmul.f32 %v1808, %v285
    %v1839 = vmul.f32 %v1811, %v285
    %v1840 = vadd.f32 %v1832, %v1836
    %v1841 = vadd.f32 %v1833, %v1837
    %v1842 = vadd.f32 %v1834, %v1838
    %v1843 = vadd.f32 %v1835, %v1839
    %1844 = vrot.lane.b32.xlu0 %v1692, 125
    %v1845 = vpop.permute.xlu0 %1844
    %1846 = vrot.lane.b32.xlu0 %v1693, 125
    %v1847 = vpop.permute.xlu0 %1846
    %1848 = vrot.lane.b32.xlu0 %v1694, 125
    %v1849 = vpop.permute.xlu0 %1848
    %1850 = vrot.lane.b32.xlu0 %v1695, 125
    %v1851 = vpop.permute.xlu0 %1850
    %v1852 = vsel %vm329, %v1849, %v1851
    %v1853 = vsel %vm329, %v1847, %v1849
    %v1854 = vsel %vm329, %v1845, %v1847
    %v1855 = vsel %vm329, %v1851, %v1845
    %1856 = vrot.lane.b32.xlu0 %v1704, 125
    %v1857 = vpop.permute.xlu0 %1856
    %1858 = vrot.lane.b32.xlu0 %v1705, 125
    %v1859 = vpop.permute.xlu0 %1858
    %1860 = vrot.lane.b32.xlu0 %v1706, 125
    %v1861 = vpop.permute.xlu0 %1860
    %1862 = vrot.lane.b32.xlu0 %v1707, 125
    %v1863 = vpop.permute.xlu0 %1862
    %v1864 = vsel %vm329, %v1861, %v1863
    %v1865 = vsel %vm329, %v1859, %v1861
    %v1866 = vsel %vm329, %v1857, %v1859
    %v1867 = vsel %vm329, %v1863, %v1857
    %v1868 = vmul.f32 %v1854, %v346
    %v1869 = vmul.f32 %v1853, %v346
    %v1870 = vmul.f32 %v1852, %v346
    %v1871 = vmul.f32 %v1855, %v346
    %v1872 = vadd.f32 %v1824, %v1868
    %v1873 = vadd.f32 %v1825, %v1869
    %v1874 = vadd.f32 %v1826, %v1870
    %v1875 = vadd.f32 %v1827, %v1871
    %v1876 = vmul.f32 %v1866, %v355
    %v1877 = vmul.f32 %v1865, %v355
    %v1878 = vmul.f32 %v1864, %v355
    %v1879 = vmul.f32 %v1867, %v355
    %v1880 = vsub.f32 %v1872, %v1876
    %v1881 = vsub.f32 %v1873, %v1877
    %v1882 = vsub.f32 %v1874, %v1878
    %v1883 = vsub.f32 %v1875, %v1879
    %v1884 = vmul.f32 %v1854, %v355
    %v1885 = vmul.f32 %v1853, %v355
    %v1886 = vmul.f32 %v1852, %v355
    %v1887 = vmul.f32 %v1855, %v355
    %v1888 = vadd.f32 %v1840, %v1884
    %v1889 = vadd.f32 %v1841, %v1885
    %v1890 = vadd.f32 %v1842, %v1886
    %v1891 = vadd.f32 %v1843, %v1887
    %v1892 = vmul.f32 %v1866, %v346
    %v1893 = vmul.f32 %v1865, %v346
    %v1894 = vmul.f32 %v1864, %v346
    %v1895 = vmul.f32 %v1867, %v346
    %v1896 = vadd.f32 %v1888, %v1892
    %v1897 = vadd.f32 %v1889, %v1893
    %v1898 = vadd.f32 %v1890, %v1894
    %v1899 = vadd.f32 %v1891, %v1895
    %1900 = vrot.lane.b32.xlu0 %v1692, 124
    %v1901 = vpop.permute.xlu0 %1900
    %1902 = vrot.lane.b32.xlu0 %v1693, 124
    %v1903 = vpop.permute.xlu0 %1902
    %1904 = vrot.lane.b32.xlu0 %v1694, 124
    %v1905 = vpop.permute.xlu0 %1904
    %1906 = vrot.lane.b32.xlu0 %v1695, 124
    %v1907 = vpop.permute.xlu0 %1906
    %v1908 = vsel %vm390, %v1905, %v1907
    %v1909 = vsel %vm390, %v1903, %v1905
    %v1910 = vsel %vm390, %v1901, %v1903
    %v1911 = vsel %vm390, %v1907, %v1901
    %1912 = vrot.lane.b32.xlu0 %v1704, 124
    %v1913 = vpop.permute.xlu0 %1912
    %1914 = vrot.lane.b32.xlu0 %v1705, 124
    %v1915 = vpop.permute.xlu0 %1914
    %1916 = vrot.lane.b32.xlu0 %v1706, 124
    %v1917 = vpop.permute.xlu0 %1916
    %1918 = vrot.lane.b32.xlu0 %v1707, 124
    %v1919 = vpop.permute.xlu0 %1918
    %v1920 = vsel %vm390, %v1917, %v1919
    %v1921 = vsel %vm390, %v1915, %v1917
    %v1922 = vsel %vm390, %v1913, %v1915
    %v1923 = vsel %vm390, %v1919, %v1913
    %v1924 = vmul.f32 %v1910, %v407
    %v1925 = vmul.f32 %v1909, %v407
    %v1926 = vmul.f32 %v1908, %v407
    %v1927 = vmul.f32 %v1911, %v407
    %v1928 = vadd.f32 %v1880, %v1924
    %v1929 = vadd.f32 %v1881, %v1925
    %v1930 = vadd.f32 %v1882, %v1926
    %v1931 = vadd.f32 %v1883, %v1927
    %v1932 = vmul.f32 %v1922, %v416
    %v1933 = vmul.f32 %v1921, %v416
    %v1934 = vmul.f32 %v1920, %v416
    %v1935 = vmul.f32 %v1923, %v416
    %v1936 = vsub.f32 %v1928, %v1932
    %v1937 = vsub.f32 %v1929, %v1933
    %v1938 = vsub.f32 %v1930, %v1934
    %v1939 = vsub.f32 %v1931, %v1935
    %v1940 = vmul.f32 %v1910, %v416
    %v1941 = vmul.f32 %v1909, %v416
    %v1942 = vmul.f32 %v1908, %v416
    %v1943 = vmul.f32 %v1911, %v416
    %v1944 = vadd.f32 %v1896, %v1940
    %v1945 = vadd.f32 %v1897, %v1941
    %v1946 = vadd.f32 %v1898, %v1942
    %v1947 = vadd.f32 %v1899, %v1943
    %v1948 = vmul.f32 %v1922, %v407
    %v1949 = vmul.f32 %v1921, %v407
    %v1950 = vmul.f32 %v1920, %v407
    %v1951 = vmul.f32 %v1923, %v407
    %v1952 = vadd.f32 %v1944, %v1948
    %v1953 = vadd.f32 %v1945, %v1949
    %v1954 = vadd.f32 %v1946, %v1950
    %v1955 = vadd.f32 %v1947, %v1951
    %1956 = vrot.lane.b32.xlu0 %v1692, 123
    %v1957 = vpop.permute.xlu0 %1956
    %1958 = vrot.lane.b32.xlu0 %v1693, 123
    %v1959 = vpop.permute.xlu0 %1958
    %1960 = vrot.lane.b32.xlu0 %v1694, 123
    %v1961 = vpop.permute.xlu0 %1960
    %1962 = vrot.lane.b32.xlu0 %v1695, 123
    %v1963 = vpop.permute.xlu0 %1962
    %v1964 = vsel %vm451, %v1961, %v1963
    %v1965 = vsel %vm451, %v1959, %v1961
    %v1966 = vsel %vm451, %v1957, %v1959
    %v1967 = vsel %vm451, %v1963, %v1957
    %1968 = vrot.lane.b32.xlu0 %v1704, 123
    %v1969 = vpop.permute.xlu0 %1968
    %1970 = vrot.lane.b32.xlu0 %v1705, 123
    %v1971 = vpop.permute.xlu0 %1970
    %1972 = vrot.lane.b32.xlu0 %v1706, 123
    %v1973 = vpop.permute.xlu0 %1972
    %1974 = vrot.lane.b32.xlu0 %v1707, 123
    %v1975 = vpop.permute.xlu0 %1974
    %v1976 = vsel %vm451, %v1973, %v1975
    %v1977 = vsel %vm451, %v1971, %v1973
    %v1978 = vsel %vm451, %v1969, %v1971
    %v1979 = vsel %vm451, %v1975, %v1969
    %v1980 = vmul.f32 %v1966, %v468
    %v1981 = vmul.f32 %v1965, %v468
    %v1982 = vmul.f32 %v1964, %v468
    %v1983 = vmul.f32 %v1967, %v468
    %v1984 = vadd.f32 %v1936, %v1980
    %v1985 = vadd.f32 %v1937, %v1981
    %v1986 = vadd.f32 %v1938, %v1982
    %v1987 = vadd.f32 %v1939, %v1983
    %v1988 = vmul.f32 %v1978, %v477
    %v1989 = vmul.f32 %v1977, %v477
    %v1990 = vmul.f32 %v1976, %v477
    %v1991 = vmul.f32 %v1979, %v477
    %v1992 = vsub.f32 %v1984, %v1988
    %v1993 = vsub.f32 %v1985, %v1989
    %v1994 = vsub.f32 %v1986, %v1990
    %v1995 = vsub.f32 %v1987, %v1991
    %v1996 = vmul.f32 %v1966, %v477
    %v1997 = vmul.f32 %v1965, %v477
    %v1998 = vmul.f32 %v1964, %v477
    %v1999 = vmul.f32 %v1967, %v477
    %v2000 = vadd.f32 %v1952, %v1996
    %v2001 = vadd.f32 %v1953, %v1997
    %v2002 = vadd.f32 %v1954, %v1998
    %v2003 = vadd.f32 %v1955, %v1999
    %v2004 = vmul.f32 %v1978, %v468
    %v2005 = vmul.f32 %v1977, %v468
    %v2006 = vmul.f32 %v1976, %v468
    %v2007 = vmul.f32 %v1979, %v468
    %v2008 = vadd.f32 %v2000, %v2004
    %v2009 = vadd.f32 %v2001, %v2005
    %v2010 = vadd.f32 %v2002, %v2006
    %v2011 = vadd.f32 %v2003, %v2007
    %2012 = vrot.lane.b32.xlu0 %v1692, 122
    %v2013 = vpop.permute.xlu0 %2012
    %2014 = vrot.lane.b32.xlu0 %v1693, 122
    %v2015 = vpop.permute.xlu0 %2014
    %2016 = vrot.lane.b32.xlu0 %v1694, 122
    %v2017 = vpop.permute.xlu0 %2016
    %2018 = vrot.lane.b32.xlu0 %v1695, 122
    %v2019 = vpop.permute.xlu0 %2018
    %v2020 = vsel %vm512, %v2017, %v2019
    %v2021 = vsel %vm512, %v2015, %v2017
    %v2022 = vsel %vm512, %v2013, %v2015
    %v2023 = vsel %vm512, %v2019, %v2013
    %2024 = vrot.lane.b32.xlu0 %v1704, 122
    %v2025 = vpop.permute.xlu0 %2024
    %2026 = vrot.lane.b32.xlu0 %v1705, 122
    %v2027 = vpop.permute.xlu0 %2026
    %2028 = vrot.lane.b32.xlu0 %v1706, 122
    %v2029 = vpop.permute.xlu0 %2028
    %2030 = vrot.lane.b32.xlu0 %v1707, 122
    %v2031 = vpop.permute.xlu0 %2030
    %v2032 = vsel %vm512, %v2029, %v2031
    %v2033 = vsel %vm512, %v2027, %v2029
    %v2034 = vsel %vm512, %v2025, %v2027
    %v2035 = vsel %vm512, %v2031, %v2025
    %v2036 = vmul.f32 %v2022, %v529
    %v2037 = vmul.f32 %v2021, %v529
    %v2038 = vmul.f32 %v2020, %v529
    %v2039 = vmul.f32 %v2023, %v529
    %v2040 = vadd.f32 %v1992, %v2036
    %v2041 = vadd.f32 %v1993, %v2037
    %v2042 = vadd.f32 %v1994, %v2038
    %v2043 = vadd.f32 %v1995, %v2039
    %v2044 = vmul.f32 %v2034, %v538
    %v2045 = vmul.f32 %v2033, %v538
    %v2046 = vmul.f32 %v2032, %v538
    %v2047 = vmul.f32 %v2035, %v538
    %v2048 = vsub.f32 %v2040, %v2044
    %v2049 = vsub.f32 %v2041, %v2045
    %v2050 = vsub.f32 %v2042, %v2046
    %v2051 = vsub.f32 %v2043, %v2047
    %v2052 = vmul.f32 %v2022, %v538
    %v2053 = vmul.f32 %v2021, %v538
    %v2054 = vmul.f32 %v2020, %v538
    %v2055 = vmul.f32 %v2023, %v538
    %v2056 = vadd.f32 %v2008, %v2052
    %v2057 = vadd.f32 %v2009, %v2053
    %v2058 = vadd.f32 %v2010, %v2054
    %v2059 = vadd.f32 %v2011, %v2055
    %v2060 = vmul.f32 %v2034, %v529
    %v2061 = vmul.f32 %v2033, %v529
    %v2062 = vmul.f32 %v2032, %v529
    %v2063 = vmul.f32 %v2035, %v529
    %v2064 = vadd.f32 %v2056, %v2060
    %v2065 = vadd.f32 %v2057, %v2061
    %v2066 = vadd.f32 %v2058, %v2062
    %v2067 = vadd.f32 %v2059, %v2063
    %2068 = vrot.lane.b32.xlu0 %v1692, 121
    %v2069 = vpop.permute.xlu0 %2068
    %2070 = vrot.lane.b32.xlu0 %v1693, 121
    %v2071 = vpop.permute.xlu0 %2070
    %2072 = vrot.lane.b32.xlu0 %v1694, 121
    %v2073 = vpop.permute.xlu0 %2072
    %2074 = vrot.lane.b32.xlu0 %v1695, 121
    %v2075 = vpop.permute.xlu0 %2074
    %v2076 = vsel %vm573, %v2073, %v2075
    %v2077 = vsel %vm573, %v2071, %v2073
    %v2078 = vsel %vm573, %v2069, %v2071
    %v2079 = vsel %vm573, %v2075, %v2069
    %2080 = vrot.lane.b32.xlu0 %v1704, 121
    %v2081 = vpop.permute.xlu0 %2080
    %2082 = vrot.lane.b32.xlu0 %v1705, 121
    %v2083 = vpop.permute.xlu0 %2082
    %2084 = vrot.lane.b32.xlu0 %v1706, 121
    %v2085 = vpop.permute.xlu0 %2084
    %2086 = vrot.lane.b32.xlu0 %v1707, 121
    %v2087 = vpop.permute.xlu0 %2086
    %v2088 = vsel %vm573, %v2085, %v2087
    %v2089 = vsel %vm573, %v2083, %v2085
    %v2090 = vsel %vm573, %v2081, %v2083
    %v2091 = vsel %vm573, %v2087, %v2081
    %v2092 = vmul.f32 %v2078, %v590
    %v2093 = vmul.f32 %v2077, %v590
    %v2094 = vmul.f32 %v2076, %v590
    %v2095 = vmul.f32 %v2079, %v590
    %v2096 = vadd.f32 %v2048, %v2092
    %v2097 = vadd.f32 %v2049, %v2093
    %v2098 = vadd.f32 %v2050, %v2094
    %v2099 = vadd.f32 %v2051, %v2095
    %v2100 = vmul.f32 %v2090, %v599
    %v2101 = vmul.f32 %v2089, %v599
    %v2102 = vmul.f32 %v2088, %v599
    %v2103 = vmul.f32 %v2091, %v599
    %v2104 = vsub.f32 %v2096, %v2100
    %v2105 = vsub.f32 %v2097, %v2101
    %v2106 = vsub.f32 %v2098, %v2102
    %v2107 = vsub.f32 %v2099, %v2103
    %v2108 = vmul.f32 %v2078, %v599
    %v2109 = vmul.f32 %v2077, %v599
    %v2110 = vmul.f32 %v2076, %v599
    %v2111 = vmul.f32 %v2079, %v599
    %v2112 = vadd.f32 %v2064, %v2108
    %v2113 = vadd.f32 %v2065, %v2109
    %v2114 = vadd.f32 %v2066, %v2110
    %v2115 = vadd.f32 %v2067, %v2111
    %v2116 = vmul.f32 %v2090, %v590
    %v2117 = vmul.f32 %v2089, %v590
    %v2118 = vmul.f32 %v2088, %v590
    %v2119 = vmul.f32 %v2091, %v590
    %v2120 = vadd.f32 %v2112, %v2116
    %v2121 = vadd.f32 %v2113, %v2117
    %v2122 = vadd.f32 %v2114, %v2118
    %v2123 = vadd.f32 %v2115, %v2119
    %2124 = vrot.lane.b32.xlu0 %v1692, 120
    %v2125 = vpop.permute.xlu0 %2124
    %2126 = vrot.lane.b32.xlu0 %v1693, 120
    %v2127 = vpop.permute.xlu0 %2126
    %2128 = vrot.lane.b32.xlu0 %v1694, 120
    %v2129 = vpop.permute.xlu0 %2128
    %2130 = vrot.lane.b32.xlu0 %v1695, 120
    %v2131 = vpop.permute.xlu0 %2130
    %v2132 = vsel %vm634, %v2129, %v2131
    %v2133 = vsel %vm634, %v2127, %v2129
    %v2134 = vsel %vm634, %v2125, %v2127
    %v2135 = vsel %vm634, %v2131, %v2125
    %2136 = vrot.lane.b32.xlu0 %v1704, 120
    %v2137 = vpop.permute.xlu0 %2136
    %2138 = vrot.lane.b32.xlu0 %v1705, 120
    %v2139 = vpop.permute.xlu0 %2138
    %2140 = vrot.lane.b32.xlu0 %v1706, 120
    %v2141 = vpop.permute.xlu0 %2140
    %2142 = vrot.lane.b32.xlu0 %v1707, 120
    %v2143 = vpop.permute.xlu0 %2142
    %v2144 = vsel %vm634, %v2141, %v2143
    %v2145 = vsel %vm634, %v2139, %v2141
    %v2146 = vsel %vm634, %v2137, %v2139
    %v2147 = vsel %vm634, %v2143, %v2137
    %v2148 = vmul.f32 %v2134, %v651
    %v2149 = vmul.f32 %v2133, %v651
    %v2150 = vmul.f32 %v2132, %v651
    %v2151 = vmul.f32 %v2135, %v651
    %v2152 = vadd.f32 %v2104, %v2148
    %v2153 = vadd.f32 %v2105, %v2149
    %v2154 = vadd.f32 %v2106, %v2150
    %v2155 = vadd.f32 %v2107, %v2151
    %v2156 = vmul.f32 %v2146, %v660
    %v2157 = vmul.f32 %v2145, %v660
    %v2158 = vmul.f32 %v2144, %v660
    %v2159 = vmul.f32 %v2147, %v660
    %v2160 = vsub.f32 %v2152, %v2156
    %v2161 = vsub.f32 %v2153, %v2157
    %v2162 = vsub.f32 %v2154, %v2158
    %v2163 = vsub.f32 %v2155, %v2159
    %v2164 = vmul.f32 %v2134, %v660
    %v2165 = vmul.f32 %v2133, %v660
    %v2166 = vmul.f32 %v2132, %v660
    %v2167 = vmul.f32 %v2135, %v660
    %v2168 = vadd.f32 %v2120, %v2164
    %v2169 = vadd.f32 %v2121, %v2165
    %v2170 = vadd.f32 %v2122, %v2166
    %v2171 = vadd.f32 %v2123, %v2167
    %v2172 = vmul.f32 %v2146, %v651
    %v2173 = vmul.f32 %v2145, %v651
    %v2174 = vmul.f32 %v2144, %v651
    %v2175 = vmul.f32 %v2147, %v651
    %v2176 = vadd.f32 %v2168, %v2172
    %v2177 = vadd.f32 %v2169, %v2173
    %v2178 = vadd.f32 %v2170, %v2174
    %v2179 = vadd.f32 %v2171, %v2175
    %v2180 = vmul.f32 %v2160, %v2160
    %v2181 = vmul.f32 %v2161, %v2161
    %v2182 = vmul.f32 %v2162, %v2162
    %v2183 = vmul.f32 %v2163, %v2163
    %v2184 = vmul.f32 %v2176, %v2176
    %v2185 = vmul.f32 %v2177, %v2177
    %v2186 = vmul.f32 %v2178, %v2178
    %v2187 = vmul.f32 %v2179, %v2179
    %v2188 = vadd.f32 %v2180, %v2184
    %v2189 = vadd.f32 %v2181, %v2185
    %v2190 = vadd.f32 %v2182, %v2186
    %v2191 = vadd.f32 %v2183, %v2187
    %v2192 = vrot.slane %v2188, 4
    %v2193 = vrot.slane %v2189, 4
    %v2194 = vrot.slane %v2190, 4
    %v2195 = vrot.slane %v2191, 4
    %v2196 = vadd.f32 %v2188, %v2192
    %v2197 = vadd.f32 %v2189, %v2193
    %v2198 = vadd.f32 %v2190, %v2194
    %v2199 = vadd.f32 %v2191, %v2195
    %v2200 = vmul.f32 %v709, %v2196
    %v2201 = vmul.f32 %v709, %v2197
    %v2202 = vmul.f32 %v709, %v2198
    %2203 = vrot.lane.b32.xlu0 %v2196, 127
    %v2204 = vpop.permute.xlu0 %2203
    %2205 = vrot.lane.b32.xlu0 %v2197, 127
    %v2206 = vpop.permute.xlu0 %2205
    %2207 = vrot.lane.b32.xlu0 %v2198, 127
    %v2208 = vpop.permute.xlu0 %2207
    %2209 = vrot.lane.b32.xlu0 %v2199, 127
    %v2210 = vpop.permute.xlu0 %2209
    %v2211 = vsel %vm207, %v2208, %v2210
    %v2212 = vsel %vm207, %v2206, %v2208
    %v2213 = vsel %vm207, %v2204, %v2206
    %v2214 = vmul.f32 %v732, %v2213
    %v2215 = vmul.f32 %v732, %v2212
    %v2216 = vmul.f32 %v732, %v2211
    %v2217 = vadd.f32 %v2200, %v2214
    %v2218 = vadd.f32 %v2201, %v2215
    %v2219 = vadd.f32 %v2202, %v2216
    %2220 = vrot.lane.b32.xlu0 %v2196, 126
    %v2221 = vpop.permute.xlu0 %2220
    %2222 = vrot.lane.b32.xlu0 %v2197, 126
    %v2223 = vpop.permute.xlu0 %2222
    %2224 = vrot.lane.b32.xlu0 %v2198, 126
    %v2225 = vpop.permute.xlu0 %2224
    %2226 = vrot.lane.b32.xlu0 %v2199, 126
    %v2227 = vpop.permute.xlu0 %2226
    %v2228 = vsel %vm268, %v2225, %v2227
    %v2229 = vsel %vm268, %v2223, %v2225
    %v2230 = vsel %vm268, %v2221, %v2223
    %v2231 = vmul.f32 %v759, %v2230
    %v2232 = vmul.f32 %v759, %v2229
    %v2233 = vmul.f32 %v759, %v2228
    %v2234 = vadd.f32 %v2217, %v2231
    %v2235 = vadd.f32 %v2218, %v2232
    %v2236 = vadd.f32 %v2219, %v2233
    %2237 = vrot.lane.b32.xlu0 %v2196, 125
    %v2238 = vpop.permute.xlu0 %2237
    %2239 = vrot.lane.b32.xlu0 %v2197, 125
    %v2240 = vpop.permute.xlu0 %2239
    %2241 = vrot.lane.b32.xlu0 %v2198, 125
    %v2242 = vpop.permute.xlu0 %2241
    %2243 = vrot.lane.b32.xlu0 %v2199, 125
    %v2244 = vpop.permute.xlu0 %2243
    %v2245 = vsel %vm329, %v2242, %v2244
    %v2246 = vsel %vm329, %v2240, %v2242
    %v2247 = vsel %vm329, %v2238, %v2240
    %v2248 = vmul.f32 %v786, %v2247
    %v2249 = vmul.f32 %v786, %v2246
    %v2250 = vmul.f32 %v786, %v2245
    %v2251 = vadd.f32 %v2234, %v2248
    %v2252 = vadd.f32 %v2235, %v2249
    %v2253 = vadd.f32 %v2236, %v2250
    %2254 = vrot.lane.b32.xlu0 %v2196, 124
    %v2255 = vpop.permute.xlu0 %2254
    %2256 = vrot.lane.b32.xlu0 %v2197, 124
    %v2257 = vpop.permute.xlu0 %2256
    %2258 = vrot.lane.b32.xlu0 %v2198, 124
    %v2259 = vpop.permute.xlu0 %2258
    %2260 = vrot.lane.b32.xlu0 %v2199, 124
    %v2261 = vpop.permute.xlu0 %2260
    %v2262 = vsel %vm390, %v2259, %v2261
    %v2263 = vsel %vm390, %v2257, %v2259
    %v2264 = vsel %vm390, %v2255, %v2257
    %v2265 = vmul.f32 %v813, %v2264
    %v2266 = vmul.f32 %v813, %v2263
    %v2267 = vmul.f32 %v813, %v2262
    %v2268 = vadd.f32 %v2251, %v2265
    %v2269 = vadd.f32 %v2252, %v2266
    %v2270 = vadd.f32 %v2253, %v2267
    %v2271 = vmul.f32 %v2268, %v826
    %v2272 = vmul.f32 %v2269, %v826
    %v2273 = vmul.f32 %v2270, %v826
    %v2274 = vand.u32 2147483647, %v2271
    %vm2275 = vcmp.le.f32.partialorder %v2274, 0.7853982
    %vm2276 = vcmp.lt.s32.totalorder %v2271, 0
    %v2277 = vand.u32 %v2271, 2139095040
    %v2278 = vshrl.u32 %v2277, 23
    %v2279 = vsub.s32 %v2278, 127
    %v2280 = vand.u32 2147483647, %v2271
    %v2281 = vand.u32 %v2280, 8388607
    %v2282 = vor.u32 %v2281, 8388608
    %v2283 = vsub.s32 0, %v2282
    %v2284 = vadd.s32 %v2279, 1
    %vm2285 = vcmp.gt.s32.totalorder %v2284, 0
    %v2286 = vsel %vm2285, %v2284, 0
    %v2287 = vshrl.u32 %v2286, 5
    %v2288 = vand.u32 %v2286, 31
    %v2289 = vsub.s32 32, %v2288
    %v2290 = vshrl.u32 683565275, %v2289
    %v2291 = vshll.u32 683565275, %v2288
    %v2292 = vshrl.u32 2475754826, %v2289
    %v2293 = vor.u32 %v2291, %v2292
    %v2294 = vshll.u32 2475754826, %v2288
    %v2295 = vshrl.u32 2131351028, %v2289
    %v2296 = vor.u32 %v2294, %v2295
    %v2297 = vshll.u32 2131351028, %v2288
    %v2298 = vshrl.u32 2102212464, %v2289
    %v2299 = vor.u32 %v2297, %v2298
    %v2300 = vshll.u32 2102212464, %v2288
    %v2301 = vshrl.u32 920167782, %v2289
    %v2302 = vor.u32 %v2300, %v2301
    %v2303 = vshll.u32 920167782, %v2288
    %v2304 = vshrl.u32 1326507024, %v2289
    %v2305 = vor.u32 %v2303, %v2304
    %vm2306 = vcmp.lt.s32.totalorder %v2287, 1
    %vm2307 = vcmp.lt.s32.totalorder %v2287, 2
    %vm2308 = vcmp.lt.s32.totalorder %v2287, 3
    %vm2309 = vcmp.lt.s32.totalorder %v2287, 4
    %v2310 = vsel %vm2306, %v2290, %v2293
    %v2311 = vsel %vm2309, %v2299, 2102212464
    %v2312 = vsel %vm2308, %v2296, %v2311
    %v2313 = vsel %vm2307, %v2310, %v2312
    %v2314 = vsel %vm2306, %v2293, %v2296
    %v2315 = vsel %vm2309, %v2302, 920167782
    %v2316 = vsel %vm2308, %v2299, %v2315
    %v2317 = vsel %vm2307, %v2314, %v2316
    %v2318 = vsel %vm2306, %v2296, %v2299
    %v2319 = vsel %vm2309, %v2305, 1326507024
    %v2320 = vsel %vm2308, %v2302, %v2319
    %v2321 = vsel %vm2307, %v2318, %v2320
    %v2322 = vshll.u32 %v2282, 8
    %v2323 = vmul.u32.u64.compose %v2322, %v2321
    %v2324 = vextract.low.u32 %v2323
    %v2325 = vextract.high.u32 %v2323
    %v2326 = vmul.u32.u64.compose %v2322, %v2317
    %v2327 = vextract.low.u32 %v2326
    %v2328 = vextract.high.u32 %v2326
    %v2329 = vmul.u32 %v2322, %v2313
    %v2330 = vadd.s32 %v2325, %v2327
    %vm2331 = vc.u32 %v2325, %v2327
    %v2332 = vadd.s32 %v2328, 1
    %v2333 = vsel %vm2331, %v2332, %v2328
    %v2334 = vadd.s32 %v2329, %v2333
    %v2335 = vadd.s32 %v2334, 536870912
    %v2336 = vshrl.u32 %v2335, 30
    %v2337 = vshll.u32 %v2336, 30
    %v2338 = vsub.s32 %v2334, %v2337
    %vm2339 = vcmp.lt.s32.totalorder %v2338, 0
    %v2340 = vsub.s32 0, %v2338
    %v2341 = vsel %vm2339, %v2340, %v2338
    %v2342 = vclz %v2341
    %v2343 = vsub.s32 %v2342, 2
    %vm2344 = vcmp.gt.s32.totalorder 0, %v2343
    %v2345 = vsel %vm2344, 0, %v2343
    %v2346 = vsub.s32 32, %v2345
    %v2347 = vshll.u32 %v2338, %v2345
    %v2348 = vshrl.u32 %v2330, %v2346
    %v2349 = vor.u32 %v2347, %v2348
    %v2350 = vsub.s32 4294967266, %v2345
    %v2351 = vadd.s32 %v2350, 127
    %v2352 = vshll.u32 %v2351, 23
    %v2353 = vor.u32 4788187, %v2352
    %v2354 = vand.u32 2147483647, %v2353
    %v2356 = vcvt.s32.f32 %v2349
    %v2357 = vmul.f32 %v2356, %v2354
    %v2358 = vxor.u32 %v2357, 2147483648
    %v2359 = vsel %vm2276, %v2358, %v2357
    %v2360 = vsub.s32 4, %v2336
    %v2361 = vsel %vm2276, %v2360, %v2336
    %v2362 = vsel %vm2275, %v2271, %v2359
    %v2363 = vsel %vm2275, 0, %v2361
    %v2364 = vcosq.f32.pop %v2362
    %v2365 = vsinq.f32.pop %v2362
    %vm2366 = vweird.f32 %v2271
    %v2367 = vand.u32 %v2363, 3
    %vm2368 = vcmp.lt.s32.totalorder %v2367, 2
    %vm2369 = vcmp.eq.s32.totalorder %v2367, 0
    %v2370 = vxor.u32 %v2365, 2147483648
    %v2371 = vsel %vm2369, %v2364, %v2370
    %vm2372 = vcmp.eq.s32.totalorder %v2367, 2
    %v2373 = vxor.u32 %v2364, 2147483648
    %v2374 = vsel %vm2372, %v2373, %v2365
    %v2375 = vsel %vm2368, %v2371, %v2374
    %v2376 = vsel %vm2366, nan, %v2375
    %v2377 = vand.u32 2147483647, %v2272
    %vm2378 = vcmp.le.f32.partialorder %v2377, 0.7853982
    %vm2379 = vcmp.lt.s32.totalorder %v2272, 0
    %v2380 = vand.u32 %v2272, 2139095040
    %v2381 = vshrl.u32 %v2380, 23
    %v2382 = vsub.s32 %v2381, 127
    %v2383 = vand.u32 2147483647, %v2272
    %v2384 = vand.u32 %v2383, 8388607
    %v2385 = vor.u32 %v2384, 8388608
    %v2386 = vsub.s32 0, %v2385
    %v2387 = vadd.s32 %v2382, 1
    %vm2388 = vcmp.gt.s32.totalorder %v2387, 0
    %v2389 = vsel %vm2388, %v2387, 0
    %v2390 = vshrl.u32 %v2389, 5
    %v2391 = vand.u32 %v2389, 31
    %v2392 = vsub.s32 32, %v2391
    %v2393 = vshrl.u32 683565275, %v2392
    %v2394 = vshll.u32 683565275, %v2391
    %v2395 = vshrl.u32 2475754826, %v2392
    %v2396 = vor.u32 %v2394, %v2395
    %v2397 = vshll.u32 2475754826, %v2391
    %v2398 = vshrl.u32 2131351028, %v2392
    %v2399 = vor.u32 %v2397, %v2398
    %v2400 = vshll.u32 2131351028, %v2391
    %v2401 = vshrl.u32 2102212464, %v2392
    %v2402 = vor.u32 %v2400, %v2401
    %v2403 = vshll.u32 2102212464, %v2391
    %v2404 = vshrl.u32 920167782, %v2392
    %v2405 = vor.u32 %v2403, %v2404
    %v2406 = vshll.u32 920167782, %v2391
    %v2407 = vshrl.u32 1326507024, %v2392
    %v2408 = vor.u32 %v2406, %v2407
    %vm2409 = vcmp.lt.s32.totalorder %v2390, 1
    %vm2410 = vcmp.lt.s32.totalorder %v2390, 2
    %vm2411 = vcmp.lt.s32.totalorder %v2390, 3
    %vm2412 = vcmp.lt.s32.totalorder %v2390, 4
    %v2413 = vsel %vm2409, %v2393, %v2396
    %v2414 = vsel %vm2412, %v2402, 2102212464
    %v2415 = vsel %vm2411, %v2399, %v2414
    %v2416 = vsel %vm2410, %v2413, %v2415
    %v2417 = vsel %vm2409, %v2396, %v2399
    %v2418 = vsel %vm2412, %v2405, 920167782
    %v2419 = vsel %vm2411, %v2402, %v2418
    %v2420 = vsel %vm2410, %v2417, %v2419
    %v2421 = vsel %vm2409, %v2399, %v2402
    %v2422 = vsel %vm2412, %v2408, 1326507024
    %v2423 = vsel %vm2411, %v2405, %v2422
    %v2424 = vsel %vm2410, %v2421, %v2423
    %v2425 = vshll.u32 %v2385, 8
    %v2426 = vmul.u32.u64.compose %v2425, %v2424
    %v2427 = vextract.low.u32 %v2426
    %v2428 = vextract.high.u32 %v2426
    %v2429 = vmul.u32.u64.compose %v2425, %v2420
    %v2430 = vextract.low.u32 %v2429
    %v2431 = vextract.high.u32 %v2429
    %v2432 = vmul.u32 %v2425, %v2416
    %v2433 = vadd.s32 %v2428, %v2430
    %vm2434 = vc.u32 %v2428, %v2430
    %v2435 = vadd.s32 %v2431, 1
    %v2436 = vsel %vm2434, %v2435, %v2431
    %v2437 = vadd.s32 %v2432, %v2436
    %v2438 = vadd.s32 %v2437, 536870912
    %v2439 = vshrl.u32 %v2438, 30
    %v2440 = vshll.u32 %v2439, 30
    %v2441 = vsub.s32 %v2437, %v2440
    %vm2442 = vcmp.lt.s32.totalorder %v2441, 0
    %v2443 = vsub.s32 0, %v2441
    %v2444 = vsel %vm2442, %v2443, %v2441
    %v2445 = vclz %v2444
    %v2446 = vsub.s32 %v2445, 2
    %vm2447 = vcmp.gt.s32.totalorder 0, %v2446
    %v2448 = vsel %vm2447, 0, %v2446
    %v2449 = vsub.s32 32, %v2448
    %v2450 = vshll.u32 %v2441, %v2448
    %v2451 = vshrl.u32 %v2433, %v2449
    %v2452 = vor.u32 %v2450, %v2451
    %v2453 = vsub.s32 4294967266, %v2448
    %v2454 = vadd.s32 %v2453, 127
    %v2455 = vshll.u32 %v2454, 23
    %v2456 = vor.u32 4788187, %v2455
    %v2457 = vand.u32 2147483647, %v2456
    %v2459 = vcvt.s32.f32 %v2452
    %v2460 = vmul.f32 %v2459, %v2457
    %v2461 = vxor.u32 %v2460, 2147483648
    %v2462 = vsel %vm2379, %v2461, %v2460
    %v2463 = vsub.s32 4, %v2439
    %v2464 = vsel %vm2379, %v2463, %v2439
    %v2465 = vsel %vm2378, %v2272, %v2462
    %v2466 = vsel %vm2378, 0, %v2464
    %v2467 = vcosq.f32.pop %v2465
    %v2468 = vsinq.f32.pop %v2465
    %vm2469 = vweird.f32 %v2272
    %v2470 = vand.u32 %v2466, 3
    %vm2471 = vcmp.lt.s32.totalorder %v2470, 2
    %vm2472 = vcmp.eq.s32.totalorder %v2470, 0
    %v2473 = vxor.u32 %v2468, 2147483648
    %v2474 = vsel %vm2472, %v2467, %v2473
    %vm2475 = vcmp.eq.s32.totalorder %v2470, 2
    %v2476 = vxor.u32 %v2467, 2147483648
    %v2477 = vsel %vm2475, %v2476, %v2468
    %v2478 = vsel %vm2471, %v2474, %v2477
    %v2479 = vsel %vm2469, nan, %v2478
    %v2480 = vand.u32 2147483647, %v2273
    %vm2481 = vcmp.le.f32.partialorder %v2480, 0.7853982
    %vm2482 = vcmp.lt.s32.totalorder %v2273, 0
    %v2483 = vand.u32 %v2273, 2139095040
    %v2484 = vshrl.u32 %v2483, 23
    %v2485 = vsub.s32 %v2484, 127
    %v2486 = vand.u32 2147483647, %v2273
    %v2487 = vand.u32 %v2486, 8388607
    %v2488 = vor.u32 %v2487, 8388608
    %v2489 = vsub.s32 0, %v2488
    %v2490 = vadd.s32 %v2485, 1
    %vm2491 = vcmp.gt.s32.totalorder %v2490, 0
    %v2492 = vsel %vm2491, %v2490, 0
    %v2493 = vshrl.u32 %v2492, 5
    %v2494 = vand.u32 %v2492, 31
    %v2495 = vsub.s32 32, %v2494
    %v2496 = vshrl.u32 683565275, %v2495
    %v2497 = vshll.u32 683565275, %v2494
    %v2498 = vshrl.u32 2475754826, %v2495
    %v2499 = vor.u32 %v2497, %v2498
    %v2500 = vshll.u32 2475754826, %v2494
    %v2501 = vshrl.u32 2131351028, %v2495
    %v2502 = vor.u32 %v2500, %v2501
    %v2503 = vshll.u32 2131351028, %v2494
    %v2504 = vshrl.u32 2102212464, %v2495
    %v2505 = vor.u32 %v2503, %v2504
    %v2506 = vshll.u32 2102212464, %v2494
    %v2507 = vshrl.u32 920167782, %v2495
    %v2508 = vor.u32 %v2506, %v2507
    %v2509 = vshll.u32 920167782, %v2494
    %v2510 = vshrl.u32 1326507024, %v2495
    %v2511 = vor.u32 %v2509, %v2510
    %vm2512 = vcmp.lt.s32.totalorder %v2493, 1
    %vm2513 = vcmp.lt.s32.totalorder %v2493, 2
    %vm2514 = vcmp.lt.s32.totalorder %v2493, 3
    %vm2515 = vcmp.lt.s32.totalorder %v2493, 4
    %v2516 = vsel %vm2512, %v2496, %v2499
    %v2517 = vsel %vm2515, %v2505, 2102212464
    %v2518 = vsel %vm2514, %v2502, %v2517
    %v2519 = vsel %vm2513, %v2516, %v2518
    %v2520 = vsel %vm2512, %v2499, %v2502
    %v2521 = vsel %vm2515, %v2508, 920167782
    %v2522 = vsel %vm2514, %v2505, %v2521
    %v2523 = vsel %vm2513, %v2520, %v2522
    %v2524 = vsel %vm2512, %v2502, %v2505
    %v2525 = vsel %vm2515, %v2511, 1326507024
    %v2526 = vsel %vm2514, %v2508, %v2525
    %v2527 = vsel %vm2513, %v2524, %v2526
    %v2528 = vshll.u32 %v2488, 8
    %v2529 = vmul.u32.u64.compose %v2528, %v2527
    %v2530 = vextract.low.u32 %v2529
    %v2531 = vextract.high.u32 %v2529
    %v2532 = vmul.u32.u64.compose %v2528, %v2523
    %v2533 = vextract.low.u32 %v2532
    %v2534 = vextract.high.u32 %v2532
    %v2535 = vmul.u32 %v2528, %v2519
    %v2536 = vadd.s32 %v2531, %v2533
    %vm2537 = vc.u32 %v2531, %v2533
    %v2538 = vadd.s32 %v2534, 1
    %v2539 = vsel %vm2537, %v2538, %v2534
    %v2540 = vadd.s32 %v2535, %v2539
    %v2541 = vadd.s32 %v2540, 536870912
    %v2542 = vshrl.u32 %v2541, 30
    %v2543 = vshll.u32 %v2542, 30
    %v2544 = vsub.s32 %v2540, %v2543
    %vm2545 = vcmp.lt.s32.totalorder %v2544, 0
    %v2546 = vsub.s32 0, %v2544
    %v2547 = vsel %vm2545, %v2546, %v2544
    %v2548 = vclz %v2547
    %v2549 = vsub.s32 %v2548, 2
    %vm2550 = vcmp.gt.s32.totalorder 0, %v2549
    %v2551 = vsel %vm2550, 0, %v2549
    %v2552 = vsub.s32 32, %v2551
    %v2553 = vshll.u32 %v2544, %v2551
    %v2554 = vshrl.u32 %v2536, %v2552
    %v2555 = vor.u32 %v2553, %v2554
    %v2556 = vsub.s32 4294967266, %v2551
    %v2557 = vadd.s32 %v2556, 127
    %v2558 = vshll.u32 %v2557, 23
    %v2559 = vor.u32 4788187, %v2558
    %v2560 = vand.u32 2147483647, %v2559
    %v2562 = vcvt.s32.f32 %v2555
    %v2563 = vmul.f32 %v2562, %v2560
    %v2564 = vxor.u32 %v2563, 2147483648
    %v2565 = vsel %vm2482, %v2564, %v2563
    %v2566 = vsub.s32 4, %v2542
    %v2567 = vsel %vm2482, %v2566, %v2542
    %v2568 = vsel %vm2481, %v2273, %v2565
    %v2569 = vsel %vm2481, 0, %v2567
    %v2570 = vcosq.f32.pop %v2568
    %v2571 = vsinq.f32.pop %v2568
    %vm2572 = vweird.f32 %v2273
    %v2573 = vand.u32 %v2569, 3
    %vm2574 = vcmp.lt.s32.totalorder %v2573, 2
    %vm2575 = vcmp.eq.s32.totalorder %v2573, 0
    %v2576 = vxor.u32 %v2571, 2147483648
    %v2577 = vsel %vm2575, %v2570, %v2576
    %vm2578 = vcmp.eq.s32.totalorder %v2573, 2
    %v2579 = vxor.u32 %v2570, 2147483648
    %v2580 = vsel %vm2578, %v2579, %v2571
    %v2581 = vsel %vm2574, %v2577, %v2580
    %v2582 = vsel %vm2572, nan, %v2581
    %v2583 = vand.u32 2147483647, %v2271
    %vm2584 = vcmp.le.f32.partialorder %v2583, 0.7853982
    %vm2585 = vcmp.lt.s32.totalorder %v2271, 0
    %v2586 = vand.u32 %v2271, 2139095040
    %v2587 = vshrl.u32 %v2586, 23
    %v2588 = vsub.s32 %v2587, 127
    %v2589 = vand.u32 2147483647, %v2271
    %v2590 = vand.u32 %v2589, 8388607
    %v2591 = vor.u32 %v2590, 8388608
    %v2592 = vsub.s32 0, %v2591
    %v2593 = vadd.s32 %v2588, 1
    %vm2594 = vcmp.gt.s32.totalorder %v2593, 0
    %v2595 = vsel %vm2594, %v2593, 0
    %v2596 = vshrl.u32 %v2595, 5
    %v2597 = vand.u32 %v2595, 31
    %v2598 = vsub.s32 32, %v2597
    %v2599 = vshrl.u32 683565275, %v2598
    %v2600 = vshll.u32 683565275, %v2597
    %v2601 = vshrl.u32 2475754826, %v2598
    %v2602 = vor.u32 %v2600, %v2601
    %v2603 = vshll.u32 2475754826, %v2597
    %v2604 = vshrl.u32 2131351028, %v2598
    %v2605 = vor.u32 %v2603, %v2604
    %v2606 = vshll.u32 2131351028, %v2597
    %v2607 = vshrl.u32 2102212464, %v2598
    %v2608 = vor.u32 %v2606, %v2607
    %v2609 = vshll.u32 2102212464, %v2597
    %v2610 = vshrl.u32 920167782, %v2598
    %v2611 = vor.u32 %v2609, %v2610
    %v2612 = vshll.u32 920167782, %v2597
    %v2613 = vshrl.u32 1326507024, %v2598
    %v2614 = vor.u32 %v2612, %v2613
    %vm2615 = vcmp.lt.s32.totalorder %v2596, 1
    %vm2616 = vcmp.lt.s32.totalorder %v2596, 2
    %vm2617 = vcmp.lt.s32.totalorder %v2596, 3
    %vm2618 = vcmp.lt.s32.totalorder %v2596, 4
    %v2619 = vsel %vm2615, %v2599, %v2602
    %v2620 = vsel %vm2618, %v2608, 2102212464
    %v2621 = vsel %vm2617, %v2605, %v2620
    %v2622 = vsel %vm2616, %v2619, %v2621
    %v2623 = vsel %vm2615, %v2602, %v2605
    %v2624 = vsel %vm2618, %v2611, 920167782
    %v2625 = vsel %vm2617, %v2608, %v2624
    %v2626 = vsel %vm2616, %v2623, %v2625
    %v2627 = vsel %vm2615, %v2605, %v2608
    %v2628 = vsel %vm2618, %v2614, 1326507024
    %v2629 = vsel %vm2617, %v2611, %v2628
    %v2630 = vsel %vm2616, %v2627, %v2629
    %v2631 = vshll.u32 %v2591, 8
    %v2632 = vmul.u32.u64.compose %v2631, %v2630
    %v2633 = vextract.low.u32 %v2632
    %v2634 = vextract.high.u32 %v2632
    %v2635 = vmul.u32.u64.compose %v2631, %v2626
    %v2636 = vextract.low.u32 %v2635
    %v2637 = vextract.high.u32 %v2635
    %v2638 = vmul.u32 %v2631, %v2622
    %v2639 = vadd.s32 %v2634, %v2636
    %vm2640 = vc.u32 %v2634, %v2636
    %v2641 = vadd.s32 %v2637, 1
    %v2642 = vsel %vm2640, %v2641, %v2637
    %v2643 = vadd.s32 %v2638, %v2642
    %v2644 = vadd.s32 %v2643, 536870912
    %v2645 = vshrl.u32 %v2644, 30
    %v2646 = vshll.u32 %v2645, 30
    %v2647 = vsub.s32 %v2643, %v2646
    %vm2648 = vcmp.lt.s32.totalorder %v2647, 0
    %v2649 = vsub.s32 0, %v2647
    %v2650 = vsel %vm2648, %v2649, %v2647
    %v2651 = vclz %v2650
    %v2652 = vsub.s32 %v2651, 2
    %vm2653 = vcmp.gt.s32.totalorder 0, %v2652
    %v2654 = vsel %vm2653, 0, %v2652
    %v2655 = vsub.s32 32, %v2654
    %v2656 = vshll.u32 %v2647, %v2654
    %v2657 = vshrl.u32 %v2639, %v2655
    %v2658 = vor.u32 %v2656, %v2657
    %v2659 = vsub.s32 4294967266, %v2654
    %v2660 = vadd.s32 %v2659, 127
    %v2661 = vshll.u32 %v2660, 23
    %v2662 = vor.u32 4788187, %v2661
    %v2663 = vand.u32 2147483647, %v2662
    %v2665 = vcvt.s32.f32 %v2658
    %v2666 = vmul.f32 %v2665, %v2663
    %v2667 = vxor.u32 %v2666, 2147483648
    %v2668 = vsel %vm2585, %v2667, %v2666
    %v2669 = vsub.s32 4, %v2645
    %v2670 = vsel %vm2585, %v2669, %v2645
    %v2671 = vsel %vm2584, %v2271, %v2668
    %v2672 = vsel %vm2584, 0, %v2670
    %v2673 = vcosq.f32.pop %v2671
    %v2674 = vsinq.f32.pop %v2671
    %vm2675 = vweird.f32 %v2271
    %v2676 = vadd.s32 %v2672, 3
    %v2677 = vand.u32 %v2676, 3
    %vm2678 = vcmp.lt.s32.totalorder %v2677, 2
    %vm2679 = vcmp.eq.s32.totalorder %v2677, 0
    %v2680 = vxor.u32 %v2674, 2147483648
    %v2681 = vsel %vm2679, %v2673, %v2680
    %vm2682 = vcmp.eq.s32.totalorder %v2677, 2
    %v2683 = vxor.u32 %v2673, 2147483648
    %v2684 = vsel %vm2682, %v2683, %v2674
    %v2685 = vsel %vm2678, %v2681, %v2684
    %v2686 = vsel %vm2675, nan, %v2685
    %v2687 = vand.u32 2147483647, %v2272
    %vm2688 = vcmp.le.f32.partialorder %v2687, 0.7853982
    %vm2689 = vcmp.lt.s32.totalorder %v2272, 0
    %v2690 = vand.u32 %v2272, 2139095040
    %v2691 = vshrl.u32 %v2690, 23
    %v2692 = vsub.s32 %v2691, 127
    %v2693 = vand.u32 2147483647, %v2272
    %v2694 = vand.u32 %v2693, 8388607
    %v2695 = vor.u32 %v2694, 8388608
    %v2696 = vsub.s32 0, %v2695
    %v2697 = vadd.s32 %v2692, 1
    %vm2698 = vcmp.gt.s32.totalorder %v2697, 0
    %v2699 = vsel %vm2698, %v2697, 0
    %v2700 = vshrl.u32 %v2699, 5
    %v2701 = vand.u32 %v2699, 31
    %v2702 = vsub.s32 32, %v2701
    %v2703 = vshrl.u32 683565275, %v2702
    %v2704 = vshll.u32 683565275, %v2701
    %v2705 = vshrl.u32 2475754826, %v2702
    %v2706 = vor.u32 %v2704, %v2705
    %v2707 = vshll.u32 2475754826, %v2701
    %v2708 = vshrl.u32 2131351028, %v2702
    %v2709 = vor.u32 %v2707, %v2708
    %v2710 = vshll.u32 2131351028, %v2701
    %v2711 = vshrl.u32 2102212464, %v2702
    %v2712 = vor.u32 %v2710, %v2711
    %v2713 = vshll.u32 2102212464, %v2701
    %v2714 = vshrl.u32 920167782, %v2702
    %v2715 = vor.u32 %v2713, %v2714
    %v2716 = vshll.u32 920167782, %v2701
    %v2717 = vshrl.u32 1326507024, %v2702
    %v2718 = vor.u32 %v2716, %v2717
    %vm2719 = vcmp.lt.s32.totalorder %v2700, 1
    %vm2720 = vcmp.lt.s32.totalorder %v2700, 2
    %vm2721 = vcmp.lt.s32.totalorder %v2700, 3
    %vm2722 = vcmp.lt.s32.totalorder %v2700, 4
    %v2723 = vsel %vm2719, %v2703, %v2706
    %v2724 = vsel %vm2722, %v2712, 2102212464
    %v2725 = vsel %vm2721, %v2709, %v2724
    %v2726 = vsel %vm2720, %v2723, %v2725
    %v2727 = vsel %vm2719, %v2706, %v2709
    %v2728 = vsel %vm2722, %v2715, 920167782
    %v2729 = vsel %vm2721, %v2712, %v2728
    %v2730 = vsel %vm2720, %v2727, %v2729
    %v2731 = vsel %vm2719, %v2709, %v2712
    %v2732 = vsel %vm2722, %v2718, 1326507024
    %v2733 = vsel %vm2721, %v2715, %v2732
    %v2734 = vsel %vm2720, %v2731, %v2733
    %v2735 = vshll.u32 %v2695, 8
    %v2736 = vmul.u32.u64.compose %v2735, %v2734
    %v2737 = vextract.low.u32 %v2736
    %v2738 = vextract.high.u32 %v2736
    %v2739 = vmul.u32.u64.compose %v2735, %v2730
    %v2740 = vextract.low.u32 %v2739
    %v2741 = vextract.high.u32 %v2739
    %v2742 = vmul.u32 %v2735, %v2726
    %v2743 = vadd.s32 %v2738, %v2740
    %vm2744 = vc.u32 %v2738, %v2740
    %v2745 = vadd.s32 %v2741, 1
    %v2746 = vsel %vm2744, %v2745, %v2741
    %v2747 = vadd.s32 %v2742, %v2746
    %v2748 = vadd.s32 %v2747, 536870912
    %v2749 = vshrl.u32 %v2748, 30
    %v2750 = vshll.u32 %v2749, 30
    %v2751 = vsub.s32 %v2747, %v2750
    %vm2752 = vcmp.lt.s32.totalorder %v2751, 0
    %v2753 = vsub.s32 0, %v2751
    %v2754 = vsel %vm2752, %v2753, %v2751
    %v2755 = vclz %v2754
    %v2756 = vsub.s32 %v2755, 2
    %vm2757 = vcmp.gt.s32.totalorder 0, %v2756
    %v2758 = vsel %vm2757, 0, %v2756
    %v2759 = vsub.s32 32, %v2758
    %v2760 = vshll.u32 %v2751, %v2758
    %v2761 = vshrl.u32 %v2743, %v2759
    %v2762 = vor.u32 %v2760, %v2761
    %v2763 = vsub.s32 4294967266, %v2758
    %v2764 = vadd.s32 %v2763, 127
    %v2765 = vshll.u32 %v2764, 23
    %v2766 = vor.u32 4788187, %v2765
    %v2767 = vand.u32 2147483647, %v2766
    %v2769 = vcvt.s32.f32 %v2762
    %v2770 = vmul.f32 %v2769, %v2767
    %v2771 = vxor.u32 %v2770, 2147483648
    %v2772 = vsel %vm2689, %v2771, %v2770
    %v2773 = vsub.s32 4, %v2749
    %v2774 = vsel %vm2689, %v2773, %v2749
    %v2775 = vsel %vm2688, %v2272, %v2772
    %v2776 = vsel %vm2688, 0, %v2774
    %v2777 = vcosq.f32.pop %v2775
    %v2778 = vsinq.f32.pop %v2775
    %vm2779 = vweird.f32 %v2272
    %v2780 = vadd.s32 %v2776, 3
    %v2781 = vand.u32 %v2780, 3
    %vm2782 = vcmp.lt.s32.totalorder %v2781, 2
    %vm2783 = vcmp.eq.s32.totalorder %v2781, 0
    %v2784 = vxor.u32 %v2778, 2147483648
    %v2785 = vsel %vm2783, %v2777, %v2784
    %vm2786 = vcmp.eq.s32.totalorder %v2781, 2
    %v2787 = vxor.u32 %v2777, 2147483648
    %v2788 = vsel %vm2786, %v2787, %v2778
    %v2789 = vsel %vm2782, %v2785, %v2788
    %v2790 = vsel %vm2779, nan, %v2789
    %v2791 = vand.u32 2147483647, %v2273
    %vm2792 = vcmp.le.f32.partialorder %v2791, 0.7853982
    %vm2793 = vcmp.lt.s32.totalorder %v2273, 0
    %v2794 = vand.u32 %v2273, 2139095040
    %v2795 = vshrl.u32 %v2794, 23
    %v2796 = vsub.s32 %v2795, 127
    %v2797 = vand.u32 2147483647, %v2273
    %v2798 = vand.u32 %v2797, 8388607
    %v2799 = vor.u32 %v2798, 8388608
    %v2800 = vsub.s32 0, %v2799
    %v2801 = vadd.s32 %v2796, 1
    %vm2802 = vcmp.gt.s32.totalorder %v2801, 0
    %v2803 = vsel %vm2802, %v2801, 0
    %v2804 = vshrl.u32 %v2803, 5
    %v2805 = vand.u32 %v2803, 31
    %v2806 = vsub.s32 32, %v2805
    %v2807 = vshrl.u32 683565275, %v2806
    %v2808 = vshll.u32 683565275, %v2805
    %v2809 = vshrl.u32 2475754826, %v2806
    %v2810 = vor.u32 %v2808, %v2809
    %v2811 = vshll.u32 2475754826, %v2805
    %v2812 = vshrl.u32 2131351028, %v2806
    %v2813 = vor.u32 %v2811, %v2812
    %v2814 = vshll.u32 2131351028, %v2805
    %v2815 = vshrl.u32 2102212464, %v2806
    %v2816 = vor.u32 %v2814, %v2815
    %v2817 = vshll.u32 2102212464, %v2805
    %v2818 = vshrl.u32 920167782, %v2806
    %v2819 = vor.u32 %v2817, %v2818
    %v2820 = vshll.u32 920167782, %v2805
    %v2821 = vshrl.u32 1326507024, %v2806
    %v2822 = vor.u32 %v2820, %v2821
    %vm2823 = vcmp.lt.s32.totalorder %v2804, 1
    %vm2824 = vcmp.lt.s32.totalorder %v2804, 2
    %vm2825 = vcmp.lt.s32.totalorder %v2804, 3
    %vm2826 = vcmp.lt.s32.totalorder %v2804, 4
    %v2827 = vsel %vm2823, %v2807, %v2810
    %v2828 = vsel %vm2826, %v2816, 2102212464
    %v2829 = vsel %vm2825, %v2813, %v2828
    %v2830 = vsel %vm2824, %v2827, %v2829
    %v2831 = vsel %vm2823, %v2810, %v2813
    %v2832 = vsel %vm2826, %v2819, 920167782
    %v2833 = vsel %vm2825, %v2816, %v2832
    %v2834 = vsel %vm2824, %v2831, %v2833
    %v2835 = vsel %vm2823, %v2813, %v2816
    %v2836 = vsel %vm2826, %v2822, 1326507024
    %v2837 = vsel %vm2825, %v2819, %v2836
    %v2838 = vsel %vm2824, %v2835, %v2837
    %v2839 = vshll.u32 %v2799, 8
    %v2840 = vmul.u32.u64.compose %v2839, %v2838
    %v2841 = vextract.low.u32 %v2840
    %v2842 = vextract.high.u32 %v2840
    %v2843 = vmul.u32.u64.compose %v2839, %v2834
    %v2844 = vextract.low.u32 %v2843
    %v2845 = vextract.high.u32 %v2843
    %v2846 = vmul.u32 %v2839, %v2830
    %v2847 = vadd.s32 %v2842, %v2844
    %vm2848 = vc.u32 %v2842, %v2844
    %v2849 = vadd.s32 %v2845, 1
    %v2850 = vsel %vm2848, %v2849, %v2845
    %v2851 = vadd.s32 %v2846, %v2850
    %v2852 = vadd.s32 %v2851, 536870912
    %v2853 = vshrl.u32 %v2852, 30
    %v2854 = vshll.u32 %v2853, 30
    %v2855 = vsub.s32 %v2851, %v2854
    %vm2856 = vcmp.lt.s32.totalorder %v2855, 0
    %v2857 = vsub.s32 0, %v2855
    %v2858 = vsel %vm2856, %v2857, %v2855
    %v2859 = vclz %v2858
    %v2860 = vsub.s32 %v2859, 2
    %vm2861 = vcmp.gt.s32.totalorder 0, %v2860
    %v2862 = vsel %vm2861, 0, %v2860
    %v2863 = vsub.s32 32, %v2862
    %v2864 = vshll.u32 %v2855, %v2862
    %v2865 = vshrl.u32 %v2847, %v2863
    %v2866 = vor.u32 %v2864, %v2865
    %v2867 = vsub.s32 4294967266, %v2862
    %v2868 = vadd.s32 %v2867, 127
    %v2869 = vshll.u32 %v2868, 23
    %v2870 = vor.u32 4788187, %v2869
    %v2871 = vand.u32 2147483647, %v2870
    %v2873 = vcvt.s32.f32 %v2866
    %v2874 = vmul.f32 %v2873, %v2871
    %v2875 = vxor.u32 %v2874, 2147483648
    %v2876 = vsel %vm2793, %v2875, %v2874
    %v2877 = vsub.s32 4, %v2853
    %v2878 = vsel %vm2793, %v2877, %v2853
    %v2879 = vsel %vm2792, %v2273, %v2876
    %v2880 = vsel %vm2792, 0, %v2878
    %v2881 = vcosq.f32.pop %v2879
    %v2882 = vsinq.f32.pop %v2879
    %vm2883 = vweird.f32 %v2273
    %v2884 = vadd.s32 %v2880, 3
    %v2885 = vand.u32 %v2884, 3
    %vm2886 = vcmp.lt.s32.totalorder %v2885, 2
    %vm2887 = vcmp.eq.s32.totalorder %v2885, 0
    %v2888 = vxor.u32 %v2882, 2147483648
    %v2889 = vsel %vm2887, %v2881, %v2888
    %vm2890 = vcmp.eq.s32.totalorder %v2885, 2
    %v2891 = vxor.u32 %v2881, 2147483648
    %v2892 = vsel %vm2890, %v2891, %v2882
    %v2893 = vsel %vm2886, %v2889, %v2892
    %v2894 = vsel %vm2883, nan, %v2893
    %2895 = vrot.lane.b32.xlu0 %v2160, 126
    %v2896 = vpop.permute.xlu0 %2895
    %2897 = vrot.lane.b32.xlu0 %v2161, 126
    %v2898 = vpop.permute.xlu0 %2897
    %2899 = vrot.lane.b32.xlu0 %v2162, 126
    %v2900 = vpop.permute.xlu0 %2899
    %2901 = vrot.lane.b32.xlu0 %v2163, 126
    %v2902 = vpop.permute.xlu0 %2901
    %v2903 = vsel %vm268, %v2900, %v2902
    %v2904 = vsel %vm268, %v2898, %v2900
    %v2905 = vsel %vm268, %v2896, %v2898
    %2906 = vrot.lane.b32.xlu0 %v2176, 126
    %v2907 = vpop.permute.xlu0 %2906
    %2908 = vrot.lane.b32.xlu0 %v2177, 126
    %v2909 = vpop.permute.xlu0 %2908
    %2910 = vrot.lane.b32.xlu0 %v2178, 126
    %v2911 = vpop.permute.xlu0 %2910
    %2912 = vrot.lane.b32.xlu0 %v2179, 126
    %v2913 = vpop.permute.xlu0 %2912
    %v2914 = vsel %vm268, %v2911, %v2913
    %v2915 = vsel %vm268, %v2909, %v2911
    %v2916 = vsel %vm268, %v2907, %v2909
    %v2917 = vmul.f32 %v2905, %v2376
    %v2918 = vmul.f32 %v2904, %v2479
    %v2919 = vmul.f32 %v2903, %v2582
    %v2920 = vmul.f32 %v2916, %v2686
    %v2921 = vmul.f32 %v2915, %v2790
    %v2922 = vmul.f32 %v2914, %v2894
    %v2923 = vsub.f32 %v2917, %v2920
    %v2924 = vsub.f32 %v2918, %v2921
    %v2925 = vsub.f32 %v2919, %v2922
    %v2926 = vmul.f32 %v2905, %v2686
    %v2927 = vmul.f32 %v2904, %v2790
    %v2928 = vmul.f32 %v2903, %v2894
    %v2929 = vmul.f32 %v2916, %v2376
    %v2930 = vmul.f32 %v2915, %v2479
    %v2931 = vmul.f32 %v2914, %v2582
    %v2932 = vadd.f32 %v2926, %v2929
    %v2933 = vadd.f32 %v2927, %v2930
    %v2934 = vadd.f32 %v2928, %v2931
    %2935 = vst [vmem:[#allocation10] sm:$0xff] %v2923
    %2936 = vst [vmem:[#allocation10 + $0x8] sm:$0xff] %v2924
    %2937 = vst [vmem:[#allocation10 + $0x10] sm:$0xff] %v2925
    %2938 = vst [vmem:[#allocation11] sm:$0xff] %v2932
    %2939 = vst [vmem:[#allocation11 + $0x8] sm:$0xff] %v2933
    %2940 = vst [vmem:[#allocation11 + $0x10] sm:$0xff] %v2934
    // Predicated region
    $region94: #{tpu_custom_call.1} parent=1 // pred_check
      _
    $region95: #{tpu_custom_call.1} parent=1 // pred_check_branch
      %2942 = sbr.rel (0) target = $region97
    $region96: #{tpu_custom_call.1} parent=1 // pred_region
      %s2944 = ssub.s32 384, 384
      %2945 = vsyncadd [#allocation6], %s2944
      %s2947 = sshll.u32 [#allocation10], 4
      %s2948 = int_to_ptr.vmem [resolvable:$true] %s2947
      %2950 = dma.vmem_to_hbm [thread:$0]  %s2948, 384, %s6, [#allocation6]
    $region97: #{tpu_custom_call.1} parent=1 // pred_fallthru
      _
    // Predicated region
    $region98: #{tpu_custom_call.1} parent=1 // pred_check
      _
    $region99: #{tpu_custom_call.1} parent=1 // pred_check_branch
      %2952 = sbr.rel (0) target = $region101
    $region100: #{tpu_custom_call.1} parent=1 // pred_region
      %s2954 = ssub.s32 384, 384
      %2955 = vsyncadd [#allocation12], %s2954
      %s2957 = sshll.u32 [#allocation11], 4
      %s2958 = int_to_ptr.vmem [resolvable:$true] %s2957
      %2960 = dma.vmem_to_hbm [thread:$0]  %s2958, 384, %s7, [#allocation12]
    $region101: #{tpu_custom_call.1} parent=1 // pred_fallthru
      _
    // Predicated region
    $region102: #{tpu_custom_call.1} parent=1 // pred_check
      _
    $region103: #{tpu_custom_call.1} parent=1 // pred_check_branch
      %2962 = sbr.rel (0) target = $region105
    $region104: #{tpu_custom_call.1} parent=1 // pred_region
      %2963 = dma.done [#allocation6], 384
    $region105: #{tpu_custom_call.1} parent=1 // pred_fallthru
      _
    // Predicated region
    $region106: #{tpu_custom_call.1} parent=1 // pred_check
      _
    $region107: #{tpu_custom_call.1} parent=1 // pred_check_branch
      %2965 = sbr.rel (0) target = $region109
    $region108: #{tpu_custom_call.1} parent=1 // pred_region
      %2966 = dma.done [#allocation12], 384
    $region109: #{tpu_custom_call.1} parent=1 // pred_fallthru
      _
    %2967 = vsyncpa [#allocation6], 1
    %2968 = vsyncpa [#allocation12], 1
    %2969 = vsyncpa [#allocation7], 1
    %2970 = vsyncpa [#allocation8], 1
  %2971 = vsyncmov [#allocation4]
  %s2972 = vpop.sfrf %2971
  %p2973 = scmp.eq.s32.totalorder %s2972, 0
  %p2974 = pneg %p2973
  %2976 = shalt.err (%p2974)
  %s2977 = scalar_lea.sflag [#allocation4], 1
  %2978 = vsyncmov %s2977
  %s2979 = vpop.sfrf %2978
  %p2980 = scmp.eq.s32.totalorder %s2979, 0
  %p2981 = pneg %p2980
  %2983 = shalt.err (%p2981)

</llo_original>
